<compile_context>
chip_gen: v6e
topology: v6e:2x2x1
jax: 0.10.0
libtpu: 0.0.40
codegen_flags: <defaults>
</compile_context>

<pallas_src>
import functools
import math

import jax
import jax.numpy as jnp
from jax.experimental import pallas as pl
from jax.experimental.pallas import tpu as pltpu


# ------------------------------ shared helpers ------------------------------

def _layernorm_f32(x, gamma, beta, eps):
    """LayerNorm over the last dim; x is f32 (rows, D), gamma/beta (1, D)."""
    mean = jnp.mean(x, axis=-1, keepdims=True)
    var = jnp.mean((x - mean) ** 2, axis=-1, keepdims=True)
    return (x - mean) * jax.lax.rsqrt(var + eps) * gamma + beta


def _matmul_bf16(a, b):
    """MXU matmul with bf16 operands and f32 accumulation."""
    return jnp.dot(a.astype(jnp.bfloat16), b.astype(jnp.bfloat16),
                   preferred_element_type=jnp.float32)


def _softmax_rows(s):
    s = s - jnp.max(s, axis=-1, keepdims=True)
    p = jnp.exp(s)
    return p * pl.reciprocal(jnp.sum(p, axis=-1, keepdims=True), approx=True)


# ------------------- fused multi-head-attention sub-block -------------------

def _mha_block_kernel(*refs, nhead, scale, eps, has_mask, is_self):
    """LayerNorm(x_q + W_o @ MHA(x_q, x_kv)) for one batch element."""
    idx = 0
    xq_ref = refs[idx]; idx += 1                      # (1, Sq, D)
    xq = xq_ref[0].astype(jnp.float32)                # (Sq, D)
    d_model = xq.shape[-1]
    dh = d_model // nhead

    if is_self:
        wqkv_ref = refs[idx]; idx += 1                # (D, 3D)  [wq | wk | wv]
        bqkv_ref = refs[idx]; idx += 1                # (1, 3D)
        qkv = _matmul_bf16(xq, wqkv_ref[...]) + bqkv_ref[...]
        q = qkv[:, :d_model]
        k = qkv[:, d_model:2 * d_model]
        v = qkv[:, 2 * d_model:]
    else:
        xkv_ref = refs[idx]; idx += 1                 # (1, Sk, D)
        wq_ref = refs[idx]; idx += 1                  # (D, D)
        bq_ref = refs[idx]; idx += 1                  # (1, D)
        wkv_ref = refs[idx]; idx += 1                 # (D, 2D)  [wk | wv]
        bkv_ref = refs[idx]; idx += 1                 # (1, 2D)
        xkv = xkv_ref[0].astype(jnp.float32)          # (Sk, D)
        q = _matmul_bf16(xq, wq_ref[...]) + bq_ref[...]
        kv = _matmul_bf16(xkv, wkv_ref[...]) + bkv_ref[...]
        k = kv[:, :d_model]
        v = kv[:, d_model:]

    wo_ref = refs[idx]; idx += 1                      # (D, D)
    bo_ref = refs[idx]; idx += 1                      # (1, D)
    g_ref = refs[idx]; idx += 1                       # (1, D)
    b_ref = refs[idx]; idx += 1                       # (1, D)
    mask_ref = None
    if has_mask:
        mask_ref = refs[idx]; idx += 1                # (Sq, Sk)
    o_ref = refs[idx]                                 # (1, Sq, D)

    # All heads handled inside this kernel (statically unrolled).
    head_outs = []
    for h in range(nhead):
        qh = q[:, h * dh:(h + 1) * dh]                # (Sq, dh)
        kh = k[:, h * dh:(h + 1) * dh]                # (Sk, dh)
        vh = v[:, h * dh:(h + 1) * dh]                # (Sk, dh)
        # q . k^T via dot_general contraction (no explicit transpose of K).
        s = jax.lax.dot_general(
            qh.astype(jnp.bfloat16), kh.astype(jnp.bfloat16),
            dimension_numbers=(((1,), (1,)), ((), ())),
            preferred_element_type=jnp.float32) * scale
        if has_mask:
            s = s + mask_ref[...]
        p = _softmax_rows(s)
        head_outs.append(_matmul_bf16(p, vh))         # (Sq, dh)
    attn = jnp.concatenate(head_outs, axis=-1)        # (Sq, D)

    proj = _matmul_bf16(attn, wo_ref[...]) + bo_ref[...]
    y = _layernorm_f32(xq + proj, g_ref[...], b_ref[...], eps)
    o_ref[0] = y.astype(o_ref.dtype)


@functools.lru_cache(maxsize=None)
def _build_mha_call(b, sq, sk, d, nhead, eps, has_mask, is_self):
    in_specs = [pl.BlockSpec((1, sq, d), lambda i: (i, 0, 0))]
    if is_self:
        in_specs += [
            pl.BlockSpec((d, 3 * d), lambda i: (0, 0)),
            pl.BlockSpec((1, 3 * d), lambda i: (0, 0)),
        ]
    else:
        in_specs += [
            pl.BlockSpec((1, sk, d), lambda i: (i, 0, 0)),
            pl.BlockSpec((d, d), lambda i: (0, 0)),
            pl.BlockSpec((1, d), lambda i: (0, 0)),
            pl.BlockSpec((d, 2 * d), lambda i: (0, 0)),
            pl.BlockSpec((1, 2 * d), lambda i: (0, 0)),
        ]
    in_specs += [
        pl.BlockSpec((d, d), lambda i: (0, 0)),
        pl.BlockSpec((1, d), lambda i: (0, 0)),
        pl.BlockSpec((1, d), lambda i: (0, 0)),
        pl.BlockSpec((1, d), lambda i: (0, 0)),
    ]
    if has_mask:
        in_specs.append(pl.BlockSpec((sq, sk), lambda i: (0, 0)))

    kernel = functools.partial(
        _mha_block_kernel, nhead=nhead, scale=1.0 / math.sqrt(d // nhead),
        eps=eps, has_mask=has_mask, is_self=is_self)
    return pl.pallas_call(
        kernel,
        out_shape=jax.ShapeDtypeStruct((b, sq, d), jnp.float32),
        grid=(b,),
        in_specs=in_specs,
        out_specs=pl.BlockSpec((1, sq, d), lambda i: (i, 0, 0)),
        compiler_params=pltpu.CompilerParams(
            dimension_semantics=("parallel",)),
    )


def mha_block(x_q, x_kv, p, nhead, mask, eps, is_self):
    """Fused post-norm attention sub-block; activations are (B, S, D)."""
    b, sq, d = x_q.shape
    sk = x_kv.shape[1]
    has_mask = mask is not None
    call = _build_mha_call(b, sq, sk, d, nhead, eps, has_mask, is_self)

    inputs = [x_q]
    if is_self:
        inputs += [p["wqkv"], p["bqkv"].reshape(1, 3 * d)]
    else:
        # Split [wq | wkv] outside the kernel: no in-kernel weight lane-slicing.
        inputs += [x_kv,
                   p["wqkv"][:, :d], p["bqkv"][:d].reshape(1, d),
                   p["wqkv"][:, d:], p["bqkv"][d:].reshape(1, 2 * d)]
    inputs += [p["wo"], p["bo"].reshape(1, d),
               p["ln_g"].reshape(1, d), p["ln_b"].reshape(1, d)]
    if has_mask:
        inputs.append(mask)
    return call(*inputs)


# --------------------------- fused FFN sub-block ----------------------------

def _ffn_block_kernel(x_ref, w1_ref, b1_ref, w2_ref, b2_ref, g_ref, b_ref,
                      o_ref, *, eps):
    x = x_ref[0].astype(jnp.float32)                  # (S, D)
    h = jnp.maximum(_matmul_bf16(x, w1_ref[...]) + b1_ref[...], 0.0)
    y = _matmul_bf16(h, w2_ref[...]) + b2_ref[...]
    o_ref[0] = _layernorm_f32(x + y, g_ref[...], b_ref[...], eps).astype(o_ref.dtype)


@functools.lru_cache(maxsize=None)
def _build_ffn_call(b, s, d, f, eps):
    return pl.pallas_call(
        functools.partial(_ffn_block_kernel, eps=eps),
        out_shape=jax.ShapeDtypeStruct((b, s, d), jnp.float32),
        grid=(b,),
        in_specs=[
            pl.BlockSpec((1, s, d), lambda i: (i, 0, 0)),
            pl.BlockSpec((d, f), lambda i: (0, 0)),
            pl.BlockSpec((1, f), lambda i: (0, 0)),
            pl.BlockSpec((f, d), lambda i: (0, 0)),
            pl.BlockSpec((1, d), lambda i: (0, 0)),
            pl.BlockSpec((1, d), lambda i: (0, 0)),
            pl.BlockSpec((1, d), lambda i: (0, 0)),
        ],
        out_specs=pl.BlockSpec((1, s, d), lambda i: (i, 0, 0)),
        compiler_params=pltpu.CompilerParams(
            dimension_semantics=("parallel",)),
    )


def ffn_block(x, p, eps):
    b, s, d = x.shape
    f = p["w1"].shape[1]
    call = _build_ffn_call(b, s, d, f, eps)
    return call(x, p["w1"], p["b1"].reshape(1, f), p["w2"],
                p["b2"].reshape(1, d),
                p["ln_g"].reshape(1, d), p["ln_b"].reshape(1, d))


# ------------------------------ plain layernorm ------------------------------

def _ln_kernel(x_ref, g_ref, b_ref, o_ref, *, eps):
    x = x_ref[0].astype(jnp.float32)
    o_ref[0] = _layernorm_f32(x, g_ref[...], b_ref[...], eps).astype(o_ref.dtype)


@functools.lru_cache(maxsize=None)
def _build_ln_call(b, s, d, eps):
    return pl.pallas_call(
        functools.partial(_ln_kernel, eps=eps),
        out_shape=jax.ShapeDtypeStruct((b, s, d), jnp.float32),
        grid=(b,),
        in_specs=[
            pl.BlockSpec((1, s, d), lambda i: (i, 0, 0)),
            pl.BlockSpec((1, d), lambda i: (0, 0)),
            pl.BlockSpec((1, d), lambda i: (0, 0)),
        ],
        out_specs=pl.BlockSpec((1, s, d), lambda i: (i, 0, 0)),
        compiler_params=pltpu.CompilerParams(
            dimension_semantics=("parallel",)),
    )


def layernorm(x, gamma, beta, eps=1e-5):
    b, s, d = x.shape
    return _build_ln_call(b, s, d, eps)(x, gamma.reshape(1, d),
                                        beta.reshape(1, d))


# -------------------- fused final LayerNorm + generator ---------------------

def _norm_generator_kernel(x_ref, g_ref, b_ref, w_ref, bw_ref, o_ref, *, eps):
    x = _layernorm_f32(x_ref[0].astype(jnp.float32), g_ref[...], b_ref[...], eps)
    y = _matmul_bf16(x, w_ref[...]) + bw_ref[...]
    o_ref[0] = y.astype(o_ref.dtype)


@functools.lru_cache(maxsize=None)
def _build_norm_generator_call(b, s, d, vp, eps):
    return pl.pallas_call(
        functools.partial(_norm_generator_kernel, eps=eps),
        out_shape=jax.ShapeDtypeStruct((b, s, vp), jnp.float32),
        grid=(b,),
        in_specs=[
            pl.BlockSpec((1, s, d), lambda i: (i, 0, 0)),
            pl.BlockSpec((1, d), lambda i: (0, 0)),
            pl.BlockSpec((1, d), lambda i: (0, 0)),
            pl.BlockSpec((d, vp), lambda i: (0, 0)),
            pl.BlockSpec((1, vp), lambda i: (0, 0)),
        ],
        out_specs=pl.BlockSpec((1, s, vp), lambda i: (i, 0, 0)),
        compiler_params=pltpu.CompilerParams(
            dimension_semantics=("parallel",)),
    )


def norm_generator(x, gamma, beta, w_pad, b_pad, eps=1e-5):
    b, s, d = x.shape
    vp = w_pad.shape[1]                               # multiple of 128 (lane-dense)
    call = _build_norm_generator_call(b, s, d, vp, eps)
    return call(x, gamma.reshape(1, d), beta.reshape(1, d),
                w_pad, b_pad.reshape(1, vp))


# --------------------------- model building blocks ---------------------------

def encoder_layer(x, p, nhead, src_mask=None, eps=1e-5):
    x = mha_block(x, x, p["self_attn"], nhead, src_mask, eps, is_self=True)
    return ffn_block(x, p["ffn"], eps)


def decoder_layer(x, memory, p, nhead, tgt_mask=None, memory_mask=None, eps=1e-5):
    x = mha_block(x, x, p["self_attn"], nhead, tgt_mask, eps, is_self=True)
    x = mha_block(x, memory, p["cross_attn"], nhead, memory_mask, eps, is_self=False)
    return ffn_block(x, p["ffn"], eps)


def make_pos_embedding(d_model, max_len):
    den = jnp.exp(-jnp.arange(0, d_model, 2, dtype=jnp.float32)
                  * math.log(10000.0) / d_model)
    pos = jnp.arange(0, max_len, dtype=jnp.float32).reshape(max_len, 1)
    pe = jnp.zeros((max_len, d_model), jnp.float32)
    pe = pe.at[:, 0::2].set(jnp.sin(pos * den))
    pe = pe.at[:, 1::2].set(jnp.cos(pos * den))
    return pe[:, None, :]                             # (max_len, 1, d_model)


def embed(tokens_sb, emb_table, pos_emb, d_model):
    # TokenEmbedding (gather * sqrt(d)) + PositionalEncoding, then move to the
    # (B, S, D) layout the kernels consume.  Gather is plain-JAX glue.
    # TODO(synk): dropout layers run as identity (eval/inference semantics).
    e = jnp.take(emb_table, tokens_sb, axis=0) * math.sqrt(d_model)   # (S,B,D)
    e = e + pos_emb[: tokens_sb.shape[0]]
    return jnp.transpose(e, (1, 0, 2))                                # (B,S,D)


def generate_square_subsequent_mask(sz):
    return jnp.triu(jnp.full((sz, sz), float("-inf"), jnp.float32), k=1)


def transformer_forward(params, src, tgt, tgt_mask=None, src_mask=None,
                        memory_mask=None, *, d_model, nhead, out_vocab,
                        eps=1e-5):
    # --- encoder stack ---
    x = embed(src, params["src_emb"], params["pos_emb"], d_model)
    for lp in params["enc_layers"]:
        x = encoder_layer(x, lp, nhead, src_mask, eps)
    memory = layernorm(x, params["enc_norm_g"], params["enc_norm_b"], eps)

    # --- decoder stack ---
    y = embed(tgt, params["tgt_emb"], params["pos_emb"], d_model)
    for lp in params["dec_layers"]:
        y = decoder_layer(y, memory, lp, nhead, tgt_mask, memory_mask, eps)

    # --- fused final norm + generator linear (lane-padded, sliced back) ---
    logits = norm_generator(y, params["dec_norm_g"], params["dec_norm_b"],
                            params["out_w_pad"], params["out_b_pad"], eps)
    logits = logits[:, :, :out_vocab]
    return jnp.transpose(logits, (1, 0, 2))           # (S_tgt, B, V)


# --------------------------- parameter initialization ---------------------------

def xavier_uniform(key, shape):
    fan_in, fan_out = shape
    limit = math.sqrt(6.0 / (fan_in + fan_out))
    return jax.random.uniform(key, shape, jnp.float32, -limit, limit)


def init_mha(key, d_model):
    ks = jax.random.split(key, 4)
    wq = xavier_uniform(ks[0], (d_model, d_model))
    wk = xavier_uniform(ks[1], (d_model, d_model))
    wv = xavier_uniform(ks[2], (d_model, d_model))
    return {"wqkv": jnp.concatenate([wq, wk, wv], axis=1),    # (D, 3D)
            "bqkv": jnp.zeros((3 * d_model,), jnp.float32),
            "wo": xavier_uniform(ks[3], (d_model, d_model)),
            "bo": jnp.zeros((d_model,), jnp.float32),
            "ln_g": jnp.ones((d_model,), jnp.float32),
            "ln_b": jnp.zeros((d_model,), jnp.float32)}


def init_ffn(key, d_model, dim_ff):
    k1, k2 = jax.random.split(key)
    return {"w1": xavier_uniform(k1, (d_model, dim_ff)),
            "b1": jnp.zeros((dim_ff,), jnp.float32),
            "w2": xavier_uniform(k2, (dim_ff, d_model)),
            "b2": jnp.zeros((d_model,), jnp.float32),
            "ln_g": jnp.ones((d_model,), jnp.float32),
            "ln_b": jnp.zeros((d_model,), jnp.float32)}


def init_enc_layer(key, d_model, dim_ff):
    k1, k2 = jax.random.split(key)
    return {"self_attn": init_mha(k1, d_model),
            "ffn": init_ffn(k2, d_model, dim_ff)}


def init_dec_layer(key, d_model, dim_ff):
    k1, k2, k3 = jax.random.split(key, 3)
    return {"self_attn": init_mha(k1, d_model),
            "cross_attn": init_mha(k2, d_model),
            "ffn": init_ffn(k3, d_model, dim_ff)}


def init_params(key, src_vocab, tgt_vocab, d_model, dim_ff, n_enc, n_dec,
                max_seq_len=64):
    keys = jax.random.split(key, 3 + n_enc + n_dec)
    vpad = ((tgt_vocab + 127) // 128) * 128
    out_w = xavier_uniform(keys[2], (d_model, tgt_vocab))
    return {
        "src_emb": xavier_uniform(keys[0], (src_vocab, d_model)),
        "tgt_emb": xavier_uniform(keys[1], (tgt_vocab, d_model)),
        "pos_emb": make_pos_embedding(d_model, max_seq_len),
        "enc_layers": [init_enc_layer(keys[3 + i], d_model, dim_ff)
                       for i in range(n_enc)],
        "dec_layers": [init_dec_layer(keys[3 + n_enc + i], d_model, dim_ff)
                       for i in range(n_dec)],
        "enc_norm_g": jnp.ones((d_model,), jnp.float32),
        "enc_norm_b": jnp.zeros((d_model,), jnp.float32),
        "dec_norm_g": jnp.ones((d_model,), jnp.float32),
        "dec_norm_b": jnp.zeros((d_model,), jnp.float32),
        # Generator weights padded to a multiple of 128 output lanes; the
        # padded (zero) columns are sliced off after the kernel.
        "out_w_pad": jnp.pad(out_w, ((0, 0), (0, vpad - tgt_vocab))),
        "out_b_pad": jnp.zeros((vpad,), jnp.float32),
    }


# ------------------------------------ main ------------------------------------

if __name__ == "__main__":
    S_SRC, S_TGT, B = 8, 8, 2
    D_MODEL, NHEAD, DIM_FF = 32, 4, 64
    N_ENC, N_DEC = 2, 2
    SRC_VOCAB, TGT_VOCAB = 50, 60

    root = jax.random.PRNGKey(0)
    k_params, k_src, k_tgt = jax.random.split(root, 3)

    params = init_params(k_params, SRC_VOCAB, TGT_VOCAB, D_MODEL, DIM_FF,
                         N_ENC, N_DEC)

    src = jax.random.randint(k_src, (S_SRC, B), 0, SRC_VOCAB, dtype=jnp.int32)
    tgt = jax.random.randint(k_tgt, (S_TGT, B), 0, TGT_VOCAB, dtype=jnp.int32)
    tgt_mask = generate_square_subsequent_mask(S_TGT)

    fwd = jax.jit(functools.partial(transformer_forward,
                                    d_model=D_MODEL, nhead=NHEAD,
                                    out_vocab=TGT_VOCAB))
    out = fwd(params, src, tgt, tgt_mask)
    out = jax.block_until_ready(out)

    assert out.shape == (S_TGT, B, TGT_VOCAB), out.shape
    assert bool(jnp.all(jnp.isfinite(out)))
    print("KERNEL_OK")
</pallas_src>

<mosaic_0001>
module attributes {stable_mosaic.version = 11 : i64} {
  func.func @_ln_kernel(%arg0: i32, %arg1: memref<1x8x32xf32, #tpu.memory_space<vmem>>, %arg2: memref<1x32xf32, #tpu.memory_space<vmem>>, %arg3: memref<1x32xf32, #tpu.memory_space<vmem>>, %arg4: memref<1x8x32xf32, #tpu.memory_space<vmem>>) attributes {dimension_semantics = [#tpu.dimension_semantics<parallel>], iteration_bounds = array<i64: 2>, scalar_prefetch = 0 : i64, scratch_operands = 0 : i64, tpu.core_type = #tpu.core_type<tc>, window_params = [{transform_indices = @transform_0, window_bounds = array<i64: 1, 8, 32>}, {pipeline_mode = #tpu.pipeline_mode<synchronous>, transform_indices = @transform_1, window_bounds = array<i64: 1, 32>}, {pipeline_mode = #tpu.pipeline_mode<synchronous>, transform_indices = @transform_2, window_bounds = array<i64: 1, 32>}, {transform_indices = @transform_3, window_bounds = array<i64: 1, 8, 32>}]} {
    %c0 = arith.constant 0 : index
    %c0_0 = arith.constant 0 : index
    %c0_1 = arith.constant 0 : index
    %0 = vector.load %arg1[%c0, %c0_0, %c0_1] : memref<1x8x32xf32, #tpu.memory_space<vmem>>, vector<1x8x32xf32>
    %1 = vector.shape_cast %0 : vector<1x8x32xf32> to vector<8x32xf32>
    %c0_2 = arith.constant 0 : index
    %c0_3 = arith.constant 0 : index
    %2 = vector.load %arg2[%c0_2, %c0_3] : memref<1x32xf32, #tpu.memory_space<vmem>>, vector<1x32xf32>
    %c0_4 = arith.constant 0 : index
    %c0_5 = arith.constant 0 : index
    %3 = vector.load %arg3[%c0_4, %c0_5] : memref<1x32xf32, #tpu.memory_space<vmem>>, vector<1x32xf32>
    %cst = arith.constant dense<0.000000e+00> : vector<8xf32>
    %4 = vector.multi_reduction <add>, %1, %cst [1] : vector<8x32xf32> to vector<8xf32>
    %5 = vector.shape_cast %4 : vector<8xf32> to vector<8x1xf32>
    %cst_6 = arith.constant 3.200000e+01 : f32
    %6 = vector.broadcast %cst_6 : f32 to vector<8x1xf32>
    %7 = arith.divf %5, %6 : vector<8x1xf32>
    %8 = vector.broadcast %7 : vector<8x1xf32> to vector<8x32xf32>
    %9 = arith.subf %1, %8 : vector<8x32xf32>
    %10 = arith.mulf %9, %9 : vector<8x32xf32>
    %cst_7 = arith.constant dense<0.000000e+00> : vector<8xf32>
    %11 = vector.multi_reduction <add>, %10, %cst_7 [1] : vector<8x32xf32> to vector<8xf32>
    %12 = vector.shape_cast %11 : vector<8xf32> to vector<8x1xf32>
    %cst_8 = arith.constant 3.200000e+01 : f32
    %13 = vector.broadcast %cst_8 : f32 to vector<8x1xf32>
    %14 = arith.divf %12, %13 : vector<8x1xf32>
    %15 = vector.broadcast %7 : vector<8x1xf32> to vector<8x32xf32>
    %16 = arith.subf %1, %15 : vector<8x32xf32>
    %cst_9 = arith.constant 9.99999974E-6 : f32
    %17 = vector.broadcast %cst_9 : f32 to vector<8x1xf32>
    %18 = arith.addf %14, %17 : vector<8x1xf32>
    %19 = math.rsqrt %18 : vector<8x1xf32>
    %20 = vector.broadcast %19 : vector<8x1xf32> to vector<8x32xf32>
    %21 = arith.mulf %16, %20 : vector<8x32xf32>
    %22 = vector.broadcast %2 : vector<1x32xf32> to vector<8x32xf32>
    %23 = arith.mulf %21, %22 : vector<8x32xf32>
    %24 = vector.broadcast %3 : vector<1x32xf32> to vector<8x32xf32>
    %25 = arith.addf %23, %24 : vector<8x32xf32>
    %c0_10 = arith.constant 0 : index
    %c0_11 = arith.constant 0 : index
    %c0_12 = arith.constant 0 : index
    %26 = vector.load %arg4[%c0_10, %c0_11, %c0_12] : memref<1x8x32xf32, #tpu.memory_space<vmem>>, vector<1x8x32xf32>
    %27 = vector.shape_cast %26 : vector<1x8x32xf32> to vector<8x32xf32>
    %28 = vector.shape_cast %25 : vector<8x32xf32> to vector<1x8x32xf32>
    tpu.vector_store %arg4[%c0_10, %c0_11, %c0_12], %28 {strides = array<i32>} : memref<1x8x32xf32, #tpu.memory_space<vmem>>, vector<1x8x32xf32>,
    return
  }
  func.func @transform_0(%arg0: i32) -> (i32, i32, i32) {
    %c0_i32 = arith.constant 0 : i32
    %c0_i32_0 = arith.constant 0 : i32
    %c0_i32_1 = arith.constant 0 : i32
    return %arg0, %c0_i32, %c0_i32_0 : i32, i32, i32
  }
  func.func @transform_1(%arg0: i32) -> (i32, i32) {
    %c0_i32 = arith.constant 0 : i32
    %c0_i32_0 = arith.constant 0 : i32
    %c0_i32_1 = arith.constant 0 : i32
    return %c0_i32, %c0_i32_0 : i32, i32
  }
  func.func @transform_2(%arg0: i32) -> (i32, i32) {
    %c0_i32 = arith.constant 0 : i32
    %c0_i32_0 = arith.constant 0 : i32
    %c0_i32_1 = arith.constant 0 : i32
    return %c0_i32, %c0_i32_0 : i32, i32
  }
  func.func @transform_3(%arg0: i32) -> (i32, i32, i32) {
    %c0_i32 = arith.constant 0 : i32
    %c0_i32_0 = arith.constant 0 : i32
    %c0_i32_1 = arith.constant 0 : i32
    return %arg0, %c0_i32, %c0_i32_0 : i32, i32, i32
  }
}

module attributes {stable_mosaic.version = 11 : i64} {
  func.func @_ffn_block_kernel(%arg0: i32, %arg1: memref<1x8x32xf32, #tpu.memory_space<vmem>>, %arg2: memref<32x64xf32, #tpu.memory_space<vmem>>, %arg3: memref<1x64xf32, #tpu.memory_space<vmem>>, %arg4: memref<64x32xf32, #tpu.memory_space<vmem>>, %arg5: memref<1x32xf32, #tpu.memory_space<vmem>>, %arg6: memref<1x32xf32, #tpu.memory_space<vmem>>, %arg7: memref<1x32xf32, #tpu.memory_space<vmem>>, %arg8: memref<1x8x32xf32, #tpu.memory_space<vmem>>) attributes {dimension_semantics = [#tpu.dimension_semantics<parallel>], iteration_bounds = array<i64: 2>, scalar_prefetch = 0 : i64, scratch_operands = 0 : i64, tpu.core_type = #tpu.core_type<tc>, window_params = [{transform_indices = @transform_0, window_bounds = array<i64: 1, 8, 32>}, {pipeline_mode = #tpu.pipeline_mode<synchronous>, transform_indices = @transform_1, window_bounds = array<i64: 32, 64>}, {pipeline_mode = #tpu.pipeline_mode<synchronous>, transform_indices = @transform_2, window_bounds = array<i64: 1, 64>}, {pipeline_mode = #tpu.pipeline_mode<synchronous>, transform_indices = @transform_3, window_bounds = array<i64: 64, 32>}, {pipeline_mode = #tpu.pipeline_mode<synchronous>, transform_indices = @transform_4, window_bounds = array<i64: 1, 32>}, {pipeline_mode = #tpu.pipeline_mode<synchronous>, transform_indices = @transform_5, window_bounds = array<i64: 1, 32>}, {pipeline_mode = #tpu.pipeline_mode<synchronous>, transform_indices = @transform_6, window_bounds = array<i64: 1, 32>}, {transform_indices = @transform_7, window_bounds = array<i64: 1, 8, 32>}]} {
    %c0 = arith.constant 0 : index
    %c0_0 = arith.constant 0 : index
    %c0_1 = arith.constant 0 : index
    %0 = vector.load %arg1[%c0, %c0_0, %c0_1] : memref<1x8x32xf32, #tpu.memory_space<vmem>>, vector<1x8x32xf32>
    %1 = vector.shape_cast %0 : vector<1x8x32xf32> to vector<8x32xf32>
    %c0_2 = arith.constant 0 : index
    %c0_3 = arith.constant 0 : index
    %2 = vector.load %arg2[%c0_2, %c0_3] : memref<32x64xf32, #tpu.memory_space<vmem>>, vector<32x64xf32>
    %3 = arith.truncf %1 : vector<8x32xf32> to vector<8x32xbf16>
    %4 = arith.truncf %2 : vector<32x64xf32> to vector<32x64xbf16>
    %cst = arith.constant dense<0.000000e+00> : vector<8x64xf32>
    %5 = tpu.matmul %3, %4, %cst {dimension_numbers = #tpu.dot_dimension_numbers<[1], [0], [0], [1], [0, 0, 1, 1], [], []>} : vector<8x32xbf16>, vector<32x64xbf16>, vector<8x64xf32> -> vector<8x64xf32>
    %c0_4 = arith.constant 0 : index
    %c0_5 = arith.constant 0 : index
    %6 = vector.load %arg3[%c0_4, %c0_5] : memref<1x64xf32, #tpu.memory_space<vmem>>, vector<1x64xf32>
    %7 = vector.broadcast %6 : vector<1x64xf32> to vector<8x64xf32>
    %8 = arith.addf %5, %7 : vector<8x64xf32>
    %cst_6 = arith.constant 0.000000e+00 : f32
    %9 = vector.broadcast %cst_6 : f32 to vector<8x64xf32>
    %10 = arith.maximumf %8, %9 : vector<8x64xf32>
    %c0_7 = arith.constant 0 : index
    %c0_8 = arith.constant 0 : index
    %11 = vector.load %arg4[%c0_7, %c0_8] : memref<64x32xf32, #tpu.memory_space<vmem>>, vector<64x32xf32>
    %12 = arith.truncf %10 : vector<8x64xf32> to vector<8x64xbf16>
    %13 = arith.truncf %11 : vector<64x32xf32> to vector<64x32xbf16>
    %cst_9 = arith.constant dense<0.000000e+00> : vector<8x32xf32>
    %14 = tpu.matmul %12, %13, %cst_9 {dimension_numbers = #tpu.dot_dimension_numbers<[1], [0], [0], [1], [0, 0, 1, 1], [], []>} : vector<8x64xbf16>, vector<64x32xbf16>, vector<8x32xf32> -> vector<8x32xf32>
    %c0_10 = arith.constant 0 : index
    %c0_11 = arith.constant 0 : index
    %15 = vector.load %arg5[%c0_10, %c0_11] : memref<1x32xf32, #tpu.memory_space<vmem>>, vector<1x32xf32>
    %16 = vector.broadcast %15 : vector<1x32xf32> to vector<8x32xf32>
    %17 = arith.addf %14, %16 : vector<8x32xf32>
    %18 = arith.addf %1, %17 : vector<8x32xf32>
    %c0_12 = arith.constant 0 : index
    %c0_13 = arith.constant 0 : index
    %19 = vector.load %arg6[%c0_12, %c0_13] : memref<1x32xf32, #tpu.memory_space<vmem>>, vector<1x32xf32>
    %c0_14 = arith.constant 0 : index
    %c0_15 = arith.constant 0 : index
    %20 = vector.load %arg7[%c0_14, %c0_15] : memref<1x32xf32, #tpu.memory_space<vmem>>, vector<1x32xf32>
    %cst_16 = arith.constant dense<0.000000e+00> : vector<8xf32>
    %21 = vector.multi_reduction <add>, %18, %cst_16 [1] : vector<8x32xf32> to vector<8xf32>
    %22 = vector.shape_cast %21 : vector<8xf32> to vector<8x1xf32>
    %cst_17 = arith.constant 3.200000e+01 : f32
    %23 = vector.broadcast %cst_17 : f32 to vector<8x1xf32>
    %24 = arith.divf %22, %23 : vector<8x1xf32>
    %25 = vector.broadcast %24 : vector<8x1xf32> to vector<8x32xf32>
    %26 = arith.subf %18, %25 : vector<8x32xf32>
    %27 = arith.mulf %26, %26 : vector<8x32xf32>
    %cst_18 = arith.constant dense<0.000000e+00> : vector<8xf32>
    %28 = vector.multi_reduction <add>, %27, %cst_18 [1] : vector<8x32xf32> to vector<8xf32>
    %29 = vector.shape_cast %28 : vector<8xf32> to vector<8x1xf32>
    %cst_19 = arith.constant 3.200000e+01 : f32
    %30 = vector.broadcast %cst_19 : f32 to vector<8x1xf32>
    %31 = arith.divf %29, %30 : vector<8x1xf32>
    %32 = vector.broadcast %24 : vector<8x1xf32> to vector<8x32xf32>
    %33 = arith.subf %18, %32 : vector<8x32xf32>
    %cst_20 = arith.constant 9.99999974E-6 : f32
    %34 = vector.broadcast %cst_20 : f32 to vector<8x1xf32>
    %35 = arith.addf %31, %34 : vector<8x1xf32>
    %36 = math.rsqrt %35 : vector<8x1xf32>
    %37 = vector.broadcast %36 : vector<8x1xf32> to vector<8x32xf32>
    %38 = arith.mulf %33, %37 : vector<8x32xf32>
    %39 = vector.broadcast %19 : vector<1x32xf32> to vector<8x32xf32>
    %40 = arith.mulf %38, %39 : vector<8x32xf32>
    %41 = vector.broadcast %20 : vector<1x32xf32> to vector<8x32xf32>
    %42 = arith.addf %40, %41 : vector<8x32xf32>
    %c0_21 = arith.constant 0 : index
    %c0_22 = arith.constant 0 : index
    %c0_23 = arith.constant 0 : index
    %43 = vector.load %arg8[%c0_21, %c0_22, %c0_23] : memref<1x8x32xf32, #tpu.memory_space<vmem>>, vector<1x8x32xf32>
    %44 = vector.shape_cast %43 : vector<1x8x32xf32> to vector<8x32xf32>
    %45 = vector.shape_cast %42 : vector<8x32xf32> to vector<1x8x32xf32>
    tpu.vector_store %arg8[%c0_21, %c0_22, %c0_23], %45 {strides = array<i32>} : memref<1x8x32xf32, #tpu.memory_space<vmem>>, vector<1x8x32xf32>,
    return
  }
  func.func @transform_0(%arg0: i32) -> (i32, i32, i32) {
    %c0_i32 = arith.constant 0 : i32
    %c0_i32_0 = arith.constant 0 : i32
    %c0_i32_1 = arith.constant 0 : i32
    return %arg0, %c0_i32, %c0_i32_0 : i32, i32, i32
  }
  func.func @transform_1(%arg0: i32) -> (i32, i32) {
    %c0_i32 = arith.constant 0 : i32
    %c0_i32_0 = arith.constant 0 : i32
    %c0_i32_1 = arith.constant 0 : i32
    return %c0_i32, %c0_i32_0 : i32, i32
  }
  func.func @transform_2(%arg0: i32) -> (i32, i32) {
    %c0_i32 = arith.constant 0 : i32
    %c0_i32_0 = arith.constant 0 : i32
    %c0_i32_1 = arith.constant 0 : i32
    return %c0_i32, %c0_i32_0 : i32, i32
  }
  func.func @transform_3(%arg0: i32) -> (i32, i32) {
    %c0_i32 = arith.constant 0 : i32
    %c0_i32_0 = arith.constant 0 : i32
    %c0_i32_1 = arith.constant 0 : i32
    return %c0_i32, %c0_i32_0 : i32, i32
  }
  func.func @transform_4(%arg0: i32) -> (i32, i32) {
    %c0_i32 = arith.constant 0 : i32
    %c0_i32_0 = arith.constant 0 : i32
    %c0_i32_1 = arith.constant 0 : i32
    return %c0_i32, %c0_i32_0 : i32, i32
  }
  func.func @transform_5(%arg0: i32) -> (i32, i32) {
    %c0_i32 = arith.constant 0 : i32
    %c0_i32_0 = arith.constant 0 : i32
    %c0_i32_1 = arith.constant 0 : i32
    return %c0_i32, %c0_i32_0 : i32, i32
  }
  func.func @transform_6(%arg0: i32) -> (i32, i32) {
    %c0_i32 = arith.constant 0 : i32
    %c0_i32_0 = arith.constant 0 : i32
    %c0_i32_1 = arith.constant 0 : i32
    return %c0_i32, %c0_i32_0 : i32, i32
  }
  func.func @transform_7(%arg0: i32) -> (i32, i32, i32) {
    %c0_i32 = arith.constant 0 : i32
    %c0_i32_0 = arith.constant 0 : i32
    %c0_i32_1 = arith.constant 0 : i32
    return %arg0, %c0_i32, %c0_i32_0 : i32, i32, i32
  }
}

module attributes {stable_mosaic.version = 11 : i64} {
  func.func @_mha_block_kernel(%arg0: i32, %arg1: memref<1x8x32xf32, #tpu.memory_space<vmem>>, %arg2: memref<32x96xf32, #tpu.memory_space<vmem>>, %arg3: memref<1x96xf32, #tpu.memory_space<vmem>>, %arg4: memref<32x32xf32, #tpu.memory_space<vmem>>, %arg5: memref<1x32xf32, #tpu.memory_space<vmem>>, %arg6: memref<1x32xf32, #tpu.memory_space<vmem>>, %arg7: memref<1x32xf32, #tpu.memory_space<vmem>>, %arg8: memref<1x8x32xf32, #tpu.memory_space<vmem>>) attributes {dimension_semantics = [#tpu.dimension_semantics<parallel>], iteration_bounds = array<i64: 2>, scalar_prefetch = 0 : i64, scratch_operands = 0 : i64, tpu.core_type = #tpu.core_type<tc>, window_params = [{transform_indices = @transform_0, window_bounds = array<i64: 1, 8, 32>}, {pipeline_mode = #tpu.pipeline_mode<synchronous>, transform_indices = @transform_1, window_bounds = array<i64: 32, 96>}, {pipeline_mode = #tpu.pipeline_mode<synchronous>, transform_indices = @transform_2, window_bounds = array<i64: 1, 96>}, {pipeline_mode = #tpu.pipeline_mode<synchronous>, transform_indices = @transform_3, window_bounds = array<i64: 32, 32>}, {pipeline_mode = #tpu.pipeline_mode<synchronous>, transform_indices = @transform_4, window_bounds = array<i64: 1, 32>}, {pipeline_mode = #tpu.pipeline_mode<synchronous>, transform_indices = @transform_5, window_bounds = array<i64: 1, 32>}, {pipeline_mode = #tpu.pipeline_mode<synchronous>, transform_indices = @transform_6, window_bounds = array<i64: 1, 32>}, {transform_indices = @transform_7, window_bounds = array<i64: 1, 8, 32>}]} {
    %c0 = arith.constant 0 : index
    %c0_0 = arith.constant 0 : index
    %c0_1 = arith.constant 0 : index
    %0 = vector.load %arg1[%c0, %c0_0, %c0_1] : memref<1x8x32xf32, #tpu.memory_space<vmem>>, vector<1x8x32xf32>
    %1 = vector.shape_cast %0 : vector<1x8x32xf32> to vector<8x32xf32>
    %c0_2 = arith.constant 0 : index
    %c0_3 = arith.constant 0 : index
    %2 = vector.load %arg2[%c0_2, %c0_3] : memref<32x96xf32, #tpu.memory_space<vmem>>, vector<32x96xf32>
    %3 = arith.truncf %1 : vector<8x32xf32> to vector<8x32xbf16>
    %4 = arith.truncf %2 : vector<32x96xf32> to vector<32x96xbf16>
    %cst = arith.constant dense<0.000000e+00> : vector<8x96xf32>
    %5 = tpu.matmul %3, %4, %cst {dimension_numbers = #tpu.dot_dimension_numbers<[1], [0], [0], [1], [0, 0, 1, 1], [], []>} : vector<8x32xbf16>, vector<32x96xbf16>, vector<8x96xf32> -> vector<8x96xf32>
    %c0_4 = arith.constant 0 : index
    %c0_5 = arith.constant 0 : index
    %6 = vector.load %arg3[%c0_4, %c0_5] : memref<1x96xf32, #tpu.memory_space<vmem>>, vector<1x96xf32>
    %7 = vector.broadcast %6 : vector<1x96xf32> to vector<8x96xf32>
    %8 = arith.addf %5, %7 : vector<8x96xf32>
    %9 = vector.extract_strided_slice %8 {offsets = [0, 0], sizes = [8, 32], strides = [1, 1]} : vector<8x96xf32> to vector<8x32xf32>
    %10 = vector.extract_strided_slice %8 {offsets = [0, 32], sizes = [8, 32], strides = [1, 1]} : vector<8x96xf32> to vector<8x32xf32>
    %11 = vector.extract_strided_slice %8 {offsets = [0, 64], sizes = [8, 32], strides = [1, 1]} : vector<8x96xf32> to vector<8x32xf32>
    %12 = vector.extract_strided_slice %9 {offsets = [0, 0], sizes = [8, 8], strides = [1, 1]} : vector<8x32xf32> to vector<8x8xf32>
    %13 = vector.extract_strided_slice %10 {offsets = [0, 0], sizes = [8, 8], strides = [1, 1]} : vector<8x32xf32> to vector<8x8xf32>
    %14 = vector.extract_strided_slice %11 {offsets = [0, 0], sizes = [8, 8], strides = [1, 1]} : vector<8x32xf32> to vector<8x8xf32>
    %15 = arith.truncf %12 : vector<8x8xf32> to vector<8x8xbf16>
    %16 = arith.truncf %13 : vector<8x8xf32> to vector<8x8xbf16>
    %cst_6 = arith.constant dense<0.000000e+00> : vector<8x8xf32>
    %17 = tpu.matmul %15, %16, %cst_6 {dimension_numbers = #tpu.dot_dimension_numbers<[1], [1], [0], [0], [0, 0, 1, 0], [], []>} : vector<8x8xbf16>, vector<8x8xbf16>, vector<8x8xf32> -> vector<8x8xf32>
    %cst_7 = arith.constant 0.353553385 : f32
    %18 = vector.broadcast %cst_7 : f32 to vector<8x8xf32>
    %19 = arith.mulf %17, %18 : vector<8x8xf32>
    %cst_8 = arith.constant dense<0xFF800000> : vector<8xf32>
    %20 = vector.multi_reduction <maximumf>, %19, %cst_8 [1] : vector<8x8xf32> to vector<8xf32>
    %21 = vector.shape_cast %20 : vector<8xf32> to vector<8x1xf32>
    %22 = vector.broadcast %21 : vector<8x1xf32> to vector<8x8xf32>
    %23 = arith.subf %19, %22 : vector<8x8xf32>
    %24 = math.exp %23 : vector<8x8xf32>
    %cst_9 = arith.constant dense<0.000000e+00> : vector<8xf32>
    %25 = vector.multi_reduction <add>, %24, %cst_9 [1] : vector<8x8xf32> to vector<8xf32>
    %26 = vector.shape_cast %25 : vector<8xf32> to vector<8x1xf32>
    %27 = tpu.reciprocal %26 {approx = true} : vector<8x1xf32> -> vector<8x1xf32>
    %28 = vector.broadcast %27 : vector<8x1xf32> to vector<8x8xf32>
    %29 = arith.mulf %24, %28 : vector<8x8xf32>
    %30 = arith.truncf %29 : vector<8x8xf32> to vector<8x8xbf16>
    %31 = arith.truncf %14 : vector<8x8xf32> to vector<8x8xbf16>
    %cst_10 = arith.constant dense<0.000000e+00> : vector<8x8xf32>
    %32 = tpu.matmul %30, %31, %cst_10 {dimension_numbers = #tpu.dot_dimension_numbers<[1], [0], [0], [1], [0, 0, 1, 1], [], []>} : vector<8x8xbf16>, vector<8x8xbf16>, vector<8x8xf32> -> vector<8x8xf32>
    %33 = vector.extract_strided_slice %9 {offsets = [0, 8], sizes = [8, 8], strides = [1, 1]} : vector<8x32xf32> to vector<8x8xf32>
    %34 = vector.extract_strided_slice %10 {offsets = [0, 8], sizes = [8, 8], strides = [1, 1]} : vector<8x32xf32> to vector<8x8xf32>
    %35 = vector.extract_strided_slice %11 {offsets = [0, 8], sizes = [8, 8], strides = [1, 1]} : vector<8x32xf32> to vector<8x8xf32>
    %36 = arith.truncf %33 : vector<8x8xf32> to vector<8x8xbf16>
    %37 = arith.truncf %34 : vector<8x8xf32> to vector<8x8xbf16>
    %cst_11 = arith.constant dense<0.000000e+00> : vector<8x8xf32>
    %38 = tpu.matmul %36, %37, %cst_11 {dimension_numbers = #tpu.dot_dimension_numbers<[1], [1], [0], [0], [0, 0, 1, 0], [], []>} : vector<8x8xbf16>, vector<8x8xbf16>, vector<8x8xf32> -> vector<8x8xf32>
    %cst_12 = arith.constant 0.353553385 : f32
    %39 = vector.broadcast %cst_12 : f32 to vector<8x8xf32>
    %40 = arith.mulf %38, %39 : vector<8x8xf32>
    %cst_13 = arith.constant dense<0xFF800000> : vector<8xf32>
    %41 = vector.multi_reduction <maximumf>, %40, %cst_13 [1] : vector<8x8xf32> to vector<8xf32>
    %42 = vector.shape_cast %41 : vector<8xf32> to vector<8x1xf32>
    %43 = vector.broadcast %42 : vector<8x1xf32> to vector<8x8xf32>
    %44 = arith.subf %40, %43 : vector<8x8xf32>
    %45 = math.exp %44 : vector<8x8xf32>
    %cst_14 = arith.constant dense<0.000000e+00> : vector<8xf32>
    %46 = vector.multi_reduction <add>, %45, %cst_14 [1] : vector<8x8xf32> to vector<8xf32>
    %47 = vector.shape_cast %46 : vector<8xf32> to vector<8x1xf32>
    %48 = tpu.reciprocal %47 {approx = true} : vector<8x1xf32> -> vector<8x1xf32>
    %49 = vector.broadcast %48 : vector<8x1xf32> to vector<8x8xf32>
    %50 = arith.mulf %45, %49 : vector<8x8xf32>
    %51 = arith.truncf %50 : vector<8x8xf32> to vector<8x8xbf16>
    %52 = arith.truncf %35 : vector<8x8xf32> to vector<8x8xbf16>
    %cst_15 = arith.constant dense<0.000000e+00> : vector<8x8xf32>
    %53 = tpu.matmul %51, %52, %cst_15 {dimension_numbers = #tpu.dot_dimension_numbers<[1], [0], [0], [1], [0, 0, 1, 1], [], []>} : vector<8x8xbf16>, vector<8x8xbf16>, vector<8x8xf32> -> vector<8x8xf32>
    %54 = vector.extract_strided_slice %9 {offsets = [0, 16], sizes = [8, 8], strides = [1, 1]} : vector<8x32xf32> to vector<8x8xf32>
    %55 = vector.extract_strided_slice %10 {offsets = [0, 16], sizes = [8, 8], strides = [1, 1]} : vector<8x32xf32> to vector<8x8xf32>
    %56 = vector.extract_strided_slice %11 {offsets = [0, 16], sizes = [8, 8], strides = [1, 1]} : vector<8x32xf32> to vector<8x8xf32>
    %57 = arith.truncf %54 : vector<8x8xf32> to vector<8x8xbf16>
    %58 = arith.truncf %55 : vector<8x8xf32> to vector<8x8xbf16>
    %cst_16 = arith.constant dense<0.000000e+00> : vector<8x8xf32>
    %59 = tpu.matmul %57, %58, %cst_16 {dimension_numbers = #tpu.dot_dimension_numbers<[1], [1], [0], [0], [0, 0, 1, 0], [], []>} : vector<8x8xbf16>, vector<8x8xbf16>, vector<8x8xf32> -> vector<8x8xf32>
    %cst_17 = arith.constant 0.353553385 : f32
    %60 = vector.broadcast %cst_17 : f32 to vector<8x8xf32>
    %61 = arith.mulf %59, %60 : vector<8x8xf32>
    %cst_18 = arith.constant dense<0xFF800000> : vector<8xf32>
    %62 = vector.multi_reduction <maximumf>, %61, %cst_18 [1] : vector<8x8xf32> to vector<8xf32>
    %63 = vector.shape_cast %62 : vector<8xf32> to vector<8x1xf32>
    %64 = vector.broadcast %63 : vector<8x1xf32> to vector<8x8xf32>
    %65 = arith.subf %61, %64 : vector<8x8xf32>
    %66 = math.exp %65 : vector<8x8xf32>
    %cst_19 = arith.constant dense<0.000000e+00> : vector<8xf32>
    %67 = vector.multi_reduction <add>, %66, %cst_19 [1] : vector<8x8xf32> to vector<8xf32>
    %68 = vector.shape_cast %67 : vector<8xf32> to vector<8x1xf32>
    %69 = tpu.reciprocal %68 {approx = true} : vector<8x1xf32> -> vector<8x1xf32>
    %70 = vector.broadcast %69 : vector<8x1xf32> to vector<8x8xf32>
    %71 = arith.mulf %66, %70 : vector<8x8xf32>
    %72 = arith.truncf %71 : vector<8x8xf32> to vector<8x8xbf16>
    %73 = arith.truncf %56 : vector<8x8xf32> to vector<8x8xbf16>
    %cst_20 = arith.constant dense<0.000000e+00> : vector<8x8xf32>
    %74 = tpu.matmul %72, %73, %cst_20 {dimension_numbers = #tpu.dot_dimension_numbers<[1], [0], [0], [1], [0, 0, 1, 1], [], []>} : vector<8x8xbf16>, vector<8x8xbf16>, vector<8x8xf32> -> vector<8x8xf32>
    %75 = vector.extract_strided_slice %9 {offsets = [0, 24], sizes = [8, 8], strides = [1, 1]} : vector<8x32xf32> to vector<8x8xf32>
    %76 = vector.extract_strided_slice %10 {offsets = [0, 24], sizes = [8, 8], strides = [1, 1]} : vector<8x32xf32> to vector<8x8xf32>
    %77 = vector.extract_strided_slice %11 {offsets = [0, 24], sizes = [8, 8], strides = [1, 1]} : vector<8x32xf32> to vector<8x8xf32>
    %78 = arith.truncf %75 : vector<8x8xf32> to vector<8x8xbf16>
    %79 = arith.truncf %76 : vector<8x8xf32> to vector<8x8xbf16>
    %cst_21 = arith.constant dense<0.000000e+00> : vector<8x8xf32>
    %80 = tpu.matmul %78, %79, %cst_21 {dimension_numbers = #tpu.dot_dimension_numbers<[1], [1], [0], [0], [0, 0, 1, 0], [], []>} : vector<8x8xbf16>, vector<8x8xbf16>, vector<8x8xf32> -> vector<8x8xf32>
    %cst_22 = arith.constant 0.353553385 : f32
    %81 = vector.broadcast %cst_22 : f32 to vector<8x8xf32>
    %82 = arith.mulf %80, %81 : vector<8x8xf32>
    %cst_23 = arith.constant dense<0xFF800000> : vector<8xf32>
    %83 = vector.multi_reduction <maximumf>, %82, %cst_23 [1] : vector<8x8xf32> to vector<8xf32>
    %84 = vector.shape_cast %83 : vector<8xf32> to vector<8x1xf32>
    %85 = vector.broadcast %84 : vector<8x1xf32> to vector<8x8xf32>
    %86 = arith.subf %82, %85 : vector<8x8xf32>
    %87 = math.exp %86 : vector<8x8xf32>
    %cst_24 = arith.constant dense<0.000000e+00> : vector<8xf32>
    %88 = vector.multi_reduction <add>, %87, %cst_24 [1] : vector<8x8xf32> to vector<8xf32>
    %89 = vector.shape_cast %88 : vector<8xf32> to vector<8x1xf32>
    %90 = tpu.reciprocal %89 {approx = true} : vector<8x1xf32> -> vector<8x1xf32>
    %91 = vector.broadcast %90 : vector<8x1xf32> to vector<8x8xf32>
    %92 = arith.mulf %87, %91 : vector<8x8xf32>
    %93 = arith.truncf %92 : vector<8x8xf32> to vector<8x8xbf16>
    %94 = arith.truncf %77 : vector<8x8xf32> to vector<8x8xbf16>
    %cst_25 = arith.constant dense<0.000000e+00> : vector<8x8xf32>
    %95 = tpu.matmul %93, %94, %cst_25 {dimension_numbers = #tpu.dot_dimension_numbers<[1], [0], [0], [1], [0, 0, 1, 1], [], []>} : vector<8x8xbf16>, vector<8x8xbf16>, vector<8x8xf32> -> vector<8x8xf32>
    %96 = tpu.concatenate %32, %53, %74, %95 in 1 : vector<8x8xf32>, vector<8x8xf32>, vector<8x8xf32>, vector<8x8xf32> -> vector<8x32xf32>
    %c0_26 = arith.constant 0 : index
    %c0_27 = arith.constant 0 : index
    %97 = vector.load %arg4[%c0_26, %c0_27] : memref<32x32xf32, #tpu.memory_space<vmem>>, vector<32x32xf32>
    %98 = arith.truncf %96 : vector<8x32xf32> to vector<8x32xbf16>
    %99 = arith.truncf %97 : vector<32x32xf32> to vector<32x32xbf16>
    %cst_28 = arith.constant dense<0.000000e+00> : vector<8x32xf32>
    %100 = tpu.matmul %98, %99, %cst_28 {dimension_numbers = #tpu.dot_dimension_numbers<[1], [0], [0], [1], [0, 0, 1, 1], [], []>} : vector<8x32xbf16>, vector<32x32xbf16>, vector<8x32xf32> -> vector<8x32xf32>
    %c0_29 = arith.constant 0 : index
    %c0_30 = arith.constant 0 : index
    %101 = vector.load %arg5[%c0_29, %c0_30] : memref<1x32xf32, #tpu.memory_space<vmem>>, vector<1x32xf32>
    %102 = vector.broadcast %101 : vector<1x32xf32> to vector<8x32xf32>
    %103 = arith.addf %100, %102 : vector<8x32xf32>
    %104 = arith.addf %1, %103 : vector<8x32xf32>
    %c0_31 = arith.constant 0 : index
    %c0_32 = arith.constant 0 : index
    %105 = vector.load %arg6[%c0_31, %c0_32] : memref<1x32xf32, #tpu.memory_space<vmem>>, vector<1x32xf32>
    %c0_33 = arith.constant 0 : index
    %c0_34 = arith.constant 0 : index
    %106 = vector.load %arg7[%c0_33, %c0_34] : memref<1x32xf32, #tpu.memory_space<vmem>>, vector<1x32xf32>
    %cst_35 = arith.constant dense<0.000000e+00> : vector<8xf32>
    %107 = vector.multi_reduction <add>, %104, %cst_35 [1] : vector<8x32xf32> to vector<8xf32>
    %108 = vector.shape_cast %107 : vector<8xf32> to vector<8x1xf32>
    %cst_36 = arith.constant 3.200000e+01 : f32
    %109 = vector.broadcast %cst_36 : f32 to vector<8x1xf32>
    %110 = arith.divf %108, %109 : vector<8x1xf32>
    %111 = vector.broadcast %110 : vector<8x1xf32> to vector<8x32xf32>
    %112 = arith.subf %104, %111 : vector<8x32xf32>
    %113 = arith.mulf %112, %112 : vector<8x32xf32>
    %cst_37 = arith.constant dense<0.000000e+00> : vector<8xf32>
    %114 = vector.multi_reduction <add>, %113, %cst_37 [1] : vector<8x32xf32> to vector<8xf32>
    %115 = vector.shape_cast %114 : vector<8xf32> to vector<8x1xf32>
    %cst_38 = arith.constant 3.200000e+01 : f32
    %116 = vector.broadcast %cst_38 : f32 to vector<8x1xf32>
    %117 = arith.divf %115, %116 : vector<8x1xf32>
    %118 = vector.broadcast %110 : vector<8x1xf32> to vector<8x32xf32>
    %119 = arith.subf %104, %118 : vector<8x32xf32>
    %cst_39 = arith.constant 9.99999974E-6 : f32
    %120 = vector.broadcast %cst_39 : f32 to vector<8x1xf32>
    %121 = arith.addf %117, %120 : vector<8x1xf32>
    %122 = math.rsqrt %121 : vector<8x1xf32>
    %123 = vector.broadcast %122 : vector<8x1xf32> to vector<8x32xf32>
    %124 = arith.mulf %119, %123 : vector<8x32xf32>
    %125 = vector.broadcast %105 : vector<1x32xf32> to vector<8x32xf32>
    %126 = arith.mulf %124, %125 : vector<8x32xf32>
    %127 = vector.broadcast %106 : vector<1x32xf32> to vector<8x32xf32>
    %128 = arith.addf %126, %127 : vector<8x32xf32>
    %c0_40 = arith.constant 0 : index
    %c0_41 = arith.constant 0 : index
    %c0_42 = arith.constant 0 : index
    %129 = vector.load %arg8[%c0_40, %c0_41, %c0_42] : memref<1x8x32xf32, #tpu.memory_space<vmem>>, vector<1x8x32xf32>
    %130 = vector.shape_cast %129 : vector<1x8x32xf32> to vector<8x32xf32>
    %131 = vector.shape_cast %128 : vector<8x32xf32> to vector<1x8x32xf32>
    tpu.vector_store %arg8[%c0_40, %c0_41, %c0_42], %131 {strides = array<i32>} : memref<1x8x32xf32, #tpu.memory_space<vmem>>, vector<1x8x32xf32>,
    return
  }
  func.func @transform_0(%arg0: i32) -> (i32, i32, i32) {
    %c0_i32 = arith.constant 0 : i32
    %c0_i32_0 = arith.constant 0 : i32
    %c0_i32_1 = arith.constant 0 : i32
    return %arg0, %c0_i32, %c0_i32_0 : i32, i32, i32
  }
  func.func @transform_1(%arg0: i32) -> (i32, i32) {
    %c0_i32 = arith.constant 0 : i32
    %c0_i32_0 = arith.constant 0 : i32
    %c0_i32_1 = arith.constant 0 : i32
    return %c0_i32, %c0_i32_0 : i32, i32
  }
  func.func @transform_2(%arg0: i32) -> (i32, i32) {
    %c0_i32 = arith.constant 0 : i32
    %c0_i32_0 = arith.constant 0 : i32
    %c0_i32_1 = arith.constant 0 : i32
    return %c0_i32, %c0_i32_0 : i32, i32
  }
  func.func @transform_3(%arg0: i32) -> (i32, i32) {
    %c0_i32 = arith.constant 0 : i32
    %c0_i32_0 = arith.constant 0 : i32
    %c0_i32_1 = arith.constant 0 : i32
    return %c0_i32, %c0_i32_0 : i32, i32
  }
  func.func @transform_4(%arg0: i32) -> (i32, i32) {
    %c0_i32 = arith.constant 0 : i32
    %c0_i32_0 = arith.constant 0 : i32
    %c0_i32_1 = arith.constant 0 : i32
    return %c0_i32, %c0_i32_0 : i32, i32
  }
  func.func @transform_5(%arg0: i32) -> (i32, i32) {
    %c0_i32 = arith.constant 0 : i32
    %c0_i32_0 = arith.constant 0 : i32
    %c0_i32_1 = arith.constant 0 : i32
    return %c0_i32, %c0_i32_0 : i32, i32
  }
  func.func @transform_6(%arg0: i32) -> (i32, i32) {
    %c0_i32 = arith.constant 0 : i32
    %c0_i32_0 = arith.constant 0 : i32
    %c0_i32_1 = arith.constant 0 : i32
    return %c0_i32, %c0_i32_0 : i32, i32
  }
  func.func @transform_7(%arg0: i32) -> (i32, i32, i32) {
    %c0_i32 = arith.constant 0 : i32
    %c0_i32_0 = arith.constant 0 : i32
    %c0_i32_1 = arith.constant 0 : i32
    return %arg0, %c0_i32, %c0_i32_0 : i32, i32, i32
  }
}

module attributes {stable_mosaic.version = 11 : i64} {
  func.func @_mha_block_kernel(%arg0: i32, %arg1: memref<1x8x32xf32, #tpu.memory_space<vmem>>, %arg2: memref<32x96xf32, #tpu.memory_space<vmem>>, %arg3: memref<1x96xf32, #tpu.memory_space<vmem>>, %arg4: memref<32x32xf32, #tpu.memory_space<vmem>>, %arg5: memref<1x32xf32, #tpu.memory_space<vmem>>, %arg6: memref<1x32xf32, #tpu.memory_space<vmem>>, %arg7: memref<1x32xf32, #tpu.memory_space<vmem>>, %arg8: memref<8x8xf32, #tpu.memory_space<vmem>>, %arg9: memref<1x8x32xf32, #tpu.memory_space<vmem>>) attributes {dimension_semantics = [#tpu.dimension_semantics<parallel>], iteration_bounds = array<i64: 2>, scalar_prefetch = 0 : i64, scratch_operands = 0 : i64, tpu.core_type = #tpu.core_type<tc>, window_params = [{transform_indices = @transform_0, window_bounds = array<i64: 1, 8, 32>}, {pipeline_mode = #tpu.pipeline_mode<synchronous>, transform_indices = @transform_1, window_bounds = array<i64: 32, 96>}, {pipeline_mode = #tpu.pipeline_mode<synchronous>, transform_indices = @transform_2, window_bounds = array<i64: 1, 96>}, {pipeline_mode = #tpu.pipeline_mode<synchronous>, transform_indices = @transform_3, window_bounds = array<i64: 32, 32>}, {pipeline_mode = #tpu.pipeline_mode<synchronous>, transform_indices = @transform_4, window_bounds = array<i64: 1, 32>}, {pipeline_mode = #tpu.pipeline_mode<synchronous>, transform_indices = @transform_5, window_bounds = array<i64: 1, 32>}, {pipeline_mode = #tpu.pipeline_mode<synchronous>, transform_indices = @transform_6, window_bounds = array<i64: 1, 32>}, {pipeline_mode = #tpu.pipeline_mode<synchronous>, transform_indices = @transform_7, window_bounds = array<i64: 8, 8>}, {transform_indices = @transform_8, window_bounds = array<i64: 1, 8, 32>}]} {
    %c0 = arith.constant 0 : index
    %c0_0 = arith.constant 0 : index
    %c0_1 = arith.constant 0 : index
    %0 = vector.load %arg1[%c0, %c0_0, %c0_1] : memref<1x8x32xf32, #tpu.memory_space<vmem>>, vector<1x8x32xf32>
    %1 = vector.shape_cast %0 : vector<1x8x32xf32> to vector<8x32xf32>
    %c0_2 = arith.constant 0 : index
    %c0_3 = arith.constant 0 : index
    %2 = vector.load %arg2[%c0_2, %c0_3] : memref<32x96xf32, #tpu.memory_space<vmem>>, vector<32x96xf32>
    %3 = arith.truncf %1 : vector<8x32xf32> to vector<8x32xbf16>
    %4 = arith.truncf %2 : vector<32x96xf32> to vector<32x96xbf16>
    %cst = arith.constant dense<0.000000e+00> : vector<8x96xf32>
    %5 = tpu.matmul %3, %4, %cst {dimension_numbers = #tpu.dot_dimension_numbers<[1], [0], [0], [1], [0, 0, 1, 1], [], []>} : vector<8x32xbf16>, vector<32x96xbf16>, vector<8x96xf32> -> vector<8x96xf32>
    %c0_4 = arith.constant 0 : index
    %c0_5 = arith.constant 0 : index
    %6 = vector.load %arg3[%c0_4, %c0_5] : memref<1x96xf32, #tpu.memory_space<vmem>>, vector<1x96xf32>
    %7 = vector.broadcast %6 : vector<1x96xf32> to vector<8x96xf32>
    %8 = arith.addf %5, %7 : vector<8x96xf32>
    %9 = vector.extract_strided_slice %8 {offsets = [0, 0], sizes = [8, 32], strides = [1, 1]} : vector<8x96xf32> to vector<8x32xf32>
    %10 = vector.extract_strided_slice %8 {offsets = [0, 32], sizes = [8, 32], strides = [1, 1]} : vector<8x96xf32> to vector<8x32xf32>
    %11 = vector.extract_strided_slice %8 {offsets = [0, 64], sizes = [8, 32], strides = [1, 1]} : vector<8x96xf32> to vector<8x32xf32>
    %12 = vector.extract_strided_slice %9 {offsets = [0, 0], sizes = [8, 8], strides = [1, 1]} : vector<8x32xf32> to vector<8x8xf32>
    %13 = vector.extract_strided_slice %10 {offsets = [0, 0], sizes = [8, 8], strides = [1, 1]} : vector<8x32xf32> to vector<8x8xf32>
    %14 = vector.extract_strided_slice %11 {offsets = [0, 0], sizes = [8, 8], strides = [1, 1]} : vector<8x32xf32> to vector<8x8xf32>
    %15 = arith.truncf %12 : vector<8x8xf32> to vector<8x8xbf16>
    %16 = arith.truncf %13 : vector<8x8xf32> to vector<8x8xbf16>
    %cst_6 = arith.constant dense<0.000000e+00> : vector<8x8xf32>
    %17 = tpu.matmul %15, %16, %cst_6 {dimension_numbers = #tpu.dot_dimension_numbers<[1], [1], [0], [0], [0, 0, 1, 0], [], []>} : vector<8x8xbf16>, vector<8x8xbf16>, vector<8x8xf32> -> vector<8x8xf32>
    %cst_7 = arith.constant 0.353553385 : f32
    %18 = vector.broadcast %cst_7 : f32 to vector<8x8xf32>
    %19 = arith.mulf %17, %18 : vector<8x8xf32>
    %c0_8 = arith.constant 0 : index
    %c0_9 = arith.constant 0 : index
    %20 = vector.load %arg8[%c0_8, %c0_9] : memref<8x8xf32, #tpu.memory_space<vmem>>, vector<8x8xf32>
    %21 = arith.addf %19, %20 : vector<8x8xf32>
    %cst_10 = arith.constant dense<0xFF800000> : vector<8xf32>
    %22 = vector.multi_reduction <maximumf>, %21, %cst_10 [1] : vector<8x8xf32> to vector<8xf32>
    %23 = vector.shape_cast %22 : vector<8xf32> to vector<8x1xf32>
    %24 = vector.broadcast %23 : vector<8x1xf32> to vector<8x8xf32>
    %25 = arith.subf %21, %24 : vector<8x8xf32>
    %26 = math.exp %25 : vector<8x8xf32>
    %cst_11 = arith.constant dense<0.000000e+00> : vector<8xf32>
    %27 = vector.multi_reduction <add>, %26, %cst_11 [1] : vector<8x8xf32> to vector<8xf32>
    %28 = vector.shape_cast %27 : vector<8xf32> to vector<8x1xf32>
    %29 = tpu.reciprocal %28 {approx = true} : vector<8x1xf32> -> vector<8x1xf32>
    %30 = vector.broadcast %29 : vector<8x1xf32> to vector<8x8xf32>
    %31 = arith.mulf %26, %30 : vector<8x8xf32>
    %32 = arith.truncf %31 : vector<8x8xf32> to vector<8x8xbf16>
    %33 = arith.truncf %14 : vector<8x8xf32> to vector<8x8xbf16>
    %cst_12 = arith.constant dense<0.000000e+00> : vector<8x8xf32>
    %34 = tpu.matmul %32, %33, %cst_12 {dimension_numbers = #tpu.dot_dimension_numbers<[1], [0], [0], [1], [0, 0, 1, 1], [], []>} : vector<8x8xbf16>, vector<8x8xbf16>, vector<8x8xf32> -> vector<8x8xf32>
    %35 = vector.extract_strided_slice %9 {offsets = [0, 8], sizes = [8, 8], strides = [1, 1]} : vector<8x32xf32> to vector<8x8xf32>
    %36 = vector.extract_strided_slice %10 {offsets = [0, 8], sizes = [8, 8], strides = [1, 1]} : vector<8x32xf32> to vector<8x8xf32>
    %37 = vector.extract_strided_slice %11 {offsets = [0, 8], sizes = [8, 8], strides = [1, 1]} : vector<8x32xf32> to vector<8x8xf32>
    %38 = arith.truncf %35 : vector<8x8xf32> to vector<8x8xbf16>
    %39 = arith.truncf %36 : vector<8x8xf32> to vector<8x8xbf16>
    %cst_13 = arith.constant dense<0.000000e+00> : vector<8x8xf32>
    %40 = tpu.matmul %38, %39, %cst_13 {dimension_numbers = #tpu.dot_dimension_numbers<[1], [1], [0], [0], [0, 0, 1, 0], [], []>} : vector<8x8xbf16>, vector<8x8xbf16>, vector<8x8xf32> -> vector<8x8xf32>
    %cst_14 = arith.constant 0.353553385 : f32
    %41 = vector.broadcast %cst_14 : f32 to vector<8x8xf32>
    %42 = arith.mulf %40, %41 : vector<8x8xf32>
    %c0_15 = arith.constant 0 : index
    %c0_16 = arith.constant 0 : index
    %43 = vector.load %arg8[%c0_15, %c0_16] : memref<8x8xf32, #tpu.memory_space<vmem>>, vector<8x8xf32>
    %44 = arith.addf %42, %43 : vector<8x8xf32>
    %cst_17 = arith.constant dense<0xFF800000> : vector<8xf32>
    %45 = vector.multi_reduction <maximumf>, %44, %cst_17 [1] : vector<8x8xf32> to vector<8xf32>
    %46 = vector.shape_cast %45 : vector<8xf32> to vector<8x1xf32>
    %47 = vector.broadcast %46 : vector<8x1xf32> to vector<8x8xf32>
    %48 = arith.subf %44, %47 : vector<8x8xf32>
    %49 = math.exp %48 : vector<8x8xf32>
    %cst_18 = arith.constant dense<0.000000e+00> : vector<8xf32>
    %50 = vector.multi_reduction <add>, %49, %cst_18 [1] : vector<8x8xf32> to vector<8xf32>
    %51 = vector.shape_cast %50 : vector<8xf32> to vector<8x1xf32>
    %52 = tpu.reciprocal %51 {approx = true} : vector<8x1xf32> -> vector<8x1xf32>
    %53 = vector.broadcast %52 : vector<8x1xf32> to vector<8x8xf32>
    %54 = arith.mulf %49, %53 : vector<8x8xf32>
    %55 = arith.truncf %54 : vector<8x8xf32> to vector<8x8xbf16>
    %56 = arith.truncf %37 : vector<8x8xf32> to vector<8x8xbf16>
    %cst_19 = arith.constant dense<0.000000e+00> : vector<8x8xf32>
    %57 = tpu.matmul %55, %56, %cst_19 {dimension_numbers = #tpu.dot_dimension_numbers<[1], [0], [0], [1], [0, 0, 1, 1], [], []>} : vector<8x8xbf16>, vector<8x8xbf16>, vector<8x8xf32> -> vector<8x8xf32>
    %58 = vector.extract_strided_slice %9 {offsets = [0, 16], sizes = [8, 8], strides = [1, 1]} : vector<8x32xf32> to vector<8x8xf32>
    %59 = vector.extract_strided_slice %10 {offsets = [0, 16], sizes = [8, 8], strides = [1, 1]} : vector<8x32xf32> to vector<8x8xf32>
    %60 = vector.extract_strided_slice %11 {offsets = [0, 16], sizes = [8, 8], strides = [1, 1]} : vector<8x32xf32> to vector<8x8xf32>
    %61 = arith.truncf %58 : vector<8x8xf32> to vector<8x8xbf16>
    %62 = arith.truncf %59 : vector<8x8xf32> to vector<8x8xbf16>
    %cst_20 = arith.constant dense<0.000000e+00> : vector<8x8xf32>
    %63 = tpu.matmul %61, %62, %cst_20 {dimension_numbers = #tpu.dot_dimension_numbers<[1], [1], [0], [0], [0, 0, 1, 0], [], []>} : vector<8x8xbf16>, vector<8x8xbf16>, vector<8x8xf32> -> vector<8x8xf32>
    %cst_21 = arith.constant 0.353553385 : f32
    %64 = vector.broadcast %cst_21 : f32 to vector<8x8xf32>
    %65 = arith.mulf %63, %64 : vector<8x8xf32>
    %c0_22 = arith.constant 0 : index
    %c0_23 = arith.constant 0 : index
    %66 = vector.load %arg8[%c0_22, %c0_23] : memref<8x8xf32, #tpu.memory_space<vmem>>, vector<8x8xf32>
    %67 = arith.addf %65, %66 : vector<8x8xf32>
    %cst_24 = arith.constant dense<0xFF800000> : vector<8xf32>
    %68 = vector.multi_reduction <maximumf>, %67, %cst_24 [1] : vector<8x8xf32> to vector<8xf32>
    %69 = vector.shape_cast %68 : vector<8xf32> to vector<8x1xf32>
    %70 = vector.broadcast %69 : vector<8x1xf32> to vector<8x8xf32>
    %71 = arith.subf %67, %70 : vector<8x8xf32>
    %72 = math.exp %71 : vector<8x8xf32>
    %cst_25 = arith.constant dense<0.000000e+00> : vector<8xf32>
    %73 = vector.multi_reduction <add>, %72, %cst_25 [1] : vector<8x8xf32> to vector<8xf32>
    %74 = vector.shape_cast %73 : vector<8xf32> to vector<8x1xf32>
    %75 = tpu.reciprocal %74 {approx = true} : vector<8x1xf32> -> vector<8x1xf32>
    %76 = vector.broadcast %75 : vector<8x1xf32> to vector<8x8xf32>
    %77 = arith.mulf %72, %76 : vector<8x8xf32>
    %78 = arith.truncf %77 : vector<8x8xf32> to vector<8x8xbf16>
    %79 = arith.truncf %60 : vector<8x8xf32> to vector<8x8xbf16>
    %cst_26 = arith.constant dense<0.000000e+00> : vector<8x8xf32>
    %80 = tpu.matmul %78, %79, %cst_26 {dimension_numbers = #tpu.dot_dimension_numbers<[1], [0], [0], [1], [0, 0, 1, 1], [], []>} : vector<8x8xbf16>, vector<8x8xbf16>, vector<8x8xf32> -> vector<8x8xf32>
    %81 = vector.extract_strided_slice %9 {offsets = [0, 24], sizes = [8, 8], strides = [1, 1]} : vector<8x32xf32> to vector<8x8xf32>
    %82 = vector.extract_strided_slice %10 {offsets = [0, 24], sizes = [8, 8], strides = [1, 1]} : vector<8x32xf32> to vector<8x8xf32>
    %83 = vector.extract_strided_slice %11 {offsets = [0, 24], sizes = [8, 8], strides = [1, 1]} : vector<8x32xf32> to vector<8x8xf32>
    %84 = arith.truncf %81 : vector<8x8xf32> to vector<8x8xbf16>
    %85 = arith.truncf %82 : vector<8x8xf32> to vector<8x8xbf16>
    %cst_27 = arith.constant dense<0.000000e+00> : vector<8x8xf32>
    %86 = tpu.matmul %84, %85, %cst_27 {dimension_numbers = #tpu.dot_dimension_numbers<[1], [1], [0], [0], [0, 0, 1, 0], [], []>} : vector<8x8xbf16>, vector<8x8xbf16>, vector<8x8xf32> -> vector<8x8xf32>
    %cst_28 = arith.constant 0.353553385 : f32
    %87 = vector.broadcast %cst_28 : f32 to vector<8x8xf32>
    %88 = arith.mulf %86, %87 : vector<8x8xf32>
    %c0_29 = arith.constant 0 : index
    %c0_30 = arith.constant 0 : index
    %89 = vector.load %arg8[%c0_29, %c0_30] : memref<8x8xf32, #tpu.memory_space<vmem>>, vector<8x8xf32>
    %90 = arith.addf %88, %89 : vector<8x8xf32>
    %cst_31 = arith.constant dense<0xFF800000> : vector<8xf32>
    %91 = vector.multi_reduction <maximumf>, %90, %cst_31 [1] : vector<8x8xf32> to vector<8xf32>
    %92 = vector.shape_cast %91 : vector<8xf32> to vector<8x1xf32>
    %93 = vector.broadcast %92 : vector<8x1xf32> to vector<8x8xf32>
    %94 = arith.subf %90, %93 : vector<8x8xf32>
    %95 = math.exp %94 : vector<8x8xf32>
    %cst_32 = arith.constant dense<0.000000e+00> : vector<8xf32>
    %96 = vector.multi_reduction <add>, %95, %cst_32 [1] : vector<8x8xf32> to vector<8xf32>
    %97 = vector.shape_cast %96 : vector<8xf32> to vector<8x1xf32>
    %98 = tpu.reciprocal %97 {approx = true} : vector<8x1xf32> -> vector<8x1xf32>
    %99 = vector.broadcast %98 : vector<8x1xf32> to vector<8x8xf32>
    %100 = arith.mulf %95, %99 : vector<8x8xf32>
    %101 = arith.truncf %100 : vector<8x8xf32> to vector<8x8xbf16>
    %102 = arith.truncf %83 : vector<8x8xf32> to vector<8x8xbf16>
    %cst_33 = arith.constant dense<0.000000e+00> : vector<8x8xf32>
    %103 = tpu.matmul %101, %102, %cst_33 {dimension_numbers = #tpu.dot_dimension_numbers<[1], [0], [0], [1], [0, 0, 1, 1], [], []>} : vector<8x8xbf16>, vector<8x8xbf16>, vector<8x8xf32> -> vector<8x8xf32>
    %104 = tpu.concatenate %34, %57, %80, %103 in 1 : vector<8x8xf32>, vector<8x8xf32>, vector<8x8xf32>, vector<8x8xf32> -> vector<8x32xf32>
    %c0_34 = arith.constant 0 : index
    %c0_35 = arith.constant 0 : index
    %105 = vector.load %arg4[%c0_34, %c0_35] : memref<32x32xf32, #tpu.memory_space<vmem>>, vector<32x32xf32>
    %106 = arith.truncf %104 : vector<8x32xf32> to vector<8x32xbf16>
    %107 = arith.truncf %105 : vector<32x32xf32> to vector<32x32xbf16>
    %cst_36 = arith.constant dense<0.000000e+00> : vector<8x32xf32>
    %108 = tpu.matmul %106, %107, %cst_36 {dimension_numbers = #tpu.dot_dimension_numbers<[1], [0], [0], [1], [0, 0, 1, 1], [], []>} : vector<8x32xbf16>, vector<32x32xbf16>, vector<8x32xf32> -> vector<8x32xf32>
    %c0_37 = arith.constant 0 : index
    %c0_38 = arith.constant 0 : index
    %109 = vector.load %arg5[%c0_37, %c0_38] : memref<1x32xf32, #tpu.memory_space<vmem>>, vector<1x32xf32>
    %110 = vector.broadcast %109 : vector<1x32xf32> to vector<8x32xf32>
    %111 = arith.addf %108, %110 : vector<8x32xf32>
    %112 = arith.addf %1, %111 : vector<8x32xf32>
    %c0_39 = arith.constant 0 : index
    %c0_40 = arith.constant 0 : index
    %113 = vector.load %arg6[%c0_39, %c0_40] : memref<1x32xf32, #tpu.memory_space<vmem>>, vector<1x32xf32>
    %c0_41 = arith.constant 0 : index
    %c0_42 = arith.constant 0 : index
    %114 = vector.load %arg7[%c0_41, %c0_42] : memref<1x32xf32, #tpu.memory_space<vmem>>, vector<1x32xf32>
    %cst_43 = arith.constant dense<0.000000e+00> : vector<8xf32>
    %115 = vector.multi_reduction <add>, %112, %cst_43 [1] : vector<8x32xf32> to vector<8xf32>
    %116 = vector.shape_cast %115 : vector<8xf32> to vector<8x1xf32>
    %cst_44 = arith.constant 3.200000e+01 : f32
    %117 = vector.broadcast %cst_44 : f32 to vector<8x1xf32>
    %118 = arith.divf %116, %117 : vector<8x1xf32>
    %119 = vector.broadcast %118 : vector<8x1xf32> to vector<8x32xf32>
    %120 = arith.subf %112, %119 : vector<8x32xf32>
    %121 = arith.mulf %120, %120 : vector<8x32xf32>
    %cst_45 = arith.constant dense<0.000000e+00> : vector<8xf32>
    %122 = vector.multi_reduction <add>, %121, %cst_45 [1] : vector<8x32xf32> to vector<8xf32>
    %123 = vector.shape_cast %122 : vector<8xf32> to vector<8x1xf32>
    %cst_46 = arith.constant 3.200000e+01 : f32
    %124 = vector.broadcast %cst_46 : f32 to vector<8x1xf32>
    %125 = arith.divf %123, %124 : vector<8x1xf32>
    %126 = vector.broadcast %118 : vector<8x1xf32> to vector<8x32xf32>
    %127 = arith.subf %112, %126 : vector<8x32xf32>
    %cst_47 = arith.constant 9.99999974E-6 : f32
    %128 = vector.broadcast %cst_47 : f32 to vector<8x1xf32>
    %129 = arith.addf %125, %128 : vector<8x1xf32>
    %130 = math.rsqrt %129 : vector<8x1xf32>
    %131 = vector.broadcast %130 : vector<8x1xf32> to vector<8x32xf32>
    %132 = arith.mulf %127, %131 : vector<8x32xf32>
    %133 = vector.broadcast %113 : vector<1x32xf32> to vector<8x32xf32>
    %134 = arith.mulf %132, %133 : vector<8x32xf32>
    %135 = vector.broadcast %114 : vector<1x32xf32> to vector<8x32xf32>
    %136 = arith.addf %134, %135 : vector<8x32xf32>
    %c0_48 = arith.constant 0 : index
    %c0_49 = arith.constant 0 : index
    %c0_50 = arith.constant 0 : index
    %137 = vector.load %arg9[%c0_48, %c0_49, %c0_50] : memref<1x8x32xf32, #tpu.memory_space<vmem>>, vector<1x8x32xf32>
    %138 = vector.shape_cast %137 : vector<1x8x32xf32> to vector<8x32xf32>
    %139 = vector.shape_cast %136 : vector<8x32xf32> to vector<1x8x32xf32>
    tpu.vector_store %arg9[%c0_48, %c0_49, %c0_50], %139 {strides = array<i32>} : memref<1x8x32xf32, #tpu.memory_space<vmem>>, vector<1x8x32xf32>,
    return
  }
  func.func @transform_0(%arg0: i32) -> (i32, i32, i32) {
    %c0_i32 = arith.constant 0 : i32
    %c0_i32_0 = arith.constant 0 : i32
    %c0_i32_1 = arith.constant 0 : i32
    return %arg0, %c0_i32, %c0_i32_0 : i32, i32, i32
  }
  func.func @transform_1(%arg0: i32) -> (i32, i32) {
    %c0_i32 = arith.constant 0 : i32
    %c0_i32_0 = arith.constant 0 : i32
    %c0_i32_1 = arith.constant 0 : i32
    return %c0_i32, %c0_i32_0 : i32, i32
  }
  func.func @transform_2(%arg0: i32) -> (i32, i32) {
    %c0_i32 = arith.constant 0 : i32
    %c0_i32_0 = arith.constant 0 : i32
    %c0_i32_1 = arith.constant 0 : i32
    return %c0_i32, %c0_i32_0 : i32, i32
  }
  func.func @transform_3(%arg0: i32) -> (i32, i32) {
    %c0_i32 = arith.constant 0 : i32
    %c0_i32_0 = arith.constant 0 : i32
    %c0_i32_1 = arith.constant 0 : i32
    return %c0_i32, %c0_i32_0 : i32, i32
  }
  func.func @transform_4(%arg0: i32) -> (i32, i32) {
    %c0_i32 = arith.constant 0 : i32
    %c0_i32_0 = arith.constant 0 : i32
    %c0_i32_1 = arith.constant 0 : i32
    return %c0_i32, %c0_i32_0 : i32, i32
  }
  func.func @transform_5(%arg0: i32) -> (i32, i32) {
    %c0_i32 = arith.constant 0 : i32
    %c0_i32_0 = arith.constant 0 : i32
    %c0_i32_1 = arith.constant 0 : i32
    return %c0_i32, %c0_i32_0 : i32, i32
  }
  func.func @transform_6(%arg0: i32) -> (i32, i32) {
    %c0_i32 = arith.constant 0 : i32
    %c0_i32_0 = arith.constant 0 : i32
    %c0_i32_1 = arith.constant 0 : i32
    return %c0_i32, %c0_i32_0 : i32, i32
  }
  func.func @transform_7(%arg0: i32) -> (i32, i32) {
    %c0_i32 = arith.constant 0 : i32
    %c0_i32_0 = arith.constant 0 : i32
    %c0_i32_1 = arith.constant 0 : i32
    return %c0_i32, %c0_i32_0 : i32, i32
  }
  func.func @transform_8(%arg0: i32) -> (i32, i32, i32) {
    %c0_i32 = arith.constant 0 : i32
    %c0_i32_0 = arith.constant 0 : i32
    %c0_i32_1 = arith.constant 0 : i32
    return %arg0, %c0_i32, %c0_i32_0 : i32, i32, i32
  }
}

module attributes {stable_mosaic.version = 11 : i64} {
  func.func @_norm_generator_kernel(%arg0: i32, %arg1: memref<1x8x32xf32, #tpu.memory_space<vmem>>, %arg2: memref<1x32xf32, #tpu.memory_space<vmem>>, %arg3: memref<1x32xf32, #tpu.memory_space<vmem>>, %arg4: memref<32x128xf32, #tpu.memory_space<vmem>>, %arg5: memref<1x128xf32, #tpu.memory_space<vmem>>, %arg6: memref<1x8x128xf32, #tpu.memory_space<vmem>>) attributes {dimension_semantics = [#tpu.dimension_semantics<parallel>], iteration_bounds = array<i64: 2>, scalar_prefetch = 0 : i64, scratch_operands = 0 : i64, tpu.core_type = #tpu.core_type<tc>, window_params = [{transform_indices = @transform_0, window_bounds = array<i64: 1, 8, 32>}, {pipeline_mode = #tpu.pipeline_mode<synchronous>, transform_indices = @transform_1, window_bounds = array<i64: 1, 32>}, {pipeline_mode = #tpu.pipeline_mode<synchronous>, transform_indices = @transform_2, window_bounds = array<i64: 1, 32>}, {pipeline_mode = #tpu.pipeline_mode<synchronous>, transform_indices = @transform_3, window_bounds = array<i64: 32, 128>}, {pipeline_mode = #tpu.pipeline_mode<synchronous>, transform_indices = @transform_4, window_bounds = array<i64: 1, 128>}, {transform_indices = @transform_5, window_bounds = array<i64: 1, 8, 128>}]} {
    %c0 = arith.constant 0 : index
    %c0_0 = arith.constant 0 : index
    %c0_1 = arith.constant 0 : index
    %0 = vector.load %arg1[%c0, %c0_0, %c0_1] : memref<1x8x32xf32, #tpu.memory_space<vmem>>, vector<1x8x32xf32>
    %1 = vector.shape_cast %0 : vector<1x8x32xf32> to vector<8x32xf32>
    %c0_2 = arith.constant 0 : index
    %c0_3 = arith.constant 0 : index
    %2 = vector.load %arg2[%c0_2, %c0_3] : memref<1x32xf32, #tpu.memory_space<vmem>>, vector<1x32xf32>
    %c0_4 = arith.constant 0 : index
    %c0_5 = arith.constant 0 : index
    %3 = vector.load %arg3[%c0_4, %c0_5] : memref<1x32xf32, #tpu.memory_space<vmem>>, vector<1x32xf32>
    %cst = arith.constant dense<0.000000e+00> : vector<8xf32>
    %4 = vector.multi_reduction <add>, %1, %cst [1] : vector<8x32xf32> to vector<8xf32>
    %5 = vector.shape_cast %4 : vector<8xf32> to vector<8x1xf32>
    %cst_6 = arith.constant 3.200000e+01 : f32
    %6 = vector.broadcast %cst_6 : f32 to vector<8x1xf32>
    %7 = arith.divf %5, %6 : vector<8x1xf32>
    %8 = vector.broadcast %7 : vector<8x1xf32> to vector<8x32xf32>
    %9 = arith.subf %1, %8 : vector<8x32xf32>
    %10 = arith.mulf %9, %9 : vector<8x32xf32>
    %cst_7 = arith.constant dense<0.000000e+00> : vector<8xf32>
    %11 = vector.multi_reduction <add>, %10, %cst_7 [1] : vector<8x32xf32> to vector<8xf32>
    %12 = vector.shape_cast %11 : vector<8xf32> to vector<8x1xf32>
    %cst_8 = arith.constant 3.200000e+01 : f32
    %13 = vector.broadcast %cst_8 : f32 to vector<8x1xf32>
    %14 = arith.divf %12, %13 : vector<8x1xf32>
    %15 = vector.broadcast %7 : vector<8x1xf32> to vector<8x32xf32>
    %16 = arith.subf %1, %15 : vector<8x32xf32>
    %cst_9 = arith.constant 9.99999974E-6 : f32
    %17 = vector.broadcast %cst_9 : f32 to vector<8x1xf32>
    %18 = arith.addf %14, %17 : vector<8x1xf32>
    %19 = math.rsqrt %18 : vector<8x1xf32>
    %20 = vector.broadcast %19 : vector<8x1xf32> to vector<8x32xf32>
    %21 = arith.mulf %16, %20 : vector<8x32xf32>
    %22 = vector.broadcast %2 : vector<1x32xf32> to vector<8x32xf32>
    %23 = arith.mulf %21, %22 : vector<8x32xf32>
    %24 = vector.broadcast %3 : vector<1x32xf32> to vector<8x32xf32>
    %25 = arith.addf %23, %24 : vector<8x32xf32>
    %c0_10 = arith.constant 0 : index
    %c0_11 = arith.constant 0 : index
    %26 = vector.load %arg4[%c0_10, %c0_11] : memref<32x128xf32, #tpu.memory_space<vmem>>, vector<32x128xf32>
    %27 = arith.truncf %25 : vector<8x32xf32> to vector<8x32xbf16>
    %28 = arith.truncf %26 : vector<32x128xf32> to vector<32x128xbf16>
    %cst_12 = arith.constant dense<0.000000e+00> : vector<8x128xf32>
    %29 = tpu.matmul %27, %28, %cst_12 {dimension_numbers = #tpu.dot_dimension_numbers<[1], [0], [0], [1], [0, 0, 1, 1], [], []>} : vector<8x32xbf16>, vector<32x128xbf16>, vector<8x128xf32> -> vector<8x128xf32>
    %c0_13 = arith.constant 0 : index
    %c0_14 = arith.constant 0 : index
    %30 = vector.load %arg5[%c0_13, %c0_14] : memref<1x128xf32, #tpu.memory_space<vmem>>, vector<1x128xf32>
    %31 = vector.broadcast %30 : vector<1x128xf32> to vector<8x128xf32>
    %32 = arith.addf %29, %31 : vector<8x128xf32>
    %c0_15 = arith.constant 0 : index
    %c0_16 = arith.constant 0 : index
    %c0_17 = arith.constant 0 : index
    %33 = vector.load %arg6[%c0_15, %c0_16, %c0_17] : memref<1x8x128xf32, #tpu.memory_space<vmem>>, vector<1x8x128xf32>
    %34 = vector.shape_cast %33 : vector<1x8x128xf32> to vector<8x128xf32>
    %35 = vector.shape_cast %32 : vector<8x128xf32> to vector<1x8x128xf32>
    tpu.vector_store %arg6[%c0_15, %c0_16, %c0_17], %35 {strides = array<i32>} : memref<1x8x128xf32, #tpu.memory_space<vmem>>, vector<1x8x128xf32>,
    return
  }
  func.func @transform_0(%arg0: i32) -> (i32, i32, i32) {
    %c0_i32 = arith.constant 0 : i32
    %c0_i32_0 = arith.constant 0 : i32
    %c0_i32_1 = arith.constant 0 : i32
    return %arg0, %c0_i32, %c0_i32_0 : i32, i32, i32
  }
  func.func @transform_1(%arg0: i32) -> (i32, i32) {
    %c0_i32 = arith.constant 0 : i32
    %c0_i32_0 = arith.constant 0 : i32
    %c0_i32_1 = arith.constant 0 : i32
    return %c0_i32, %c0_i32_0 : i32, i32
  }
  func.func @transform_2(%arg0: i32) -> (i32, i32) {
    %c0_i32 = arith.constant 0 : i32
    %c0_i32_0 = arith.constant 0 : i32
    %c0_i32_1 = arith.constant 0 : i32
    return %c0_i32, %c0_i32_0 : i32, i32
  }
  func.func @transform_3(%arg0: i32) -> (i32, i32) {
    %c0_i32 = arith.constant 0 : i32
    %c0_i32_0 = arith.constant 0 : i32
    %c0_i32_1 = arith.constant 0 : i32
    return %c0_i32, %c0_i32_0 : i32, i32
  }
  func.func @transform_4(%arg0: i32) -> (i32, i32) {
    %c0_i32 = arith.constant 0 : i32
    %c0_i32_0 = arith.constant 0 : i32
    %c0_i32_1 = arith.constant 0 : i32
    return %c0_i32, %c0_i32_0 : i32, i32
  }
  func.func @transform_5(%arg0: i32) -> (i32, i32, i32) {
    %c0_i32 = arith.constant 0 : i32
    %c0_i32_0 = arith.constant 0 : i32
    %c0_i32_1 = arith.constant 0 : i32
    return %arg0, %c0_i32, %c0_i32_0 : i32, i32, i32
  }
}

module attributes {stable_mosaic.version = 11 : i64} {
  func.func @_mha_block_kernel(%arg0: i32, %arg1: memref<1x8x32xf32, #tpu.memory_space<vmem>>, %arg2: memref<1x8x32xf32, #tpu.memory_space<vmem>>, %arg3: memref<32x32xf32, #tpu.memory_space<vmem>>, %arg4: memref<1x32xf32, #tpu.memory_space<vmem>>, %arg5: memref<32x64xf32, #tpu.memory_space<vmem>>, %arg6: memref<1x64xf32, #tpu.memory_space<vmem>>, %arg7: memref<32x32xf32, #tpu.memory_space<vmem>>, %arg8: memref<1x32xf32, #tpu.memory_space<vmem>>, %arg9: memref<1x32xf32, #tpu.memory_space<vmem>>, %arg10: memref<1x32xf32, #tpu.memory_space<vmem>>, %arg11: memref<1x8x32xf32, #tpu.memory_space<vmem>>) attributes {dimension_semantics = [#tpu.dimension_semantics<parallel>], iteration_bounds = array<i64: 2>, scalar_prefetch = 0 : i64, scratch_operands = 0 : i64, tpu.core_type = #tpu.core_type<tc>, window_params = [{transform_indices = @transform_0, window_bounds = array<i64: 1, 8, 32>}, {transform_indices = @transform_1, window_bounds = array<i64: 1, 8, 32>}, {pipeline_mode = #tpu.pipeline_mode<synchronous>, transform_indices = @transform_2, window_bounds = array<i64: 32, 32>}, {pipeline_mode = #tpu.pipeline_mode<synchronous>, transform_indices = @transform_3, window_bounds = array<i64: 1, 32>}, {pipeline_mode = #tpu.pipeline_mode<synchronous>, transform_indices = @transform_4, window_bounds = array<i64: 32, 64>}, {pipeline_mode = #tpu.pipeline_mode<synchronous>, transform_indices = @transform_5, window_bounds = array<i64: 1, 64>}, {pipeline_mode = #tpu.pipeline_mode<synchronous>, transform_indices = @transform_6, window_bounds = array<i64: 32, 32>}, {pipeline_mode = #tpu.pipeline_mode<synchronous>, transform_indices = @transform_7, window_bounds = array<i64: 1, 32>}, {pipeline_mode = #tpu.pipeline_mode<synchronous>, transform_indices = @transform_8, window_bounds = array<i64: 1, 32>}, {pipeline_mode = #tpu.pipeline_mode<synchronous>, transform_indices = @transform_9, window_bounds = array<i64: 1, 32>}, {transform_indices = @transform_10, window_bounds = array<i64: 1, 8, 32>}]} {
    %c0 = arith.constant 0 : index
    %c0_0 = arith.constant 0 : index
    %c0_1 = arith.constant 0 : index
    %0 = vector.load %arg1[%c0, %c0_0, %c0_1] : memref<1x8x32xf32, #tpu.memory_space<vmem>>, vector<1x8x32xf32>
    %1 = vector.shape_cast %0 : vector<1x8x32xf32> to vector<8x32xf32>
    %c0_2 = arith.constant 0 : index
    %c0_3 = arith.constant 0 : index
    %c0_4 = arith.constant 0 : index
    %2 = vector.load %arg2[%c0_2, %c0_3, %c0_4] : memref<1x8x32xf32, #tpu.memory_space<vmem>>, vector<1x8x32xf32>
    %3 = vector.shape_cast %2 : vector<1x8x32xf32> to vector<8x32xf32>
    %c0_5 = arith.constant 0 : index
    %c0_6 = arith.constant 0 : index
    %4 = vector.load %arg3[%c0_5, %c0_6] : memref<32x32xf32, #tpu.memory_space<vmem>>, vector<32x32xf32>
    %5 = arith.truncf %1 : vector<8x32xf32> to vector<8x32xbf16>
    %6 = arith.truncf %4 : vector<32x32xf32> to vector<32x32xbf16>
    %cst = arith.constant dense<0.000000e+00> : vector<8x32xf32>
    %7 = tpu.matmul %5, %6, %cst {dimension_numbers = #tpu.dot_dimension_numbers<[1], [0], [0], [1], [0, 0, 1, 1], [], []>} : vector<8x32xbf16>, vector<32x32xbf16>, vector<8x32xf32> -> vector<8x32xf32>
    %c0_7 = arith.constant 0 : index
    %c0_8 = arith.constant 0 : index
    %8 = vector.load %arg4[%c0_7, %c0_8] : memref<1x32xf32, #tpu.memory_space<vmem>>, vector<1x32xf32>
    %9 = vector.broadcast %8 : vector<1x32xf32> to vector<8x32xf32>
    %10 = arith.addf %7, %9 : vector<8x32xf32>
    %c0_9 = arith.constant 0 : index
    %c0_10 = arith.constant 0 : index
    %11 = vector.load %arg5[%c0_9, %c0_10] : memref<32x64xf32, #tpu.memory_space<vmem>>, vector<32x64xf32>
    %12 = arith.truncf %3 : vector<8x32xf32> to vector<8x32xbf16>
    %13 = arith.truncf %11 : vector<32x64xf32> to vector<32x64xbf16>
    %cst_11 = arith.constant dense<0.000000e+00> : vector<8x64xf32>
    %14 = tpu.matmul %12, %13, %cst_11 {dimension_numbers = #tpu.dot_dimension_numbers<[1], [0], [0], [1], [0, 0, 1, 1], [], []>} : vector<8x32xbf16>, vector<32x64xbf16>, vector<8x64xf32> -> vector<8x64xf32>
    %c0_12 = arith.constant 0 : index
    %c0_13 = arith.constant 0 : index
    %15 = vector.load %arg6[%c0_12, %c0_13] : memref<1x64xf32, #tpu.memory_space<vmem>>, vector<1x64xf32>
    %16 = vector.broadcast %15 : vector<1x64xf32> to vector<8x64xf32>
    %17 = arith.addf %14, %16 : vector<8x64xf32>
    %18 = vector.extract_strided_slice %17 {offsets = [0, 0], sizes = [8, 32], strides = [1, 1]} : vector<8x64xf32> to vector<8x32xf32>
    %19 = vector.extract_strided_slice %17 {offsets = [0, 32], sizes = [8, 32], strides = [1, 1]} : vector<8x64xf32> to vector<8x32xf32>
    %20 = vector.extract_strided_slice %10 {offsets = [0, 0], sizes = [8, 8], strides = [1, 1]} : vector<8x32xf32> to vector<8x8xf32>
    %21 = vector.extract_strided_slice %18 {offsets = [0, 0], sizes = [8, 8], strides = [1, 1]} : vector<8x32xf32> to vector<8x8xf32>
    %22 = vector.extract_strided_slice %19 {offsets = [0, 0], sizes = [8, 8], strides = [1, 1]} : vector<8x32xf32> to vector<8x8xf32>
    %23 = arith.truncf %20 : vector<8x8xf32> to vector<8x8xbf16>
    %24 = arith.truncf %21 : vector<8x8xf32> to vector<8x8xbf16>
    %cst_14 = arith.constant dense<0.000000e+00> : vector<8x8xf32>
    %25 = tpu.matmul %23, %24, %cst_14 {dimension_numbers = #tpu.dot_dimension_numbers<[1], [1], [0], [0], [0, 0, 1, 0], [], []>} : vector<8x8xbf16>, vector<8x8xbf16>, vector<8x8xf32> -> vector<8x8xf32>
    %cst_15 = arith.constant 0.353553385 : f32
    %26 = vector.broadcast %cst_15 : f32 to vector<8x8xf32>
    %27 = arith.mulf %25, %26 : vector<8x8xf32>
    %cst_16 = arith.constant dense<0xFF800000> : vector<8xf32>
    %28 = vector.multi_reduction <maximumf>, %27, %cst_16 [1] : vector<8x8xf32> to vector<8xf32>
    %29 = vector.shape_cast %28 : vector<8xf32> to vector<8x1xf32>
    %30 = vector.broadcast %29 : vector<8x1xf32> to vector<8x8xf32>
    %31 = arith.subf %27, %30 : vector<8x8xf32>
    %32 = math.exp %31 : vector<8x8xf32>
    %cst_17 = arith.constant dense<0.000000e+00> : vector<8xf32>
    %33 = vector.multi_reduction <add>, %32, %cst_17 [1] : vector<8x8xf32> to vector<8xf32>
    %34 = vector.shape_cast %33 : vector<8xf32> to vector<8x1xf32>
    %35 = tpu.reciprocal %34 {approx = true} : vector<8x1xf32> -> vector<8x1xf32>
    %36 = vector.broadcast %35 : vector<8x1xf32> to vector<8x8xf32>
    %37 = arith.mulf %32, %36 : vector<8x8xf32>
    %38 = arith.truncf %37 : vector<8x8xf32> to vector<8x8xbf16>
    %39 = arith.truncf %22 : vector<8x8xf32> to vector<8x8xbf16>
    %cst_18 = arith.constant dense<0.000000e+00> : vector<8x8xf32>
    %40 = tpu.matmul %38, %39, %cst_18 {dimension_numbers = #tpu.dot_dimension_numbers<[1], [0], [0], [1], [0, 0, 1, 1], [], []>} : vector<8x8xbf16>, vector<8x8xbf16>, vector<8x8xf32> -> vector<8x8xf32>
    %41 = vector.extract_strided_slice %10 {offsets = [0, 8], sizes = [8, 8], strides = [1, 1]} : vector<8x32xf32> to vector<8x8xf32>
    %42 = vector.extract_strided_slice %18 {offsets = [0, 8], sizes = [8, 8], strides = [1, 1]} : vector<8x32xf32> to vector<8x8xf32>
    %43 = vector.extract_strided_slice %19 {offsets = [0, 8], sizes = [8, 8], strides = [1, 1]} : vector<8x32xf32> to vector<8x8xf32>
    %44 = arith.truncf %41 : vector<8x8xf32> to vector<8x8xbf16>
    %45 = arith.truncf %42 : vector<8x8xf32> to vector<8x8xbf16>
    %cst_19 = arith.constant dense<0.000000e+00> : vector<8x8xf32>
    %46 = tpu.matmul %44, %45, %cst_19 {dimension_numbers = #tpu.dot_dimension_numbers<[1], [1], [0], [0], [0, 0, 1, 0], [], []>} : vector<8x8xbf16>, vector<8x8xbf16>, vector<8x8xf32> -> vector<8x8xf32>
    %cst_20 = arith.constant 0.353553385 : f32
    %47 = vector.broadcast %cst_20 : f32 to vector<8x8xf32>
    %48 = arith.mulf %46, %47 : vector<8x8xf32>
    %cst_21 = arith.constant dense<0xFF800000> : vector<8xf32>
    %49 = vector.multi_reduction <maximumf>, %48, %cst_21 [1] : vector<8x8xf32> to vector<8xf32>
    %50 = vector.shape_cast %49 : vector<8xf32> to vector<8x1xf32>
    %51 = vector.broadcast %50 : vector<8x1xf32> to vector<8x8xf32>
    %52 = arith.subf %48, %51 : vector<8x8xf32>
    %53 = math.exp %52 : vector<8x8xf32>
    %cst_22 = arith.constant dense<0.000000e+00> : vector<8xf32>
    %54 = vector.multi_reduction <add>, %53, %cst_22 [1] : vector<8x8xf32> to vector<8xf32>
    %55 = vector.shape_cast %54 : vector<8xf32> to vector<8x1xf32>
    %56 = tpu.reciprocal %55 {approx = true} : vector<8x1xf32> -> vector<8x1xf32>
    %57 = vector.broadcast %56 : vector<8x1xf32> to vector<8x8xf32>
    %58 = arith.mulf %53, %57 : vector<8x8xf32>
    %59 = arith.truncf %58 : vector<8x8xf32> to vector<8x8xbf16>
    %60 = arith.truncf %43 : vector<8x8xf32> to vector<8x8xbf16>
    %cst_23 = arith.constant dense<0.000000e+00> : vector<8x8xf32>
    %61 = tpu.matmul %59, %60, %cst_23 {dimension_numbers = #tpu.dot_dimension_numbers<[1], [0], [0], [1], [0, 0, 1, 1], [], []>} : vector<8x8xbf16>, vector<8x8xbf16>, vector<8x8xf32> -> vector<8x8xf32>
    %62 = vector.extract_strided_slice %10 {offsets = [0, 16], sizes = [8, 8], strides = [1, 1]} : vector<8x32xf32> to vector<8x8xf32>
    %63 = vector.extract_strided_slice %18 {offsets = [0, 16], sizes = [8, 8], strides = [1, 1]} : vector<8x32xf32> to vector<8x8xf32>
    %64 = vector.extract_strided_slice %19 {offsets = [0, 16], sizes = [8, 8], strides = [1, 1]} : vector<8x32xf32> to vector<8x8xf32>
    %65 = arith.truncf %62 : vector<8x8xf32> to vector<8x8xbf16>
    %66 = arith.truncf %63 : vector<8x8xf32> to vector<8x8xbf16>
    %cst_24 = arith.constant dense<0.000000e+00> : vector<8x8xf32>
    %67 = tpu.matmul %65, %66, %cst_24 {dimension_numbers = #tpu.dot_dimension_numbers<[1], [1], [0], [0], [0, 0, 1, 0], [], []>} : vector<8x8xbf16>, vector<8x8xbf16>, vector<8x8xf32> -> vector<8x8xf32>
    %cst_25 = arith.constant 0.353553385 : f32
    %68 = vector.broadcast %cst_25 : f32 to vector<8x8xf32>
    %69 = arith.mulf %67, %68 : vector<8x8xf32>
    %cst_26 = arith.constant dense<0xFF800000> : vector<8xf32>
    %70 = vector.multi_reduction <maximumf>, %69, %cst_26 [1] : vector<8x8xf32> to vector<8xf32>
    %71 = vector.shape_cast %70 : vector<8xf32> to vector<8x1xf32>
    %72 = vector.broadcast %71 : vector<8x1xf32> to vector<8x8xf32>
    %73 = arith.subf %69, %72 : vector<8x8xf32>
    %74 = math.exp %73 : vector<8x8xf32>
    %cst_27 = arith.constant dense<0.000000e+00> : vector<8xf32>
    %75 = vector.multi_reduction <add>, %74, %cst_27 [1] : vector<8x8xf32> to vector<8xf32>
    %76 = vector.shape_cast %75 : vector<8xf32> to vector<8x1xf32>
    %77 = tpu.reciprocal %76 {approx = true} : vector<8x1xf32> -> vector<8x1xf32>
    %78 = vector.broadcast %77 : vector<8x1xf32> to vector<8x8xf32>
    %79 = arith.mulf %74, %78 : vector<8x8xf32>
    %80 = arith.truncf %79 : vector<8x8xf32> to vector<8x8xbf16>
    %81 = arith.truncf %64 : vector<8x8xf32> to vector<8x8xbf16>
    %cst_28 = arith.constant dense<0.000000e+00> : vector<8x8xf32>
    %82 = tpu.matmul %80, %81, %cst_28 {dimension_numbers = #tpu.dot_dimension_numbers<[1], [0], [0], [1], [0, 0, 1, 1], [], []>} : vector<8x8xbf16>, vector<8x8xbf16>, vector<8x8xf32> -> vector<8x8xf32>
    %83 = vector.extract_strided_slice %10 {offsets = [0, 24], sizes = [8, 8], strides = [1, 1]} : vector<8x32xf32> to vector<8x8xf32>
    %84 = vector.extract_strided_slice %18 {offsets = [0, 24], sizes = [8, 8], strides = [1, 1]} : vector<8x32xf32> to vector<8x8xf32>
    %85 = vector.extract_strided_slice %19 {offsets = [0, 24], sizes = [8, 8], strides = [1, 1]} : vector<8x32xf32> to vector<8x8xf32>
    %86 = arith.truncf %83 : vector<8x8xf32> to vector<8x8xbf16>
    %87 = arith.truncf %84 : vector<8x8xf32> to vector<8x8xbf16>
    %cst_29 = arith.constant dense<0.000000e+00> : vector<8x8xf32>
    %88 = tpu.matmul %86, %87, %cst_29 {dimension_numbers = #tpu.dot_dimension_numbers<[1], [1], [0], [0], [0, 0, 1, 0], [], []>} : vector<8x8xbf16>, vector<8x8xbf16>, vector<8x8xf32> -> vector<8x8xf32>
    %cst_30 = arith.constant 0.353553385 : f32
    %89 = vector.broadcast %cst_30 : f32 to vector<8x8xf32>
    %90 = arith.mulf %88, %89 : vector<8x8xf32>
    %cst_31 = arith.constant dense<0xFF800000> : vector<8xf32>
    %91 = vector.multi_reduction <maximumf>, %90, %cst_31 [1] : vector<8x8xf32> to vector<8xf32>
    %92 = vector.shape_cast %91 : vector<8xf32> to vector<8x1xf32>
    %93 = vector.broadcast %92 : vector<8x1xf32> to vector<8x8xf32>
    %94 = arith.subf %90, %93 : vector<8x8xf32>
    %95 = math.exp %94 : vector<8x8xf32>
    %cst_32 = arith.constant dense<0.000000e+00> : vector<8xf32>
    %96 = vector.multi_reduction <add>, %95, %cst_32 [1] : vector<8x8xf32> to vector<8xf32>
    %97 = vector.shape_cast %96 : vector<8xf32> to vector<8x1xf32>
    %98 = tpu.reciprocal %97 {approx = true} : vector<8x1xf32> -> vector<8x1xf32>
    %99 = vector.broadcast %98 : vector<8x1xf32> to vector<8x8xf32>
    %100 = arith.mulf %95, %99 : vector<8x8xf32>
    %101 = arith.truncf %100 : vector<8x8xf32> to vector<8x8xbf16>
    %102 = arith.truncf %85 : vector<8x8xf32> to vector<8x8xbf16>
    %cst_33 = arith.constant dense<0.000000e+00> : vector<8x8xf32>
    %103 = tpu.matmul %101, %102, %cst_33 {dimension_numbers = #tpu.dot_dimension_numbers<[1], [0], [0], [1], [0, 0, 1, 1], [], []>} : vector<8x8xbf16>, vector<8x8xbf16>, vector<8x8xf32> -> vector<8x8xf32>
    %104 = tpu.concatenate %40, %61, %82, %103 in 1 : vector<8x8xf32>, vector<8x8xf32>, vector<8x8xf32>, vector<8x8xf32> -> vector<8x32xf32>
    %c0_34 = arith.constant 0 : index
    %c0_35 = arith.constant 0 : index
    %105 = vector.load %arg7[%c0_34, %c0_35] : memref<32x32xf32, #tpu.memory_space<vmem>>, vector<32x32xf32>
    %106 = arith.truncf %104 : vector<8x32xf32> to vector<8x32xbf16>
    %107 = arith.truncf %105 : vector<32x32xf32> to vector<32x32xbf16>
    %cst_36 = arith.constant dense<0.000000e+00> : vector<8x32xf32>
    %108 = tpu.matmul %106, %107, %cst_36 {dimension_numbers = #tpu.dot_dimension_numbers<[1], [0], [0], [1], [0, 0, 1, 1], [], []>} : vector<8x32xbf16>, vector<32x32xbf16>, vector<8x32xf32> -> vector<8x32xf32>
    %c0_37 = arith.constant 0 : index
    %c0_38 = arith.constant 0 : index
    %109 = vector.load %arg8[%c0_37, %c0_38] : memref<1x32xf32, #tpu.memory_space<vmem>>, vector<1x32xf32>
    %110 = vector.broadcast %109 : vector<1x32xf32> to vector<8x32xf32>
    %111 = arith.addf %108, %110 : vector<8x32xf32>
    %112 = arith.addf %1, %111 : vector<8x32xf32>
    %c0_39 = arith.constant 0 : index
    %c0_40 = arith.constant 0 : index
    %113 = vector.load %arg9[%c0_39, %c0_40] : memref<1x32xf32, #tpu.memory_space<vmem>>, vector<1x32xf32>
    %c0_41 = arith.constant 0 : index
    %c0_42 = arith.constant 0 : index
    %114 = vector.load %arg10[%c0_41, %c0_42] : memref<1x32xf32, #tpu.memory_space<vmem>>, vector<1x32xf32>
    %cst_43 = arith.constant dense<0.000000e+00> : vector<8xf32>
    %115 = vector.multi_reduction <add>, %112, %cst_43 [1] : vector<8x32xf32> to vector<8xf32>
    %116 = vector.shape_cast %115 : vector<8xf32> to vector<8x1xf32>
    %cst_44 = arith.constant 3.200000e+01 : f32
    %117 = vector.broadcast %cst_44 : f32 to vector<8x1xf32>
    %118 = arith.divf %116, %117 : vector<8x1xf32>
    %119 = vector.broadcast %118 : vector<8x1xf32> to vector<8x32xf32>
    %120 = arith.subf %112, %119 : vector<8x32xf32>
    %121 = arith.mulf %120, %120 : vector<8x32xf32>
    %cst_45 = arith.constant dense<0.000000e+00> : vector<8xf32>
    %122 = vector.multi_reduction <add>, %121, %cst_45 [1] : vector<8x32xf32> to vector<8xf32>
    %123 = vector.shape_cast %122 : vector<8xf32> to vector<8x1xf32>
    %cst_46 = arith.constant 3.200000e+01 : f32
    %124 = vector.broadcast %cst_46 : f32 to vector<8x1xf32>
    %125 = arith.divf %123, %124 : vector<8x1xf32>
    %126 = vector.broadcast %118 : vector<8x1xf32> to vector<8x32xf32>
    %127 = arith.subf %112, %126 : vector<8x32xf32>
    %cst_47 = arith.constant 9.99999974E-6 : f32
    %128 = vector.broadcast %cst_47 : f32 to vector<8x1xf32>
    %129 = arith.addf %125, %128 : vector<8x1xf32>
    %130 = math.rsqrt %129 : vector<8x1xf32>
    %131 = vector.broadcast %130 : vector<8x1xf32> to vector<8x32xf32>
    %132 = arith.mulf %127, %131 : vector<8x32xf32>
    %133 = vector.broadcast %113 : vector<1x32xf32> to vector<8x32xf32>
    %134 = arith.mulf %132, %133 : vector<8x32xf32>
    %135 = vector.broadcast %114 : vector<1x32xf32> to vector<8x32xf32>
    %136 = arith.addf %134, %135 : vector<8x32xf32>
    %c0_48 = arith.constant 0 : index
    %c0_49 = arith.constant 0 : index
    %c0_50 = arith.constant 0 : index
    %137 = vector.load %arg11[%c0_48, %c0_49, %c0_50] : memref<1x8x32xf32, #tpu.memory_space<vmem>>, vector<1x8x32xf32>
    %138 = vector.shape_cast %137 : vector<1x8x32xf32> to vector<8x32xf32>
    %139 = vector.shape_cast %136 : vector<8x32xf32> to vector<1x8x32xf32>
    tpu.vector_store %arg11[%c0_48, %c0_49, %c0_50], %139 {strides = array<i32>} : memref<1x8x32xf32, #tpu.memory_space<vmem>>, vector<1x8x32xf32>,
    return
  }
  func.func @transform_0(%arg0: i32) -> (i32, i32, i32) {
    %c0_i32 = arith.constant 0 : i32
    %c0_i32_0 = arith.constant 0 : i32
    %c0_i32_1 = arith.constant 0 : i32
    return %arg0, %c0_i32, %c0_i32_0 : i32, i32, i32
  }
  func.func @transform_1(%arg0: i32) -> (i32, i32, i32) {
    %c0_i32 = arith.constant 0 : i32
    %c0_i32_0 = arith.constant 0 : i32
    %c0_i32_1 = arith.constant 0 : i32
    return %arg0, %c0_i32, %c0_i32_0 : i32, i32, i32
  }
  func.func @transform_2(%arg0: i32) -> (i32, i32) {
    %c0_i32 = arith.constant 0 : i32
    %c0_i32_0 = arith.constant 0 : i32
    %c0_i32_1 = arith.constant 0 : i32
    return %c0_i32, %c0_i32_0 : i32, i32
  }
  func.func @transform_3(%arg0: i32) -> (i32, i32) {
    %c0_i32 = arith.constant 0 : i32
    %c0_i32_0 = arith.constant 0 : i32
    %c0_i32_1 = arith.constant 0 : i32
    return %c0_i32, %c0_i32_0 : i32, i32
  }
  func.func @transform_4(%arg0: i32) -> (i32, i32) {
    %c0_i32 = arith.constant 0 : i32
    %c0_i32_0 = arith.constant 0 : i32
    %c0_i32_1 = arith.constant 0 : i32
    return %c0_i32, %c0_i32_0 : i32, i32
  }
  func.func @transform_5(%arg0: i32) -> (i32, i32) {
    %c0_i32 = arith.constant 0 : i32
    %c0_i32_0 = arith.constant 0 : i32
    %c0_i32_1 = arith.constant 0 : i32
    return %c0_i32, %c0_i32_0 : i32, i32
  }
  func.func @transform_6(%arg0: i32) -> (i32, i32) {
    %c0_i32 = arith.constant 0 : i32
    %c0_i32_0 = arith.constant 0 : i32
    %c0_i32_1 = arith.constant 0 : i32
    return %c0_i32, %c0_i32_0 : i32, i32
  }
  func.func @transform_7(%arg0: i32) -> (i32, i32) {
    %c0_i32 = arith.constant 0 : i32
    %c0_i32_0 = arith.constant 0 : i32
    %c0_i32_1 = arith.constant 0 : i32
    return %c0_i32, %c0_i32_0 : i32, i32
  }
  func.func @transform_8(%arg0: i32) -> (i32, i32) {
    %c0_i32 = arith.constant 0 : i32
    %c0_i32_0 = arith.constant 0 : i32
    %c0_i32_1 = arith.constant 0 : i32
    return %c0_i32, %c0_i32_0 : i32, i32
  }
  func.func @transform_9(%arg0: i32) -> (i32, i32) {
    %c0_i32 = arith.constant 0 : i32
    %c0_i32_0 = arith.constant 0 : i32
    %c0_i32_1 = arith.constant 0 : i32
    return %c0_i32, %c0_i32_0 : i32, i32
  }
  func.func @transform_10(%arg0: i32) -> (i32, i32, i32) {
    %c0_i32 = arith.constant 0 : i32
    %c0_i32_0 = arith.constant 0 : i32
    %c0_i32_1 = arith.constant 0 : i32
    return %arg0, %c0_i32, %c0_i32_0 : i32, i32, i32
  }
}

</mosaic_0001>

<llo_original>
// kernel: transformer_forward.16
$region0: #{transformer_forward.16}
  #allocation0 [shape = 'u32[]', space=smem, size = 0x4, offset = 0x4, fixed_abs, tag = 'smem constant byte address 0x4 - core index']
  #allocation1 [shape = 'u32[144,128]{1,0:T(1,128)}', space=vmem, size = 0x12000, scoped, tag = 'internal scratch']
  %s0 = inlined_call_operand.vmem [shape: f32[2,8,32], index: 0, kind: input, shape index: {}]
  %s1 = inlined_call_operand.vmem [shape: f32[1,32], index: 1, kind: input, shape index: {}]
  %s2 = inlined_call_operand.vmem [shape: f32[1,32], index: 2, kind: input, shape index: {}]
  %s3 = inlined_call_operand.vmem [shape: f32[2,8,32], index: 3, kind: output, shape index: {}]
  %s4 = sld [smem:[#allocation0]]
  $region45: #{transformer_forward.16} parent=0
    _
  %s6 = ssub.s32 1, %s4
  %s7 = scalar_select 0, %s6, %s4
  loop: start=0, step=1, limit=4
  $region2: #{transformer_forward.16} parent=0 // loop_pre_header
    _
  $region3: #{transformer_forward.16} parent=0 // loop_header
    %s9 = sphi 0, %s13
    %p10 = scmp.ge.s32.totalorder %s9, 4
    %s19 = sphi 0, %s21
    %s22 = sphi 0, %s19
    %s23 = sphi 0, %s22
    %s39 = sphi 0, %s23
    %s43 = sphi 0, %s43
    %s45 = sphi 0, %s43
    %s46 = sphi 0, %s45
    %s60 = sphi 0, %s46
    %s64 = sphi 0, %s64
    %s66 = sphi 0, %s64
    %s67 = sphi 0, %s66
    %s81 = sphi 0, %s67
    %s87 = sphi 0, %s89
    %s90 = sphi 0, %s87
    %s91 = sphi 0, %s90
    %s107 = sphi 0, %s91
  $region4: #{transformer_forward.16} parent=0 // loop_header_branch
    %12 = sbr.rel (%p10) target = $region8
  $region5: #{transformer_forward.16} parent=0 // loop_body
    %s14 = ssub.s32 %s9, 1
    %s15 = ssub.s32 %s9, 2
    %s16 = sadd.s32 %s9, 1
    %s17 = ssub.s32 %s9, %s16
    %p18 = scmp.eq.s32.totalorder %s17, 0
    %s20 = sadd.s32 %s19, 1
    %s21 = scalar_select %p18, %s19, %s20
    %p24 = pneg %p18
    %p25 = scmp.eq.s32.totalorder %s9, 1
    %p26 = por %p24, %p25
    %p27 = scmp.ne.s32.totalorder %s19, %s22
    %p28 = scmp.eq.s32.totalorder %s9, 0
    %p29 = por %p27, %p28
    %p30 = scmp.ne.s32.totalorder %s19, %s22
    %p31 = scmp.eq.s32.totalorder %s14, 1
    %p32 = por %p30, %p31
    %p33 = scmp.ne.s32.totalorder %s22, %s23
    %p34 = scmp.eq.s32.totalorder %s14, 0
    %p35 = por %p33, %p34
    %p36 = scmp.ne.s32.totalorder %s22, %s23
    %p37 = scmp.eq.s32.totalorder %s15, 1
    %p38 = por %p36, %p37
    %p40 = scmp.ne.s32.totalorder %s23, %s39
    %p41 = scmp.eq.s32.totalorder %s15, 0
    %p42 = por %p40, %p41
    %s44 = sadd.s32 %s43, 1
    %p47 = scmp.eq.s32.totalorder %s9, 1
    %p48 = scmp.ne.s32.totalorder %s43, %s45
    %p49 = scmp.eq.s32.totalorder %s9, 0
    %p50 = por %p48, %p49
    %p51 = scmp.ne.s32.totalorder %s43, %s45
    %p52 = scmp.eq.s32.totalorder %s14, 1
    %p53 = por %p51, %p52
    %p54 = scmp.ne.s32.totalorder %s45, %s46
    %p55 = scmp.eq.s32.totalorder %s14, 0
    %p56 = por %p54, %p55
    %p57 = scmp.ne.s32.totalorder %s45, %s46
    %p58 = scmp.eq.s32.totalorder %s15, 1
    %p59 = por %p57, %p58
    %p61 = scmp.ne.s32.totalorder %s46, %s60
    %p62 = scmp.eq.s32.totalorder %s15, 0
    %p63 = por %p61, %p62
    %s65 = sadd.s32 %s64, 1
    %p68 = scmp.eq.s32.totalorder %s9, 1
    %p69 = scmp.ne.s32.totalorder %s64, %s66
    %p70 = scmp.eq.s32.totalorder %s9, 0
    %p71 = por %p69, %p70
    %p72 = scmp.ne.s32.totalorder %s64, %s66
    %p73 = scmp.eq.s32.totalorder %s14, 1
    %p74 = por %p72, %p73
    %p75 = scmp.ne.s32.totalorder %s66, %s67
    %p76 = scmp.eq.s32.totalorder %s14, 0
    %p77 = por %p75, %p76
    %p78 = scmp.ne.s32.totalorder %s66, %s67
    %p79 = scmp.eq.s32.totalorder %s15, 1
    %p80 = por %p78, %p79
    %p82 = scmp.ne.s32.totalorder %s67, %s81
    %p83 = scmp.eq.s32.totalorder %s15, 0
    %p84 = por %p82, %p83
    %s85 = ssub.s32 %s9, %s16
    %p86 = scmp.eq.s32.totalorder %s85, 0
    %s88 = sadd.s32 %s87, 1
    %s89 = scalar_select %p86, %s87, %s88
    %p92 = pneg %p86
    %p93 = scmp.eq.s32.totalorder %s9, 1
    %p94 = por %p92, %p93
    %p95 = scmp.ne.s32.totalorder %s87, %s90
    %p96 = scmp.eq.s32.totalorder %s9, 0
    %p97 = por %p95, %p96
    %p98 = scmp.ne.s32.totalorder %s87, %s90
    %p99 = scmp.eq.s32.totalorder %s14, 1
    %p100 = por %p98, %p99
    %p101 = scmp.ne.s32.totalorder %s90, %s91
    %p102 = scmp.eq.s32.totalorder %s14, 0
    %p103 = por %p101, %p102
    %p104 = scmp.ne.s32.totalorder %s90, %s91
    %p105 = scmp.eq.s32.totalorder %s15, 1
    %p106 = por %p104, %p105
    %p108 = scmp.ne.s32.totalorder %s91, %s107
    %p109 = scmp.eq.s32.totalorder %s15, 0
    %p110 = por %p108, %p109
    %p111 = scmp.le.s32.totalorder 1, %s9
    %p112 = scmp.lt.s32.totalorder %s9, 3
    %p113 = pnand %p111, %p112
    %p114 = pneg %p113
    // Predicated region
    $region9: #{transformer_forward.16} parent=5 // pred_check
      _
    $region10: #{transformer_forward.16} parent=5 // pred_check_branch
      %116 = sbr.rel (%p113) target = $region12
    $region11: #{transformer_forward.16} parent=5 // pred_region
      %s117 = ssub.s32 %s9, 1
      // Predicated region
      $region13: #{transformer_forward.16} parent=11 // pred_check
        %p118 = pneg %p56
      $region14: #{transformer_forward.16} parent=11 // pred_check_branch
        %120 = sbr.rel (%p118) target = $region16
      $region15: #{transformer_forward.16} parent=11 // pred_region
        _
      $region16: #{transformer_forward.16} parent=11 // pred_fallthru
        _
      // Predicated region
      $region17: #{transformer_forward.16} parent=11 // pred_check
        %p121 = pneg %p77
      $region18: #{transformer_forward.16} parent=11 // pred_check_branch
        %123 = sbr.rel (%p121) target = $region20
      $region19: #{transformer_forward.16} parent=11 // pred_region
        _
      $region20: #{transformer_forward.16} parent=11 // pred_fallthru
        _
    $region12: #{transformer_forward.16} parent=5 // pred_fallthru
      _
    %p124 = scmp.lt.s32.totalorder %s9, 2
    // Predicated region
    $region21: #{transformer_forward.16} parent=5 // pred_check
      %p125 = pneg %p124
    $region22: #{transformer_forward.16} parent=5 // pred_check_branch
      %127 = sbr.rel (%p125) target = $region24
    $region23: #{transformer_forward.16} parent=5 // pred_region
      // Predicated region
      $region25: #{transformer_forward.16} parent=23 // pred_check
        %p128 = pneg %p29
      $region26: #{transformer_forward.16} parent=23 // pred_check_branch
        %130 = sbr.rel (%p128) target = $region28
      $region27: #{transformer_forward.16} parent=23 // pred_region
        %p131 = scmp.lt.s32.totalorder %s9, 1
        %s132 = scalar_select %p131, %s9, 1
        %s133 = smul.addr %s132, 8
        %s134 = scalar_lea.vmem %s0, %s133
      $region28: #{transformer_forward.16} parent=23 // pred_fallthru
        _
    $region24: #{transformer_forward.16} parent=5 // pred_fallthru
      _
    %p135 = scmp.le.s32.totalorder 1, %s9
    %p136 = scmp.lt.s32.totalorder %s9, 3
    %p137 = pnand %p135, %p136
    %p138 = pneg %p137
    // Predicated region
    $region29: #{transformer_forward.16} parent=5 // pred_check
      _
    $region30: #{transformer_forward.16} parent=5 // pred_check_branch
      %140 = sbr.rel (%p137) target = $region32
    $region31: #{transformer_forward.16} parent=5 // pred_region
      %s141 = ssub.s32 %s9, 1
      %p142 = scmp.lt.s32.totalorder %s14, 1
      %s143 = scalar_select %p142, %s14, 1
      %s144 = smul.addr %s143, 8
      %s145 = scalar_lea.vmem %s0, %s144
      %p146 = pneg %p35
      %p147 = pneg %p32
      %p148 = pneg %p56
      %p149 = pneg %p53
      %p150 = pneg %p77
      %p151 = pneg %p74
      %p152 = pneg %p103
      %p153 = pneg %p100
      %p154 = scmp.lt.s32.totalorder %s14, 1
      %s155 = scalar_select %p154, %s14, 1
      %s156 = smul.addr %s155, 8
      %s157 = scalar_lea.vmem %s3, %s156
      %p158 = scmp.lt.s32.totalorder %s14, 1
      %s159 = scalar_select %p158, %s14, 1
      %s160 = smul.addr %s159, 8
      %s161 = scalar_lea.vmem %s0, %s160
      %p162 = scmp.lt.s32.totalorder %s14, 1
      %s163 = scalar_select %p162, %s14, 1
      %s164 = smul.addr %s163, 8
      %s165 = scalar_lea.vmem %s3, %s164
      %v166 = vld [vmem:[%s161] sm:$0xff]
      %v167 = vld [vmem:[%s1] sm:$0x1]
      %v168 = vld [vmem:[%s2] sm:$0x1]
      %vm169 = vcmask 261120
      %v170 = vsel %vm169, %v166, 0.0
      %171 = vadd.xlane.f32.xlu0 %v170
      %v172 = vpop.xlane.xlu0 %171
      %v173 = vrcp.pop 32.0
      %v174 = vmul.f32 %v172, %v173
      %v175 = vsub.f32 %v166, %v174
      %v176 = vmul.f32 %v175, %v175
      %v177 = vsel %vm169, %v176, 0.0
      %178 = vadd.xlane.f32.xlu0 %v177
      %v179 = vpop.xlane.xlu0 %178
      %v180 = vmul.f32 %v179, %v173
      %v181 = vadd.f32 %v180, 1e-05
      %v182 = vrsqrt.pop %v181
      %v183 = vmul.f32 %v175, %v182
      %v185 = vlaneseq
      %v186 = vshrl.u32 %v185, 7
      %v187 = vsub.s32 0, %v186
      %v188 = vrot.slane %v167, %v187
      %v190 = vmul.f32 %v183, %v188
      %v192 = vlaneseq
      %v193 = vshrl.u32 %v192, 7
      %v194 = vsub.s32 0, %v193
      %v195 = vrot.slane %v168, %v194
      %v197 = vadd.f32 %v190, %v195
      %198 = vst.msk [vmem:[%s165] sm:$0xff] %vm169, %v197
      %p199 = scmp.lt.s32.totalorder %s14, 1
      %s200 = scalar_select %p199, %s14, 1
      %s201 = smul.addr %s200, 8
      %s202 = scalar_lea.vmem %s3, %s201
      // Predicated region
      $region33: #{transformer_forward.16} parent=31 // pred_check
        %p203 = pneg %p100
      $region34: #{transformer_forward.16} parent=31 // pred_check_branch
        %205 = sbr.rel (%p203) target = $region36
      $region35: #{transformer_forward.16} parent=31 // pred_region
        _
      $region36: #{transformer_forward.16} parent=31 // pred_fallthru
        _
    $region32: #{transformer_forward.16} parent=5 // pred_fallthru
      _
    %p206 = scmp.le.s32.totalorder 2, %s9
    // Predicated region
    $region37: #{transformer_forward.16} parent=5 // pred_check
      %p207 = pneg %p206
    $region38: #{transformer_forward.16} parent=5 // pred_check_branch
      %209 = sbr.rel (%p207) target = $region40
    $region39: #{transformer_forward.16} parent=5 // pred_region
      %s210 = ssub.s32 %s9, 2
      // Predicated region
      $region41: #{transformer_forward.16} parent=39 // pred_check
        %p211 = pneg %p106
      $region42: #{transformer_forward.16} parent=39 // pred_check_branch
        %213 = sbr.rel (%p211) target = $region44
      $region43: #{transformer_forward.16} parent=39 // pred_region
        %p214 = scmp.lt.s32.totalorder %s15, 1
        %s215 = scalar_select %p214, %s15, 1
        %s216 = smul.addr %s215, 8
        %s217 = scalar_lea.vmem %s3, %s216
      $region44: #{transformer_forward.16} parent=39 // pred_fallthru
        _
    $region40: #{transformer_forward.16} parent=5 // pred_fallthru
      _
  $region6: #{transformer_forward.16} parent=0 // loop_footer
    %s13 = sadd.s32 1, %s9
  $region7: #{transformer_forward.16} parent=0 // loop_footer_branch
    %8 = sbr.rel target = $region3
  $region8: #{transformer_forward.16} parent=0 // loop_exit
    _

// kernel: transformer_forward.13
$region0: #{transformer_forward.13}
  #allocation0 [shape = 'u32[]', space=smem, size = 0x4, offset = 0x4, fixed_abs, tag = 'smem constant byte address 0x4 - core index']
  #allocation1 [shape = 'u32[144,128]{1,0:T(1,128)}', space=vmem, size = 0x12000, scoped, tag = 'internal scratch']
  %s0 = inlined_call_operand.vmem [shape: f32[2,8,32], index: 0, kind: input, shape index: {}]
  %s1 = inlined_call_operand.vmem [shape: f32[32,64], index: 1, kind: input, shape index: {}]
  %s2 = inlined_call_operand.vmem [shape: f32[1,64], index: 2, kind: input, shape index: {}]
  %s3 = inlined_call_operand.vmem [shape: f32[64,32], index: 3, kind: input, shape index: {}]
  %s4 = inlined_call_operand.vmem [shape: f32[1,32], index: 4, kind: input, shape index: {}]
  %s5 = inlined_call_operand.vmem [shape: f32[1,32], index: 5, kind: input, shape index: {}]
  %s6 = inlined_call_operand.vmem [shape: f32[1,32], index: 6, kind: input, shape index: {}]
  %s7 = inlined_call_operand.vmem [shape: f32[2,8,32], index: 7, kind: output, shape index: {}]
  %s8 = sld [smem:[#allocation0]]
  $region61: #{transformer_forward.13} parent=0
    _
  %s10 = ssub.s32 1, %s8
  %s11 = scalar_select 0, %s10, %s8
  loop: start=0, step=1, limit=4
  $region2: #{transformer_forward.13} parent=0 // loop_pre_header
    _
  $region3: #{transformer_forward.13} parent=0 // loop_header
    %s13 = sphi 0, %s17
    %p14 = scmp.ge.s32.totalorder %s13, 4
    %s23 = sphi 0, %s25
    %s26 = sphi 0, %s23
    %s27 = sphi 0, %s26
    %s43 = sphi 0, %s27
    %s47 = sphi 0, %s47
    %s49 = sphi 0, %s47
    %s50 = sphi 0, %s49
    %s64 = sphi 0, %s50
    %s68 = sphi 0, %s68
    %s70 = sphi 0, %s68
    %s71 = sphi 0, %s70
    %s85 = sphi 0, %s71
    %s89 = sphi 0, %s89
    %s91 = sphi 0, %s89
    %s92 = sphi 0, %s91
    %s106 = sphi 0, %s92
    %s110 = sphi 0, %s110
    %s112 = sphi 0, %s110
    %s113 = sphi 0, %s112
    %s127 = sphi 0, %s113
    %s131 = sphi 0, %s131
    %s133 = sphi 0, %s131
    %s134 = sphi 0, %s133
    %s148 = sphi 0, %s134
    %s152 = sphi 0, %s152
    %s154 = sphi 0, %s152
    %s155 = sphi 0, %s154
    %s169 = sphi 0, %s155
    %s175 = sphi 0, %s177
    %s178 = sphi 0, %s175
    %s179 = sphi 0, %s178
    %s195 = sphi 0, %s179
  $region4: #{transformer_forward.13} parent=0 // loop_header_branch
    %16 = sbr.rel (%p14) target = $region8
  $region5: #{transformer_forward.13} parent=0 // loop_body
    %s18 = ssub.s32 %s13, 1
    %s19 = ssub.s32 %s13, 2
    %s20 = sadd.s32 %s13, 1
    %s21 = ssub.s32 %s13, %s20
    %p22 = scmp.eq.s32.totalorder %s21, 0
    %s24 = sadd.s32 %s23, 1
    %s25 = scalar_select %p22, %s23, %s24
    %p28 = pneg %p22
    %p29 = scmp.eq.s32.totalorder %s13, 1
    %p30 = por %p28, %p29
    %p31 = scmp.ne.s32.totalorder %s23, %s26
    %p32 = scmp.eq.s32.totalorder %s13, 0
    %p33 = por %p31, %p32
    %p34 = scmp.ne.s32.totalorder %s23, %s26
    %p35 = scmp.eq.s32.totalorder %s18, 1
    %p36 = por %p34, %p35
    %p37 = scmp.ne.s32.totalorder %s26, %s27
    %p38 = scmp.eq.s32.totalorder %s18, 0
    %p39 = por %p37, %p38
    %p40 = scmp.ne.s32.totalorder %s26, %s27
    %p41 = scmp.eq.s32.totalorder %s19, 1
    %p42 = por %p40, %p41
    %p44 = scmp.ne.s32.totalorder %s27, %s43
    %p45 = scmp.eq.s32.totalorder %s19, 0
    %p46 = por %p44, %p45
    %s48 = sadd.s32 %s47, 1
    %p51 = scmp.eq.s32.totalorder %s13, 1
    %p52 = scmp.ne.s32.totalorder %s47, %s49
    %p53 = scmp.eq.s32.totalorder %s13, 0
    %p54 = por %p52, %p53
    %p55 = scmp.ne.s32.totalorder %s47, %s49
    %p56 = scmp.eq.s32.totalorder %s18, 1
    %p57 = por %p55, %p56
    %p58 = scmp.ne.s32.totalorder %s49, %s50
    %p59 = scmp.eq.s32.totalorder %s18, 0
    %p60 = por %p58, %p59
    %p61 = scmp.ne.s32.totalorder %s49, %s50
    %p62 = scmp.eq.s32.totalorder %s19, 1
    %p63 = por %p61, %p62
    %p65 = scmp.ne.s32.totalorder %s50, %s64
    %p66 = scmp.eq.s32.totalorder %s19, 0
    %p67 = por %p65, %p66
    %s69 = sadd.s32 %s68, 1
    %p72 = scmp.eq.s32.totalorder %s13, 1
    %p73 = scmp.ne.s32.totalorder %s68, %s70
    %p74 = scmp.eq.s32.totalorder %s13, 0
    %p75 = por %p73, %p74
    %p76 = scmp.ne.s32.totalorder %s68, %s70
    %p77 = scmp.eq.s32.totalorder %s18, 1
    %p78 = por %p76, %p77
    %p79 = scmp.ne.s32.totalorder %s70, %s71
    %p80 = scmp.eq.s32.totalorder %s18, 0
    %p81 = por %p79, %p80
    %p82 = scmp.ne.s32.totalorder %s70, %s71
    %p83 = scmp.eq.s32.totalorder %s19, 1
    %p84 = por %p82, %p83
    %p86 = scmp.ne.s32.totalorder %s71, %s85
    %p87 = scmp.eq.s32.totalorder %s19, 0
    %p88 = por %p86, %p87
    %s90 = sadd.s32 %s89, 1
    %p93 = scmp.eq.s32.totalorder %s13, 1
    %p94 = scmp.ne.s32.totalorder %s89, %s91
    %p95 = scmp.eq.s32.totalorder %s13, 0
    %p96 = por %p94, %p95
    %p97 = scmp.ne.s32.totalorder %s89, %s91
    %p98 = scmp.eq.s32.totalorder %s18, 1
    %p99 = por %p97, %p98
    %p100 = scmp.ne.s32.totalorder %s91, %s92
    %p101 = scmp.eq.s32.totalorder %s18, 0
    %p102 = por %p100, %p101
    %p103 = scmp.ne.s32.totalorder %s91, %s92
    %p104 = scmp.eq.s32.totalorder %s19, 1
    %p105 = por %p103, %p104
    %p107 = scmp.ne.s32.totalorder %s92, %s106
    %p108 = scmp.eq.s32.totalorder %s19, 0
    %p109 = por %p107, %p108
    %s111 = sadd.s32 %s110, 1
    %p114 = scmp.eq.s32.totalorder %s13, 1
    %p115 = scmp.ne.s32.totalorder %s110, %s112
    %p116 = scmp.eq.s32.totalorder %s13, 0
    %p117 = por %p115, %p116
    %p118 = scmp.ne.s32.totalorder %s110, %s112
    %p119 = scmp.eq.s32.totalorder %s18, 1
    %p120 = por %p118, %p119
    %p121 = scmp.ne.s32.totalorder %s112, %s113
    %p122 = scmp.eq.s32.totalorder %s18, 0
    %p123 = por %p121, %p122
    %p124 = scmp.ne.s32.totalorder %s112, %s113
    %p125 = scmp.eq.s32.totalorder %s19, 1
    %p126 = por %p124, %p125
    %p128 = scmp.ne.s32.totalorder %s113, %s127
    %p129 = scmp.eq.s32.totalorder %s19, 0
    %p130 = por %p128, %p129
    %s132 = sadd.s32 %s131, 1
    %p135 = scmp.eq.s32.totalorder %s13, 1
    %p136 = scmp.ne.s32.totalorder %s131, %s133
    %p137 = scmp.eq.s32.totalorder %s13, 0
    %p138 = por %p136, %p137
    %p139 = scmp.ne.s32.totalorder %s131, %s133
    %p140 = scmp.eq.s32.totalorder %s18, 1
    %p141 = por %p139, %p140
    %p142 = scmp.ne.s32.totalorder %s133, %s134
    %p143 = scmp.eq.s32.totalorder %s18, 0
    %p144 = por %p142, %p143
    %p145 = scmp.ne.s32.totalorder %s133, %s134
    %p146 = scmp.eq.s32.totalorder %s19, 1
    %p147 = por %p145, %p146
    %p149 = scmp.ne.s32.totalorder %s134, %s148
    %p150 = scmp.eq.s32.totalorder %s19, 0
    %p151 = por %p149, %p150
    %s153 = sadd.s32 %s152, 1
    %p156 = scmp.eq.s32.totalorder %s13, 1
    %p157 = scmp.ne.s32.totalorder %s152, %s154
    %p158 = scmp.eq.s32.totalorder %s13, 0
    %p159 = por %p157, %p158
    %p160 = scmp.ne.s32.totalorder %s152, %s154
    %p161 = scmp.eq.s32.totalorder %s18, 1
    %p162 = por %p160, %p161
    %p163 = scmp.ne.s32.totalorder %s154, %s155
    %p164 = scmp.eq.s32.totalorder %s18, 0
    %p165 = por %p163, %p164
    %p166 = scmp.ne.s32.totalorder %s154, %s155
    %p167 = scmp.eq.s32.totalorder %s19, 1
    %p168 = por %p166, %p167
    %p170 = scmp.ne.s32.totalorder %s155, %s169
    %p171 = scmp.eq.s32.totalorder %s19, 0
    %p172 = por %p170, %p171
    %s173 = ssub.s32 %s13, %s20
    %p174 = scmp.eq.s32.totalorder %s173, 0
    %s176 = sadd.s32 %s175, 1
    %s177 = scalar_select %p174, %s175, %s176
    %p180 = pneg %p174
    %p181 = scmp.eq.s32.totalorder %s13, 1
    %p182 = por %p180, %p181
    %p183 = scmp.ne.s32.totalorder %s175, %s178
    %p184 = scmp.eq.s32.totalorder %s13, 0
    %p185 = por %p183, %p184
    %p186 = scmp.ne.s32.totalorder %s175, %s178
    %p187 = scmp.eq.s32.totalorder %s18, 1
    %p188 = por %p186, %p187
    %p189 = scmp.ne.s32.totalorder %s178, %s179
    %p190 = scmp.eq.s32.totalorder %s18, 0
    %p191 = por %p189, %p190
    %p192 = scmp.ne.s32.totalorder %s178, %s179
    %p193 = scmp.eq.s32.totalorder %s19, 1
    %p194 = por %p192, %p193
    %p196 = scmp.ne.s32.totalorder %s179, %s195
    %p197 = scmp.eq.s32.totalorder %s19, 0
    %p198 = por %p196, %p197
    %p199 = scmp.le.s32.totalorder 1, %s13
    %p200 = scmp.lt.s32.totalorder %s13, 3
    %p201 = pnand %p199, %p200
    %p202 = pneg %p201
    // Predicated region
    $region9: #{transformer_forward.13} parent=5 // pred_check
      _
    $region10: #{transformer_forward.13} parent=5 // pred_check_branch
      %204 = sbr.rel (%p201) target = $region12
    $region11: #{transformer_forward.13} parent=5 // pred_region
      %s205 = ssub.s32 %s13, 1
      // Predicated region
      $region13: #{transformer_forward.13} parent=11 // pred_check
        %p206 = pneg %p60
      $region14: #{transformer_forward.13} parent=11 // pred_check_branch
        %208 = sbr.rel (%p206) target = $region16
      $region15: #{transformer_forward.13} parent=11 // pred_region
        _
      $region16: #{transformer_forward.13} parent=11 // pred_fallthru
        _
      // Predicated region
      $region17: #{transformer_forward.13} parent=11 // pred_check
        %p209 = pneg %p81
      $region18: #{transformer_forward.13} parent=11 // pred_check_branch
        %211 = sbr.rel (%p209) target = $region20
      $region19: #{transformer_forward.13} parent=11 // pred_region
        _
      $region20: #{transformer_forward.13} parent=11 // pred_fallthru
        _
      // Predicated region
      $region21: #{transformer_forward.13} parent=11 // pred_check
        %p212 = pneg %p102
      $region22: #{transformer_forward.13} parent=11 // pred_check_branch
        %214 = sbr.rel (%p212) target = $region24
      $region23: #{transformer_forward.13} parent=11 // pred_region
        _
      $region24: #{transformer_forward.13} parent=11 // pred_fallthru
        _
      // Predicated region
      $region25: #{transformer_forward.13} parent=11 // pred_check
        %p215 = pneg %p123
      $region26: #{transformer_forward.13} parent=11 // pred_check_branch
        %217 = sbr.rel (%p215) target = $region28
      $region27: #{transformer_forward.13} parent=11 // pred_region
        _
      $region28: #{transformer_forward.13} parent=11 // pred_fallthru
        _
      // Predicated region
      $region29: #{transformer_forward.13} parent=11 // pred_check
        %p218 = pneg %p144
      $region30: #{transformer_forward.13} parent=11 // pred_check_branch
        %220 = sbr.rel (%p218) target = $region32
      $region31: #{transformer_forward.13} parent=11 // pred_region
        _
      $region32: #{transformer_forward.13} parent=11 // pred_fallthru
        _
      // Predicated region
      $region33: #{transformer_forward.13} parent=11 // pred_check
        %p221 = pneg %p165
      $region34: #{transformer_forward.13} parent=11 // pred_check_branch
        %223 = sbr.rel (%p221) target = $region36
      $region35: #{transformer_forward.13} parent=11 // pred_region
        _
      $region36: #{transformer_forward.13} parent=11 // pred_fallthru
        _
    $region12: #{transformer_forward.13} parent=5 // pred_fallthru
      _
    %p224 = scmp.lt.s32.totalorder %s13, 2
    // Predicated region
    $region37: #{transformer_forward.13} parent=5 // pred_check
      %p225 = pneg %p224
    $region38: #{transformer_forward.13} parent=5 // pred_check_branch
      %227 = sbr.rel (%p225) target = $region40
    $region39: #{transformer_forward.13} parent=5 // pred_region
      // Predicated region
      $region41: #{transformer_forward.13} parent=39 // pred_check
        %p228 = pneg %p33
      $region42: #{transformer_forward.13} parent=39 // pred_check_branch
        %230 = sbr.rel (%p228) target = $region44
      $region43: #{transformer_forward.13} parent=39 // pred_region
        %p231 = scmp.lt.s32.totalorder %s13, 1
        %s232 = scalar_select %p231, %s13, 1
        %s233 = smul.addr %s232, 8
        %s234 = scalar_lea.vmem %s0, %s233
      $region44: #{transformer_forward.13} parent=39 // pred_fallthru
        _
    $region40: #{transformer_forward.13} parent=5 // pred_fallthru
      _
    %p235 = scmp.le.s32.totalorder 1, %s13
    %p236 = scmp.lt.s32.totalorder %s13, 3
    %p237 = pnand %p235, %p236
    %p238 = pneg %p237
    // Predicated region
    $region45: #{transformer_forward.13} parent=5 // pred_check
      _
    $region46: #{transformer_forward.13} parent=5 // pred_check_branch
      %240 = sbr.rel (%p237) target = $region48
    $region47: #{transformer_forward.13} parent=5 // pred_region
      %s241 = ssub.s32 %s13, 1
      %p242 = scmp.lt.s32.totalorder %s18, 1
      %s243 = scalar_select %p242, %s18, 1
      %s244 = smul.addr %s243, 8
      %s245 = scalar_lea.vmem %s0, %s244
      %p246 = pneg %p39
      %p247 = pneg %p36
      %p248 = pneg %p60
      %p249 = pneg %p57
      %p250 = pneg %p81
      %p251 = pneg %p78
      %p252 = pneg %p102
      %p253 = pneg %p99
      %p254 = pneg %p123
      %p255 = pneg %p120
      %p256 = pneg %p144
      %p257 = pneg %p141
      %p258 = pneg %p165
      %p259 = pneg %p162
      %p260 = pneg %p191
      %p261 = pneg %p188
      %p262 = scmp.lt.s32.totalorder %s18, 1
      %s263 = scalar_select %p262, %s18, 1
      %s264 = smul.addr %s263, 8
      %s265 = scalar_lea.vmem %s7, %s264
      %p266 = scmp.lt.s32.totalorder %s18, 1
      %s267 = scalar_select %p266, %s18, 1
      %s268 = smul.addr %s267, 8
      %s269 = scalar_lea.vmem %s0, %s268
      %p270 = scmp.lt.s32.totalorder %s18, 1
      %s271 = scalar_select %p270, %s18, 1
      %s272 = smul.addr %s271, 8
      %s273 = scalar_lea.vmem %s7, %s272
      %v275 = vld [vmem:[%s269] sm:$0xff]
      %v276 = vld [vmem:[%s1] sm:$0xff]
      %v277 = vld [vmem:[%s1 + $0x8] sm:$0xff]
      %v278 = vld [vmem:[%s1 + $0x10] sm:$0xff]
      %v279 = vld [vmem:[%s1 + $0x18] sm:$0xff]
      %v280 = vpack.c.bf16 %v275, %v275
      %v281 = vpack.c.bf16 %v277, %v276
      %v282 = vpack.c.bf16 %v279, %v278
      %v283 = vld [vmem:[%s2] sm:$0x1]
      %v285 = vlaneseq
      %v286 = vshrl.u32 %v285, 7
      %v287 = vsub.s32 0, %v286
      %v288 = vrot.slane %v283, %v287
      %vm290 = vcmask 261120
      %v292 = vsel %vm290, %v280, 0
      %294 = vmatprep.subr.bf16.mxu0 0
      %295 = vmatpush1.bf16.msra.mxu0 0
      %296 = vmatprep.subr.bf16.mxu0 0
      %297 = vmatpush1.bf16.msra.mxu0 0
      %298 = vmatprep.subr.bf16.mxu0 0
      %299 = vmatpush1.bf16.msra.mxu0 0
      %300 = vmatprep.subr.bf16.mxu0 0
      %301 = vmatpush1.bf16.msra.mxu0 0
      %302 = vmatprep.subr.bf16.mxu0 0
      %303 = vmatpush1.bf16.msra.mxu0 0
      %304 = vmatprep.subr.bf16.mxu0 0
      %305 = vmatpush1.bf16.msra.mxu0 0
      %306 = vmatprep.subr.bf16.mxu0 0
      %307 = vmatpush1.bf16.msra.mxu0 %v282
      %308 = vmatprep.subr.bf16.mxu0 0
      %309 = vmatpush1.bf16.msra.mxu0 %v281
      %310 = vmatprep.subr.bf16.mxu0 0
      %311 = vmatpush2.bf16.msra.mxu0 0
      %312 = vmatprep.subr.bf16.mxu0 0
      %313 = vmatpush2.bf16.msra.mxu0 0
      %314 = vmatprep.subr.bf16.mxu0 0
      %315 = vmatpush2.bf16.msra.mxu0 0
      %316 = vmatprep.subr.bf16.mxu0 0
      %317 = vmatpush2.bf16.msra.mxu0 0
      %318 = vmatprep.subr.bf16.mxu0 0
      %319 = vmatpush2.bf16.msra.mxu0 0
      %320 = vmatprep.subr.bf16.mxu0 0
      %321 = vmatpush2.bf16.msra.mxu0 0
      %322 = vmatprep.subr.bf16.mxu0 0
      %323 = vmatpush2.bf16.msra.mxu0 0
      %324 = vmatprep.subr.bf16.mxu0 0
      %325 = vmatpush2.bf16.msra.mxu0 0
      %326 = vmatprep.mubr.bf16.mxu0 0
      %327 = vmatmul.mubr.bf16.gmra.mxu0 %v292
      %v328 = vpop.f32.mrf.mxu0
      %v329 = vadd.f32 %v288, %v328
      %v330 = vpop.f32.mrf.mxu0
      %v331 = vpop.f32.mrf.mxu0
      %v332 = vpop.f32.mrf.mxu0
      %333 = vdwg.mxu0
      %v334 = vmax.f32 %v329, 0.0
      %v335 = vld [vmem:[%s3] sm:$0xff]
      %v336 = vld [vmem:[%s3 + $0x8] sm:$0xff]
      %v337 = vld [vmem:[%s3 + $0x10] sm:$0xff]
      %v338 = vld [vmem:[%s3 + $0x18] sm:$0xff]
      %v339 = vld [vmem:[%s3 + $0x20] sm:$0xff]
      %v340 = vld [vmem:[%s3 + $0x28] sm:$0xff]
      %v341 = vld [vmem:[%s3 + $0x30] sm:$0xff]
      %v342 = vld [vmem:[%s3 + $0x38] sm:$0xff]
      %v343 = vpack.c.bf16 %v334, %v334
      %v344 = vpack.c.bf16 %v336, %v335
      %v345 = vpack.c.bf16 %v338, %v337
      %v346 = vpack.c.bf16 %v340, %v339
      %v347 = vpack.c.bf16 %v342, %v341
      %v348 = vld [vmem:[%s4] sm:$0x1]
      %v350 = vlaneseq
      %v351 = vshrl.u32 %v350, 7
      %v352 = vsub.s32 0, %v351
      %v353 = vrot.slane %v348, %v352
      %vm355 = vcmask 523264
      %v357 = vsel %vm355, %v343, 0
      %359 = vmatprep.subr.bf16.mxu0 0
      %360 = vmatpush1.bf16.msra.mxu0 0
      %361 = vmatprep.subr.bf16.mxu0 0
      %362 = vmatpush1.bf16.msra.mxu0 0
      %363 = vmatprep.subr.bf16.mxu0 0
      %364 = vmatpush1.bf16.msra.mxu0 0
      %365 = vmatprep.subr.bf16.mxu0 0
      %366 = vmatpush1.bf16.msra.mxu0 0
      %367 = vmatprep.subr.bf16.mxu0 0
      %368 = vmatpush1.bf16.msra.mxu0 %v347
      %369 = vmatprep.subr.bf16.mxu0 0
      %370 = vmatpush1.bf16.msra.mxu0 %v346
      %371 = vmatprep.subr.bf16.mxu0 0
      %372 = vmatpush1.bf16.msra.mxu0 %v345
      %373 = vmatprep.subr.bf16.mxu0 0
      %374 = vmatpush1.bf16.msra.mxu0 %v344
      %375 = vmatprep.subr.bf16.mxu0 0
      %376 = vmatpush2.bf16.msra.mxu0 0
      %377 = vmatprep.subr.bf16.mxu0 0
      %378 = vmatpush2.bf16.msra.mxu0 0
      %379 = vmatprep.subr.bf16.mxu0 0
      %380 = vmatpush2.bf16.msra.mxu0 0
      %381 = vmatprep.subr.bf16.mxu0 0
      %382 = vmatpush2.bf16.msra.mxu0 0
      %383 = vmatprep.subr.bf16.mxu0 0
      %384 = vmatpush2.bf16.msra.mxu0 0
      %385 = vmatprep.subr.bf16.mxu0 0
      %386 = vmatpush2.bf16.msra.mxu0 0
      %387 = vmatprep.subr.bf16.mxu0 0
      %388 = vmatpush2.bf16.msra.mxu0 0
      %389 = vmatprep.subr.bf16.mxu0 0
      %390 = vmatpush2.bf16.msra.mxu0 0
      %391 = vmatprep.mubr.bf16.mxu0 0
      %392 = vmatmul.mubr.bf16.gmra.mxu0 %v357
      %v393 = vpop.f32.mrf.mxu0
      %v394 = vadd.f32 %v353, %v393
      %v395 = vpop.f32.mrf.mxu0
      %v396 = vpop.f32.mrf.mxu0
      %v397 = vpop.f32.mrf.mxu0
      %398 = vdwg.mxu0
      %v399 = vadd.f32 %v275, %v394
      %v400 = vld [vmem:[%s5] sm:$0x1]
      %v401 = vld [vmem:[%s6] sm:$0x1]
      %v402 = vsel %vm290, %v399, 0.0
      %403 = vadd.xlane.f32.xlu0 %v402
      %v404 = vpop.xlane.xlu0 %403
      %v405 = vrcp.pop 32.0
      %v406 = vmul.f32 %v404, %v405
      %v407 = vsub.f32 %v399, %v406
      %v408 = vmul.f32 %v407, %v407
      %v409 = vsel %vm290, %v408, 0.0
      %410 = vadd.xlane.f32.xlu0 %v409
      %v411 = vpop.xlane.xlu0 %410
      %v412 = vmul.f32 %v411, %v405
      %v413 = vadd.f32 %v412, 1e-05
      %v414 = vrsqrt.pop %v413
      %v415 = vmul.f32 %v407, %v414
      %v417 = vlaneseq
      %v418 = vshrl.u32 %v417, 7
      %v419 = vsub.s32 0, %v418
      %v420 = vrot.slane %v400, %v419
      %v422 = vmul.f32 %v415, %v420
      %v424 = vlaneseq
      %v425 = vshrl.u32 %v424, 7
      %v426 = vsub.s32 0, %v425
      %v427 = vrot.slane %v401, %v426
      %v429 = vadd.f32 %v422, %v427
      %430 = vst.msk [vmem:[%s273] sm:$0xff] %vm290, %v429
      %p431 = scmp.lt.s32.totalorder %s18, 1
      %s432 = scalar_select %p431, %s18, 1
      %s433 = smul.addr %s432, 8
      %s434 = scalar_lea.vmem %s7, %s433
      // Predicated region
      $region49: #{transformer_forward.13} parent=47 // pred_check
        %p435 = pneg %p188
      $region50: #{transformer_forward.13} parent=47 // pred_check_branch
        %437 = sbr.rel (%p435) target = $region52
      $region51: #{transformer_forward.13} parent=47 // pred_region
        _
      $region52: #{transformer_forward.13} parent=47 // pred_fallthru
        _
    $region48: #{transformer_forward.13} parent=5 // pred_fallthru
      _
    %p438 = scmp.le.s32.totalorder 2, %s13
    // Predicated region
    $region53: #{transformer_forward.13} parent=5 // pred_check
      %p439 = pneg %p438
    $region54: #{transformer_forward.13} parent=5 // pred_check_branch
      %441 = sbr.rel (%p439) target = $region56
    $region55: #{transformer_forward.13} parent=5 // pred_region
      %s442 = ssub.s32 %s13, 2
      // Predicated region
      $region57: #{transformer_forward.13} parent=55 // pred_check
        %p443 = pneg %p194
      $region58: #{transformer_forward.13} parent=55 // pred_check_branch
        %445 = sbr.rel (%p443) target = $region60
      $region59: #{transformer_forward.13} parent=55 // pred_region
        %p446 = scmp.lt.s32.totalorder %s19, 1
        %s447 = scalar_select %p446, %s19, 1
        %s448 = smul.addr %s447, 8
        %s449 = scalar_lea.vmem %s7, %s448
      $region60: #{transformer_forward.13} parent=55 // pred_fallthru
        _
    $region56: #{transformer_forward.13} parent=5 // pred_fallthru
      _
  $region6: #{transformer_forward.13} parent=0 // loop_footer
    %s17 = sadd.s32 1, %s13
  $region7: #{transformer_forward.13} parent=0 // loop_footer_branch
    %12 = sbr.rel target = $region3
  $region8: #{transformer_forward.13} parent=0 // loop_exit
    _

// kernel: transformer_forward.12
$region0: #{transformer_forward.12}
  #allocation0 [shape = 'u32[]', space=smem, size = 0x4, offset = 0x4, fixed_abs, tag = 'smem constant byte address 0x4 - core index']
  #allocation1 [shape = 'u32[144,128]{1,0:T(1,128)}', space=vmem, size = 0x12000, scoped, tag = 'internal scratch']
  %s0 = inlined_call_operand.vmem [shape: f32[2,8,32], index: 0, kind: input, shape index: {}]
  %s1 = inlined_call_operand.vmem [shape: f32[32,96], index: 1, kind: input, shape index: {}]
  %s2 = inlined_call_operand.vmem [shape: f32[1,96], index: 2, kind: input, shape index: {}]
  %s3 = inlined_call_operand.vmem [shape: f32[32,32], index: 3, kind: input, shape index: {}]
  %s4 = inlined_call_operand.vmem [shape: f32[1,32], index: 4, kind: input, shape index: {}]
  %s5 = inlined_call_operand.vmem [shape: f32[1,32], index: 5, kind: input, shape index: {}]
  %s6 = inlined_call_operand.vmem [shape: f32[1,32], index: 6, kind: input, shape index: {}]
  %s7 = inlined_call_operand.vmem [shape: f32[2,8,32], index: 7, kind: output, shape index: {}]
  %s8 = sld [smem:[#allocation0]]
  $region61: #{transformer_forward.12} parent=0
    _
  %s10 = ssub.s32 1, %s8
  %s11 = scalar_select 0, %s10, %s8
  loop: start=0, step=1, limit=4
  $region2: #{transformer_forward.12} parent=0 // loop_pre_header
    _
  $region3: #{transformer_forward.12} parent=0 // loop_header
    %s13 = sphi 0, %s17
    %p14 = scmp.ge.s32.totalorder %s13, 4
    %s23 = sphi 0, %s25
    %s26 = sphi 0, %s23
    %s27 = sphi 0, %s26
    %s43 = sphi 0, %s27
    %s47 = sphi 0, %s47
    %s49 = sphi 0, %s47
    %s50 = sphi 0, %s49
    %s64 = sphi 0, %s50
    %s68 = sphi 0, %s68
    %s70 = sphi 0, %s68
    %s71 = sphi 0, %s70
    %s85 = sphi 0, %s71
    %s89 = sphi 0, %s89
    %s91 = sphi 0, %s89
    %s92 = sphi 0, %s91
    %s106 = sphi 0, %s92
    %s110 = sphi 0, %s110
    %s112 = sphi 0, %s110
    %s113 = sphi 0, %s112
    %s127 = sphi 0, %s113
    %s131 = sphi 0, %s131
    %s133 = sphi 0, %s131
    %s134 = sphi 0, %s133
    %s148 = sphi 0, %s134
    %s152 = sphi 0, %s152
    %s154 = sphi 0, %s152
    %s155 = sphi 0, %s154
    %s169 = sphi 0, %s155
    %s175 = sphi 0, %s177
    %s178 = sphi 0, %s175
    %s179 = sphi 0, %s178
    %s195 = sphi 0, %s179
  $region4: #{transformer_forward.12} parent=0 // loop_header_branch
    %16 = sbr.rel (%p14) target = $region8
  $region5: #{transformer_forward.12} parent=0 // loop_body
    %s18 = ssub.s32 %s13, 1
    %s19 = ssub.s32 %s13, 2
    %s20 = sadd.s32 %s13, 1
    %s21 = ssub.s32 %s13, %s20
    %p22 = scmp.eq.s32.totalorder %s21, 0
    %s24 = sadd.s32 %s23, 1
    %s25 = scalar_select %p22, %s23, %s24
    %p28 = pneg %p22
    %p29 = scmp.eq.s32.totalorder %s13, 1
    %p30 = por %p28, %p29
    %p31 = scmp.ne.s32.totalorder %s23, %s26
    %p32 = scmp.eq.s32.totalorder %s13, 0
    %p33 = por %p31, %p32
    %p34 = scmp.ne.s32.totalorder %s23, %s26
    %p35 = scmp.eq.s32.totalorder %s18, 1
    %p36 = por %p34, %p35
    %p37 = scmp.ne.s32.totalorder %s26, %s27
    %p38 = scmp.eq.s32.totalorder %s18, 0
    %p39 = por %p37, %p38
    %p40 = scmp.ne.s32.totalorder %s26, %s27
    %p41 = scmp.eq.s32.totalorder %s19, 1
    %p42 = por %p40, %p41
    %p44 = scmp.ne.s32.totalorder %s27, %s43
    %p45 = scmp.eq.s32.totalorder %s19, 0
    %p46 = por %p44, %p45
    %s48 = sadd.s32 %s47, 1
    %p51 = scmp.eq.s32.totalorder %s13, 1
    %p52 = scmp.ne.s32.totalorder %s47, %s49
    %p53 = scmp.eq.s32.totalorder %s13, 0
    %p54 = por %p52, %p53
    %p55 = scmp.ne.s32.totalorder %s47, %s49
    %p56 = scmp.eq.s32.totalorder %s18, 1
    %p57 = por %p55, %p56
    %p58 = scmp.ne.s32.totalorder %s49, %s50
    %p59 = scmp.eq.s32.totalorder %s18, 0
    %p60 = por %p58, %p59
    %p61 = scmp.ne.s32.totalorder %s49, %s50
    %p62 = scmp.eq.s32.totalorder %s19, 1
    %p63 = por %p61, %p62
    %p65 = scmp.ne.s32.totalorder %s50, %s64
    %p66 = scmp.eq.s32.totalorder %s19, 0
    %p67 = por %p65, %p66
    %s69 = sadd.s32 %s68, 1
    %p72 = scmp.eq.s32.totalorder %s13, 1
    %p73 = scmp.ne.s32.totalorder %s68, %s70
    %p74 = scmp.eq.s32.totalorder %s13, 0
    %p75 = por %p73, %p74
    %p76 = scmp.ne.s32.totalorder %s68, %s70
    %p77 = scmp.eq.s32.totalorder %s18, 1
    %p78 = por %p76, %p77
    %p79 = scmp.ne.s32.totalorder %s70, %s71
    %p80 = scmp.eq.s32.totalorder %s18, 0
    %p81 = por %p79, %p80
    %p82 = scmp.ne.s32.totalorder %s70, %s71
    %p83 = scmp.eq.s32.totalorder %s19, 1
    %p84 = por %p82, %p83
    %p86 = scmp.ne.s32.totalorder %s71, %s85
    %p87 = scmp.eq.s32.totalorder %s19, 0
    %p88 = por %p86, %p87
    %s90 = sadd.s32 %s89, 1
    %p93 = scmp.eq.s32.totalorder %s13, 1
    %p94 = scmp.ne.s32.totalorder %s89, %s91
    %p95 = scmp.eq.s32.totalorder %s13, 0
    %p96 = por %p94, %p95
    %p97 = scmp.ne.s32.totalorder %s89, %s91
    %p98 = scmp.eq.s32.totalorder %s18, 1
    %p99 = por %p97, %p98
    %p100 = scmp.ne.s32.totalorder %s91, %s92
    %p101 = scmp.eq.s32.totalorder %s18, 0
    %p102 = por %p100, %p101
    %p103 = scmp.ne.s32.totalorder %s91, %s92
    %p104 = scmp.eq.s32.totalorder %s19, 1
    %p105 = por %p103, %p104
    %p107 = scmp.ne.s32.totalorder %s92, %s106
    %p108 = scmp.eq.s32.totalorder %s19, 0
    %p109 = por %p107, %p108
    %s111 = sadd.s32 %s110, 1
    %p114 = scmp.eq.s32.totalorder %s13, 1
    %p115 = scmp.ne.s32.totalorder %s110, %s112
    %p116 = scmp.eq.s32.totalorder %s13, 0
    %p117 = por %p115, %p116
    %p118 = scmp.ne.s32.totalorder %s110, %s112
    %p119 = scmp.eq.s32.totalorder %s18, 1
    %p120 = por %p118, %p119
    %p121 = scmp.ne.s32.totalorder %s112, %s113
    %p122 = scmp.eq.s32.totalorder %s18, 0
    %p123 = por %p121, %p122
    %p124 = scmp.ne.s32.totalorder %s112, %s113
    %p125 = scmp.eq.s32.totalorder %s19, 1
    %p126 = por %p124, %p125
    %p128 = scmp.ne.s32.totalorder %s113, %s127
    %p129 = scmp.eq.s32.totalorder %s19, 0
    %p130 = por %p128, %p129
    %s132 = sadd.s32 %s131, 1
    %p135 = scmp.eq.s32.totalorder %s13, 1
    %p136 = scmp.ne.s32.totalorder %s131, %s133
    %p137 = scmp.eq.s32.totalorder %s13, 0
    %p138 = por %p136, %p137
    %p139 = scmp.ne.s32.totalorder %s131, %s133
    %p140 = scmp.eq.s32.totalorder %s18, 1
    %p141 = por %p139, %p140
    %p142 = scmp.ne.s32.totalorder %s133, %s134
    %p143 = scmp.eq.s32.totalorder %s18, 0
    %p144 = por %p142, %p143
    %p145 = scmp.ne.s32.totalorder %s133, %s134
    %p146 = scmp.eq.s32.totalorder %s19, 1
    %p147 = por %p145, %p146
    %p149 = scmp.ne.s32.totalorder %s134, %s148
    %p150 = scmp.eq.s32.totalorder %s19, 0
    %p151 = por %p149, %p150
    %s153 = sadd.s32 %s152, 1
    %p156 = scmp.eq.s32.totalorder %s13, 1
    %p157 = scmp.ne.s32.totalorder %s152, %s154
    %p158 = scmp.eq.s32.totalorder %s13, 0
    %p159 = por %p157, %p158
    %p160 = scmp.ne.s32.totalorder %s152, %s154
    %p161 = scmp.eq.s32.totalorder %s18, 1
    %p162 = por %p160, %p161
    %p163 = scmp.ne.s32.totalorder %s154, %s155
    %p164 = scmp.eq.s32.totalorder %s18, 0
    %p165 = por %p163, %p164
    %p166 = scmp.ne.s32.totalorder %s154, %s155
    %p167 = scmp.eq.s32.totalorder %s19, 1
    %p168 = por %p166, %p167
    %p170 = scmp.ne.s32.totalorder %s155, %s169
    %p171 = scmp.eq.s32.totalorder %s19, 0
    %p172 = por %p170, %p171
    %s173 = ssub.s32 %s13, %s20
    %p174 = scmp.eq.s32.totalorder %s173, 0
    %s176 = sadd.s32 %s175, 1
    %s177 = scalar_select %p174, %s175, %s176
    %p180 = pneg %p174
    %p181 = scmp.eq.s32.totalorder %s13, 1
    %p182 = por %p180, %p181
    %p183 = scmp.ne.s32.totalorder %s175, %s178
    %p184 = scmp.eq.s32.totalorder %s13, 0
    %p185 = por %p183, %p184
    %p186 = scmp.ne.s32.totalorder %s175, %s178
    %p187 = scmp.eq.s32.totalorder %s18, 1
    %p188 = por %p186, %p187
    %p189 = scmp.ne.s32.totalorder %s178, %s179
    %p190 = scmp.eq.s32.totalorder %s18, 0
    %p191 = por %p189, %p190
    %p192 = scmp.ne.s32.totalorder %s178, %s179
    %p193 = scmp.eq.s32.totalorder %s19, 1
    %p194 = por %p192, %p193
    %p196 = scmp.ne.s32.totalorder %s179, %s195
    %p197 = scmp.eq.s32.totalorder %s19, 0
    %p198 = por %p196, %p197
    %p199 = scmp.le.s32.totalorder 1, %s13
    %p200 = scmp.lt.s32.totalorder %s13, 3
    %p201 = pnand %p199, %p200
    %p202 = pneg %p201
    // Predicated region
    $region9: #{transformer_forward.12} parent=5 // pred_check
      _
    $region10: #{transformer_forward.12} parent=5 // pred_check_branch
      %204 = sbr.rel (%p201) target = $region12
    $region11: #{transformer_forward.12} parent=5 // pred_region
      %s205 = ssub.s32 %s13, 1
      // Predicated region
      $region13: #{transformer_forward.12} parent=11 // pred_check
        %p206 = pneg %p60
      $region14: #{transformer_forward.12} parent=11 // pred_check_branch
        %208 = sbr.rel (%p206) target = $region16
      $region15: #{transformer_forward.12} parent=11 // pred_region
        _
      $region16: #{transformer_forward.12} parent=11 // pred_fallthru
        _
      // Predicated region
      $region17: #{transformer_forward.12} parent=11 // pred_check
        %p209 = pneg %p81
      $region18: #{transformer_forward.12} parent=11 // pred_check_branch
        %211 = sbr.rel (%p209) target = $region20
      $region19: #{transformer_forward.12} parent=11 // pred_region
        _
      $region20: #{transformer_forward.12} parent=11 // pred_fallthru
        _
      // Predicated region
      $region21: #{transformer_forward.12} parent=11 // pred_check
        %p212 = pneg %p102
      $region22: #{transformer_forward.12} parent=11 // pred_check_branch
        %214 = sbr.rel (%p212) target = $region24
      $region23: #{transformer_forward.12} parent=11 // pred_region
        _
      $region24: #{transformer_forward.12} parent=11 // pred_fallthru
        _
      // Predicated region
      $region25: #{transformer_forward.12} parent=11 // pred_check
        %p215 = pneg %p123
      $region26: #{transformer_forward.12} parent=11 // pred_check_branch
        %217 = sbr.rel (%p215) target = $region28
      $region27: #{transformer_forward.12} parent=11 // pred_region
        _
      $region28: #{transformer_forward.12} parent=11 // pred_fallthru
        _
      // Predicated region
      $region29: #{transformer_forward.12} parent=11 // pred_check
        %p218 = pneg %p144
      $region30: #{transformer_forward.12} parent=11 // pred_check_branch
        %220 = sbr.rel (%p218) target = $region32
      $region31: #{transformer_forward.12} parent=11 // pred_region
        _
      $region32: #{transformer_forward.12} parent=11 // pred_fallthru
        _
      // Predicated region
      $region33: #{transformer_forward.12} parent=11 // pred_check
        %p221 = pneg %p165
      $region34: #{transformer_forward.12} parent=11 // pred_check_branch
        %223 = sbr.rel (%p221) target = $region36
      $region35: #{transformer_forward.12} parent=11 // pred_region
        _
      $region36: #{transformer_forward.12} parent=11 // pred_fallthru
        _
    $region12: #{transformer_forward.12} parent=5 // pred_fallthru
      _
    %p224 = scmp.lt.s32.totalorder %s13, 2
    // Predicated region
    $region37: #{transformer_forward.12} parent=5 // pred_check
      %p225 = pneg %p224
    $region38: #{transformer_forward.12} parent=5 // pred_check_branch
      %227 = sbr.rel (%p225) target = $region40
    $region39: #{transformer_forward.12} parent=5 // pred_region
      // Predicated region
      $region41: #{transformer_forward.12} parent=39 // pred_check
        %p228 = pneg %p33
      $region42: #{transformer_forward.12} parent=39 // pred_check_branch
        %230 = sbr.rel (%p228) target = $region44
      $region43: #{transformer_forward.12} parent=39 // pred_region
        %p231 = scmp.lt.s32.totalorder %s13, 1
        %s232 = scalar_select %p231, %s13, 1
        %s233 = smul.addr %s232, 8
        %s234 = scalar_lea.vmem %s0, %s233
      $region44: #{transformer_forward.12} parent=39 // pred_fallthru
        _
    $region40: #{transformer_forward.12} parent=5 // pred_fallthru
      _
    %p235 = scmp.le.s32.totalorder 1, %s13
    %p236 = scmp.lt.s32.totalorder %s13, 3
    %p237 = pnand %p235, %p236
    %p238 = pneg %p237
    // Predicated region
    $region45: #{transformer_forward.12} parent=5 // pred_check
      _
    $region46: #{transformer_forward.12} parent=5 // pred_check_branch
      %240 = sbr.rel (%p237) target = $region48
    $region47: #{transformer_forward.12} parent=5 // pred_region
      %s241 = ssub.s32 %s13, 1
      %p242 = scmp.lt.s32.totalorder %s18, 1
      %s243 = scalar_select %p242, %s18, 1
      %s244 = smul.addr %s243, 8
      %s245 = scalar_lea.vmem %s0, %s244
      %p246 = pneg %p39
      %p247 = pneg %p36
      %p248 = pneg %p60
      %p249 = pneg %p57
      %p250 = pneg %p81
      %p251 = pneg %p78
      %p252 = pneg %p102
      %p253 = pneg %p99
      %p254 = pneg %p123
      %p255 = pneg %p120
      %p256 = pneg %p144
      %p257 = pneg %p141
      %p258 = pneg %p165
      %p259 = pneg %p162
      %p260 = pneg %p191
      %p261 = pneg %p188
      %p262 = scmp.lt.s32.totalorder %s18, 1
      %s263 = scalar_select %p262, %s18, 1
      %s264 = smul.addr %s263, 8
      %s265 = scalar_lea.vmem %s7, %s264
      %p266 = scmp.lt.s32.totalorder %s18, 1
      %s267 = scalar_select %p266, %s18, 1
      %s268 = smul.addr %s267, 8
      %s269 = scalar_lea.vmem %s0, %s268
      %p270 = scmp.lt.s32.totalorder %s18, 1
      %s271 = scalar_select %p270, %s18, 1
      %s272 = smul.addr %s271, 8
      %s273 = scalar_lea.vmem %s7, %s272
      %v275 = vld [vmem:[%s269] sm:$0xff]
      %v276 = vld [vmem:[%s1] sm:$0xff]
      %v277 = vld [vmem:[%s1 + $0x8] sm:$0xff]
      %v278 = vld [vmem:[%s1 + $0x10] sm:$0xff]
      %v279 = vld [vmem:[%s1 + $0x18] sm:$0xff]
      %v280 = vpack.c.bf16 %v275, %v275
      %v281 = vpack.c.bf16 %v277, %v276
      %v282 = vpack.c.bf16 %v279, %v278
      %v283 = vld [vmem:[%s2] sm:$0x1]
      %v285 = vlaneseq
      %v286 = vshrl.u32 %v285, 7
      %v287 = vsub.s32 0, %v286
      %v288 = vrot.slane %v283, %v287
      %vm290 = vcmask 261120
      %v292 = vsel %vm290, %v280, 0
      %294 = vmatprep.subr.bf16.mxu0 0
      %295 = vmatpush1.bf16.msra.mxu0 0
      %296 = vmatprep.subr.bf16.mxu0 0
      %297 = vmatpush1.bf16.msra.mxu0 0
      %298 = vmatprep.subr.bf16.mxu0 0
      %299 = vmatpush1.bf16.msra.mxu0 0
      %300 = vmatprep.subr.bf16.mxu0 0
      %301 = vmatpush1.bf16.msra.mxu0 0
      %302 = vmatprep.subr.bf16.mxu0 0
      %303 = vmatpush1.bf16.msra.mxu0 0
      %304 = vmatprep.subr.bf16.mxu0 0
      %305 = vmatpush1.bf16.msra.mxu0 0
      %306 = vmatprep.subr.bf16.mxu0 0
      %307 = vmatpush1.bf16.msra.mxu0 %v282
      %308 = vmatprep.subr.bf16.mxu0 0
      %309 = vmatpush1.bf16.msra.mxu0 %v281
      %310 = vmatprep.subr.bf16.mxu0 0
      %311 = vmatpush2.bf16.msra.mxu0 0
      %312 = vmatprep.subr.bf16.mxu0 0
      %313 = vmatpush2.bf16.msra.mxu0 0
      %314 = vmatprep.subr.bf16.mxu0 0
      %315 = vmatpush2.bf16.msra.mxu0 0
      %316 = vmatprep.subr.bf16.mxu0 0
      %317 = vmatpush2.bf16.msra.mxu0 0
      %318 = vmatprep.subr.bf16.mxu0 0
      %319 = vmatpush2.bf16.msra.mxu0 0
      %320 = vmatprep.subr.bf16.mxu0 0
      %321 = vmatpush2.bf16.msra.mxu0 0
      %322 = vmatprep.subr.bf16.mxu0 0
      %323 = vmatpush2.bf16.msra.mxu0 0
      %324 = vmatprep.subr.bf16.mxu0 0
      %325 = vmatpush2.bf16.msra.mxu0 0
      %326 = vmatprep.mubr.bf16.mxu0 0
      %327 = vmatmul.mubr.bf16.gmra.mxu0 %v292
      %v328 = vpop.f32.mrf.mxu0
      %v329 = vadd.f32 %v288, %v328
      %v330 = vpop.f32.mrf.mxu0
      %v331 = vpop.f32.mrf.mxu0
      %v332 = vpop.f32.mrf.mxu0
      %333 = vdwg.mxu0
      %v334 = vpack.c.bf16 %v329, %v329
      %336 = vrot.lane.b32.xlu0 %v334, 96
      %v337 = vpop.permute.xlu0 %336
      %vm338 = vcmask 64512
      %v340 = vsel %vm338, %v334, 0
      %v343 = vsel %vm338, %v337, 0
      %345 = vmatprep.subr.bf16.mxu0 0
      %346 = vmatpush1.bf16.xpose.msra.mxu0 0
      %347 = vmatprep.subr.bf16.mxu0 0
      %348 = vmatpush1.bf16.xpose.msra.mxu0 0
      %349 = vmatprep.subr.bf16.mxu0 0
      %350 = vmatpush1.bf16.xpose.msra.mxu0 0
      %351 = vmatprep.subr.bf16.mxu0 0
      %352 = vmatpush1.bf16.xpose.msra.mxu0 0
      %353 = vmatprep.subr.bf16.mxu0 0
      %354 = vmatpush1.bf16.xpose.msra.mxu0 0
      %355 = vmatprep.subr.bf16.mxu0 0
      %356 = vmatpush1.bf16.xpose.msra.mxu0 0
      %357 = vmatprep.subr.bf16.mxu0 0
      %358 = vmatpush1.bf16.xpose.msra.mxu0 0
      %359 = vmatprep.subr.bf16.mxu0 0
      %360 = vmatpush1.bf16.xpose.msra.mxu0 %v343
      %361 = vmatprep.subr.bf16.mxu0 0
      %362 = vmatpush2.bf16.xpose.msra.mxu0 0
      %363 = vmatprep.subr.bf16.mxu0 0
      %364 = vmatpush2.bf16.xpose.msra.mxu0 0
      %365 = vmatprep.subr.bf16.mxu0 0
      %366 = vmatpush2.bf16.xpose.msra.mxu0 0
      %367 = vmatprep.subr.bf16.mxu0 0
      %368 = vmatpush2.bf16.xpose.msra.mxu0 0
      %369 = vmatprep.subr.bf16.mxu0 0
      %370 = vmatpush2.bf16.xpose.msra.mxu0 0
      %371 = vmatprep.subr.bf16.mxu0 0
      %372 = vmatpush2.bf16.xpose.msra.mxu0 0
      %373 = vmatprep.subr.bf16.mxu0 0
      %374 = vmatpush2.bf16.xpose.msra.mxu0 0
      %375 = vmatprep.subr.bf16.mxu0 0
      %376 = vmatpush2.bf16.xpose.msra.mxu0 0
      %377 = vmatprep.mubr.bf16.mxu0 0
      %378 = vmatmul.mubr.bf16.gmra.mxu0 %v340
      %v379 = vpop.f32.mrf.mxu0
      %v380 = vadd.f32 0.0, %v379
      %v381 = vpop.f32.mrf.mxu0
      %v382 = vpop.f32.mrf.mxu0
      %v383 = vpop.f32.mrf.mxu0
      %384 = vdwg.mxu0
      %v385 = vmul.f32 %v380, 0.35355338
      %v386 = vsel %vm338, %v385, -inf
      %387 = vmax.xlane.f32.xlu0 %v386
      %v388 = vpop.xlane.xlu0 %387
      %v389 = vsub.f32 %v385, %v388
      %v390 = vmul.f32 %v389, 1.442695
      %v391 = vpow.pop %v390
      %v392 = vsel %vm338, %v391, 0.0
      %393 = vadd.xlane.f32.xlu0 %v392
      %v394 = vpop.xlane.xlu0 %393
      %v395 = vrcp.pop %v394
      %v396 = vmul.f32 %v391, %v395
      %v397 = vpack.c.bf16 %v396, %v396
      %398 = vrot.lane.b32.xlu0 %v334, 64
      %v399 = vpop.permute.xlu0 %398
      %v401 = vsel %vm338, %v397, 0
      %vm403 = vcmask 1043456
      %v405 = vsel %vm403, %v399, 0
      %407 = vmatprep.subr.bf16.mxu0 0
      %408 = vmatpush1.bf16.msra.mxu0 0
      %409 = vmatprep.subr.bf16.mxu0 0
      %410 = vmatpush1.bf16.msra.mxu0 0
      %411 = vmatprep.subr.bf16.mxu0 0
      %412 = vmatpush1.bf16.msra.mxu0 0
      %413 = vmatprep.subr.bf16.mxu0 0
      %414 = vmatpush1.bf16.msra.mxu0 0
      %415 = vmatprep.subr.bf16.mxu0 0
      %416 = vmatpush1.bf16.msra.mxu0 0
      %417 = vmatprep.subr.bf16.mxu0 0
      %418 = vmatpush1.bf16.msra.mxu0 0
      %419 = vmatprep.subr.bf16.mxu0 0
      %420 = vmatpush1.bf16.msra.mxu0 0
      %421 = vmatprep.subr.bf16.mxu0 0
      %422 = vmatpush1.bf16.msra.mxu0 %v405
      %423 = vmatprep.subr.bf16.mxu0 0
      %424 = vmatpush2.bf16.msra.mxu0 0
      %425 = vmatprep.subr.bf16.mxu0 0
      %426 = vmatpush2.bf16.msra.mxu0 0
      %427 = vmatprep.subr.bf16.mxu0 0
      %428 = vmatpush2.bf16.msra.mxu0 0
      %429 = vmatprep.subr.bf16.mxu0 0
      %430 = vmatpush2.bf16.msra.mxu0 0
      %431 = vmatprep.subr.bf16.mxu0 0
      %432 = vmatpush2.bf16.msra.mxu0 0
      %433 = vmatprep.subr.bf16.mxu0 0
      %434 = vmatpush2.bf16.msra.mxu0 0
      %435 = vmatprep.subr.bf16.mxu0 0
      %436 = vmatpush2.bf16.msra.mxu0 0
      %437 = vmatprep.subr.bf16.mxu0 0
      %438 = vmatpush2.bf16.msra.mxu0 0
      %439 = vmatprep.mubr.bf16.mxu0 0
      %440 = vmatmul.mubr.bf16.gmra.mxu0 %v401
      %v441 = vpop.f32.mrf.mxu0
      %v442 = vadd.f32 0.0, %v441
      %v443 = vpop.f32.mrf.mxu0
      %v444 = vpop.f32.mrf.mxu0
      %v445 = vpop.f32.mrf.mxu0
      %446 = vdwg.mxu0
      %447 = vrot.lane.b32.xlu0 %v334, 120
      %v448 = vpop.permute.xlu0 %447
      %449 = vrot.lane.b32.xlu0 %v334, 88
      %v450 = vpop.permute.xlu0 %449
      %v452 = vsel %vm338, %v448, 0
      %v455 = vsel %vm338, %v450, 0
      %457 = vmatprep.subr.bf16.mxu0 0
      %458 = vmatpush1.bf16.xpose.msra.mxu0 0
      %459 = vmatprep.subr.bf16.mxu0 0
      %460 = vmatpush1.bf16.xpose.msra.mxu0 0
      %461 = vmatprep.subr.bf16.mxu0 0
      %462 = vmatpush1.bf16.xpose.msra.mxu0 0
      %463 = vmatprep.subr.bf16.mxu0 0
      %464 = vmatpush1.bf16.xpose.msra.mxu0 0
      %465 = vmatprep.subr.bf16.mxu0 0
      %466 = vmatpush1.bf16.xpose.msra.mxu0 0
      %467 = vmatprep.subr.bf16.mxu0 0
      %468 = vmatpush1.bf16.xpose.msra.mxu0 0
      %469 = vmatprep.subr.bf16.mxu0 0
      %470 = vmatpush1.bf16.xpose.msra.mxu0 0
      %471 = vmatprep.subr.bf16.mxu0 0
      %472 = vmatpush1.bf16.xpose.msra.mxu0 %v455
      %473 = vmatprep.subr.bf16.mxu0 0
      %474 = vmatpush2.bf16.xpose.msra.mxu0 0
      %475 = vmatprep.subr.bf16.mxu0 0
      %476 = vmatpush2.bf16.xpose.msra.mxu0 0
      %477 = vmatprep.subr.bf16.mxu0 0
      %478 = vmatpush2.bf16.xpose.msra.mxu0 0
      %479 = vmatprep.subr.bf16.mxu0 0
      %480 = vmatpush2.bf16.xpose.msra.mxu0 0
      %481 = vmatprep.subr.bf16.mxu0 0
      %482 = vmatpush2.bf16.xpose.msra.mxu0 0
      %483 = vmatprep.subr.bf16.mxu0 0
      %484 = vmatpush2.bf16.xpose.msra.mxu0 0
      %485 = vmatprep.subr.bf16.mxu0 0
      %486 = vmatpush2.bf16.xpose.msra.mxu0 0
      %487 = vmatprep.subr.bf16.mxu0 0
      %488 = vmatpush2.bf16.xpose.msra.mxu0 0
      %489 = vmatprep.mubr.bf16.mxu0 0
      %490 = vmatmul.mubr.bf16.gmra.mxu0 %v452
      %v491 = vpop.f32.mrf.mxu0
      %v492 = vadd.f32 0.0, %v491
      %v493 = vpop.f32.mrf.mxu0
      %v494 = vpop.f32.mrf.mxu0
      %v495 = vpop.f32.mrf.mxu0
      %496 = vdwg.mxu0
      %v497 = vmul.f32 %v492, 0.35355338
      %v498 = vsel %vm338, %v497, -inf
      %499 = vmax.xlane.f32.xlu0 %v498
      %v500 = vpop.xlane.xlu0 %499
      %v501 = vsub.f32 %v497, %v500
      %v502 = vmul.f32 %v501, 1.442695
      %v503 = vpow.pop %v502
      %v504 = vsel %vm338, %v503, 0.0
      %505 = vadd.xlane.f32.xlu0 %v504
      %v506 = vpop.xlane.xlu0 %505
      %v507 = vrcp.pop %v506
      %v508 = vmul.f32 %v503, %v507
      %v509 = vpack.c.bf16 %v508, %v508
      %510 = vrot.lane.b32.xlu0 %v334, 56
      %v511 = vpop.permute.xlu0 %510
      %v513 = vsel %vm338, %v509, 0
      %v516 = vsel %vm403, %v511, 0
      %518 = vmatprep.subr.bf16.mxu0 0
      %519 = vmatpush1.bf16.msra.mxu0 0
      %520 = vmatprep.subr.bf16.mxu0 0
      %521 = vmatpush1.bf16.msra.mxu0 0
      %522 = vmatprep.subr.bf16.mxu0 0
      %523 = vmatpush1.bf16.msra.mxu0 0
      %524 = vmatprep.subr.bf16.mxu0 0
      %525 = vmatpush1.bf16.msra.mxu0 0
      %526 = vmatprep.subr.bf16.mxu0 0
      %527 = vmatpush1.bf16.msra.mxu0 0
      %528 = vmatprep.subr.bf16.mxu0 0
      %529 = vmatpush1.bf16.msra.mxu0 0
      %530 = vmatprep.subr.bf16.mxu0 0
      %531 = vmatpush1.bf16.msra.mxu0 0
      %532 = vmatprep.subr.bf16.mxu0 0
      %533 = vmatpush1.bf16.msra.mxu0 %v516
      %534 = vmatprep.subr.bf16.mxu0 0
      %535 = vmatpush2.bf16.msra.mxu0 0
      %536 = vmatprep.subr.bf16.mxu0 0
      %537 = vmatpush2.bf16.msra.mxu0 0
      %538 = vmatprep.subr.bf16.mxu0 0
      %539 = vmatpush2.bf16.msra.mxu0 0
      %540 = vmatprep.subr.bf16.mxu0 0
      %541 = vmatpush2.bf16.msra.mxu0 0
      %542 = vmatprep.subr.bf16.mxu0 0
      %543 = vmatpush2.bf16.msra.mxu0 0
      %544 = vmatprep.subr.bf16.mxu0 0
      %545 = vmatpush2.bf16.msra.mxu0 0
      %546 = vmatprep.subr.bf16.mxu0 0
      %547 = vmatpush2.bf16.msra.mxu0 0
      %548 = vmatprep.subr.bf16.mxu0 0
      %549 = vmatpush2.bf16.msra.mxu0 0
      %550 = vmatprep.mubr.bf16.mxu0 0
      %551 = vmatmul.mubr.bf16.gmra.mxu0 %v513
      %v552 = vpop.f32.mrf.mxu0
      %v553 = vadd.f32 0.0, %v552
      %v554 = vpop.f32.mrf.mxu0
      %v555 = vpop.f32.mrf.mxu0
      %v556 = vpop.f32.mrf.mxu0
      %557 = vdwg.mxu0
      %558 = vrot.lane.b32.xlu0 %v334, 112
      %v559 = vpop.permute.xlu0 %558
      %560 = vrot.lane.b32.xlu0 %v334, 80
      %v561 = vpop.permute.xlu0 %560
      %v563 = vsel %vm338, %v559, 0
      %v566 = vsel %vm338, %v561, 0
      %568 = vmatprep.subr.bf16.mxu0 0
      %569 = vmatpush1.bf16.xpose.msra.mxu0 0
      %570 = vmatprep.subr.bf16.mxu0 0
      %571 = vmatpush1.bf16.xpose.msra.mxu0 0
      %572 = vmatprep.subr.bf16.mxu0 0
      %573 = vmatpush1.bf16.xpose.msra.mxu0 0
      %574 = vmatprep.subr.bf16.mxu0 0
      %575 = vmatpush1.bf16.xpose.msra.mxu0 0
      %576 = vmatprep.subr.bf16.mxu0 0
      %577 = vmatpush1.bf16.xpose.msra.mxu0 0
      %578 = vmatprep.subr.bf16.mxu0 0
      %579 = vmatpush1.bf16.xpose.msra.mxu0 0
      %580 = vmatprep.subr.bf16.mxu0 0
      %581 = vmatpush1.bf16.xpose.msra.mxu0 0
      %582 = vmatprep.subr.bf16.mxu0 0
      %583 = vmatpush1.bf16.xpose.msra.mxu0 %v566
      %584 = vmatprep.subr.bf16.mxu0 0
      %585 = vmatpush2.bf16.xpose.msra.mxu0 0
      %586 = vmatprep.subr.bf16.mxu0 0
      %587 = vmatpush2.bf16.xpose.msra.mxu0 0
      %588 = vmatprep.subr.bf16.mxu0 0
      %589 = vmatpush2.bf16.xpose.msra.mxu0 0
      %590 = vmatprep.subr.bf16.mxu0 0
      %591 = vmatpush2.bf16.xpose.msra.mxu0 0
      %592 = vmatprep.subr.bf16.mxu0 0
      %593 = vmatpush2.bf16.xpose.msra.mxu0 0
      %594 = vmatprep.subr.bf16.mxu0 0
      %595 = vmatpush2.bf16.xpose.msra.mxu0 0
      %596 = vmatprep.subr.bf16.mxu0 0
      %597 = vmatpush2.bf16.xpose.msra.mxu0 0
      %598 = vmatprep.subr.bf16.mxu0 0
      %599 = vmatpush2.bf16.xpose.msra.mxu0 0
      %600 = vmatprep.mubr.bf16.mxu0 0
      %601 = vmatmul.mubr.bf16.gmra.mxu0 %v563
      %v602 = vpop.f32.mrf.mxu0
      %v603 = vadd.f32 0.0, %v602
      %v604 = vpop.f32.mrf.mxu0
      %v605 = vpop.f32.mrf.mxu0
      %v606 = vpop.f32.mrf.mxu0
      %607 = vdwg.mxu0
      %v608 = vmul.f32 %v603, 0.35355338
      %v609 = vsel %vm338, %v608, -inf
      %610 = vmax.xlane.f32.xlu0 %v609
      %v611 = vpop.xlane.xlu0 %610
      %v612 = vsub.f32 %v608, %v611
      %v613 = vmul.f32 %v612, 1.442695
      %v614 = vpow.pop %v613
      %v615 = vsel %vm338, %v614, 0.0
      %616 = vadd.xlane.f32.xlu0 %v615
      %v617 = vpop.xlane.xlu0 %616
      %v618 = vrcp.pop %v617
      %v619 = vmul.f32 %v614, %v618
      %v620 = vpack.c.bf16 %v619, %v619
      %621 = vrot.lane.b32.xlu0 %v334, 48
      %v622 = vpop.permute.xlu0 %621
      %v624 = vsel %vm338, %v620, 0
      %v627 = vsel %vm403, %v622, 0
      %629 = vmatprep.subr.bf16.mxu0 0
      %630 = vmatpush1.bf16.msra.mxu0 0
      %631 = vmatprep.subr.bf16.mxu0 0
      %632 = vmatpush1.bf16.msra.mxu0 0
      %633 = vmatprep.subr.bf16.mxu0 0
      %634 = vmatpush1.bf16.msra.mxu0 0
      %635 = vmatprep.subr.bf16.mxu0 0
      %636 = vmatpush1.bf16.msra.mxu0 0
      %637 = vmatprep.subr.bf16.mxu0 0
      %638 = vmatpush1.bf16.msra.mxu0 0
      %639 = vmatprep.subr.bf16.mxu0 0
      %640 = vmatpush1.bf16.msra.mxu0 0
      %641 = vmatprep.subr.bf16.mxu0 0
      %642 = vmatpush1.bf16.msra.mxu0 0
      %643 = vmatprep.subr.bf16.mxu0 0
      %644 = vmatpush1.bf16.msra.mxu0 %v627
      %645 = vmatprep.subr.bf16.mxu0 0
      %646 = vmatpush2.bf16.msra.mxu0 0
      %647 = vmatprep.subr.bf16.mxu0 0
      %648 = vmatpush2.bf16.msra.mxu0 0
      %649 = vmatprep.subr.bf16.mxu0 0
      %650 = vmatpush2.bf16.msra.mxu0 0
      %651 = vmatprep.subr.bf16.mxu0 0
      %652 = vmatpush2.bf16.msra.mxu0 0
      %653 = vmatprep.subr.bf16.mxu0 0
      %654 = vmatpush2.bf16.msra.mxu0 0
      %655 = vmatprep.subr.bf16.mxu0 0
      %656 = vmatpush2.bf16.msra.mxu0 0
      %657 = vmatprep.subr.bf16.mxu0 0
      %658 = vmatpush2.bf16.msra.mxu0 0
      %659 = vmatprep.subr.bf16.mxu0 0
      %660 = vmatpush2.bf16.msra.mxu0 0
      %661 = vmatprep.mubr.bf16.mxu0 0
      %662 = vmatmul.mubr.bf16.gmra.mxu0 %v624
      %v663 = vpop.f32.mrf.mxu0
      %v664 = vadd.f32 0.0, %v663
      %v665 = vpop.f32.mrf.mxu0
      %v666 = vpop.f32.mrf.mxu0
      %v667 = vpop.f32.mrf.mxu0
      %668 = vdwg.mxu0
      %669 = vrot.lane.b32.xlu0 %v334, 104
      %v670 = vpop.permute.xlu0 %669
      %671 = vrot.lane.b32.xlu0 %v334, 72
      %v672 = vpop.permute.xlu0 %671
      %v674 = vsel %vm338, %v670, 0
      %v677 = vsel %vm338, %v672, 0
      %679 = vmatprep.subr.bf16.mxu0 0
      %680 = vmatpush1.bf16.xpose.msra.mxu0 0
      %681 = vmatprep.subr.bf16.mxu0 0
      %682 = vmatpush1.bf16.xpose.msra.mxu0 0
      %683 = vmatprep.subr.bf16.mxu0 0
      %684 = vmatpush1.bf16.xpose.msra.mxu0 0
      %685 = vmatprep.subr.bf16.mxu0 0
      %686 = vmatpush1.bf16.xpose.msra.mxu0 0
      %687 = vmatprep.subr.bf16.mxu0 0
      %688 = vmatpush1.bf16.xpose.msra.mxu0 0
      %689 = vmatprep.subr.bf16.mxu0 0
      %690 = vmatpush1.bf16.xpose.msra.mxu0 0
      %691 = vmatprep.subr.bf16.mxu0 0
      %692 = vmatpush1.bf16.xpose.msra.mxu0 0
      %693 = vmatprep.subr.bf16.mxu0 0
      %694 = vmatpush1.bf16.xpose.msra.mxu0 %v677
      %695 = vmatprep.subr.bf16.mxu0 0
      %696 = vmatpush2.bf16.xpose.msra.mxu0 0
      %697 = vmatprep.subr.bf16.mxu0 0
      %698 = vmatpush2.bf16.xpose.msra.mxu0 0
      %699 = vmatprep.subr.bf16.mxu0 0
      %700 = vmatpush2.bf16.xpose.msra.mxu0 0
      %701 = vmatprep.subr.bf16.mxu0 0
      %702 = vmatpush2.bf16.xpose.msra.mxu0 0
      %703 = vmatprep.subr.bf16.mxu0 0
      %704 = vmatpush2.bf16.xpose.msra.mxu0 0
      %705 = vmatprep.subr.bf16.mxu0 0
      %706 = vmatpush2.bf16.xpose.msra.mxu0 0
      %707 = vmatprep.subr.bf16.mxu0 0
      %708 = vmatpush2.bf16.xpose.msra.mxu0 0
      %709 = vmatprep.subr.bf16.mxu0 0
      %710 = vmatpush2.bf16.xpose.msra.mxu0 0
      %711 = vmatprep.mubr.bf16.mxu0 0
      %712 = vmatmul.mubr.bf16.gmra.mxu0 %v674
      %v713 = vpop.f32.mrf.mxu0
      %v714 = vadd.f32 0.0, %v713
      %v715 = vpop.f32.mrf.mxu0
      %v716 = vpop.f32.mrf.mxu0
      %v717 = vpop.f32.mrf.mxu0
      %718 = vdwg.mxu0
      %v719 = vmul.f32 %v714, 0.35355338
      %v720 = vsel %vm338, %v719, -inf
      %721 = vmax.xlane.f32.xlu0 %v720
      %v722 = vpop.xlane.xlu0 %721
      %v723 = vsub.f32 %v719, %v722
      %v724 = vmul.f32 %v723, 1.442695
      %v725 = vpow.pop %v724
      %v726 = vsel %vm338, %v725, 0.0
      %727 = vadd.xlane.f32.xlu0 %v726
      %v728 = vpop.xlane.xlu0 %727
      %v729 = vrcp.pop %v728
      %v730 = vmul.f32 %v725, %v729
      %v731 = vpack.c.bf16 %v730, %v730
      %732 = vrot.lane.b32.xlu0 %v334, 40
      %v733 = vpop.permute.xlu0 %732
      %v735 = vsel %vm338, %v731, 0
      %v738 = vsel %vm403, %v733, 0
      %740 = vmatprep.subr.bf16.mxu0 0
      %741 = vmatpush1.bf16.msra.mxu0 0
      %742 = vmatprep.subr.bf16.mxu0 0
      %743 = vmatpush1.bf16.msra.mxu0 0
      %744 = vmatprep.subr.bf16.mxu0 0
      %745 = vmatpush1.bf16.msra.mxu0 0
      %746 = vmatprep.subr.bf16.mxu0 0
      %747 = vmatpush1.bf16.msra.mxu0 0
      %748 = vmatprep.subr.bf16.mxu0 0
      %749 = vmatpush1.bf16.msra.mxu0 0
      %750 = vmatprep.subr.bf16.mxu0 0
      %751 = vmatpush1.bf16.msra.mxu0 0
      %752 = vmatprep.subr.bf16.mxu0 0
      %753 = vmatpush1.bf16.msra.mxu0 0
      %754 = vmatprep.subr.bf16.mxu0 0
      %755 = vmatpush1.bf16.msra.mxu0 %v738
      %756 = vmatprep.subr.bf16.mxu0 0
      %757 = vmatpush2.bf16.msra.mxu0 0
      %758 = vmatprep.subr.bf16.mxu0 0
      %759 = vmatpush2.bf16.msra.mxu0 0
      %760 = vmatprep.subr.bf16.mxu0 0
      %761 = vmatpush2.bf16.msra.mxu0 0
      %762 = vmatprep.subr.bf16.mxu0 0
      %763 = vmatpush2.bf16.msra.mxu0 0
      %764 = vmatprep.subr.bf16.mxu0 0
      %765 = vmatpush2.bf16.msra.mxu0 0
      %766 = vmatprep.subr.bf16.mxu0 0
      %767 = vmatpush2.bf16.msra.mxu0 0
      %768 = vmatprep.subr.bf16.mxu0 0
      %769 = vmatpush2.bf16.msra.mxu0 0
      %770 = vmatprep.subr.bf16.mxu0 0
      %771 = vmatpush2.bf16.msra.mxu0 0
      %772 = vmatprep.mubr.bf16.mxu0 0
      %773 = vmatmul.mubr.bf16.gmra.mxu0 %v735
      %v774 = vpop.f32.mrf.mxu0
      %v775 = vadd.f32 0.0, %v774
      %v776 = vpop.f32.mrf.mxu0
      %v777 = vpop.f32.mrf.mxu0
      %v778 = vpop.f32.mrf.mxu0
      %779 = vdwg.mxu0
      %781 = vrot.lane.b32.xlu0 %v553, 8
      %v782 = vpop.permute.xlu0 %781
      %785 = vrot.lane.b32.xlu0 %v664, 16
      %v786 = vpop.permute.xlu0 %785
      %789 = vrot.lane.b32.xlu0 %v775, 24
      %v790 = vpop.permute.xlu0 %789
      %v792 = vsel %vm338, %v442, %v782
      %vm793 = vcmask 130048
      %v794 = vsel %vm793, %v792, %v786
      %vm795 = vcmask 195584
      %v796 = vsel %vm795, %v794, %v790
      %v797 = vld [vmem:[%s3] sm:$0xff]
      %v798 = vld [vmem:[%s3 + $0x8] sm:$0xff]
      %v799 = vld [vmem:[%s3 + $0x10] sm:$0xff]
      %v800 = vld [vmem:[%s3 + $0x18] sm:$0xff]
      %v801 = vpack.c.bf16 %v796, %v796
      %v802 = vpack.c.bf16 %v798, %v797
      %v803 = vpack.c.bf16 %v800, %v799
      %v804 = vld [vmem:[%s4] sm:$0x1]
      %v806 = vlaneseq
      %v807 = vshrl.u32 %v806, 7
      %v808 = vsub.s32 0, %v807
      %v809 = vrot.slane %v804, %v808
      %v812 = vsel %vm290, %v801, 0
      %814 = vmatprep.subr.bf16.mxu0 0
      %815 = vmatpush1.bf16.msra.mxu0 0
      %816 = vmatprep.subr.bf16.mxu0 0
      %817 = vmatpush1.bf16.msra.mxu0 0
      %818 = vmatprep.subr.bf16.mxu0 0
      %819 = vmatpush1.bf16.msra.mxu0 0
      %820 = vmatprep.subr.bf16.mxu0 0
      %821 = vmatpush1.bf16.msra.mxu0 0
      %822 = vmatprep.subr.bf16.mxu0 0
      %823 = vmatpush1.bf16.msra.mxu0 0
      %824 = vmatprep.subr.bf16.mxu0 0
      %825 = vmatpush1.bf16.msra.mxu0 0
      %826 = vmatprep.subr.bf16.mxu0 0
      %827 = vmatpush1.bf16.msra.mxu0 %v803
      %828 = vmatprep.subr.bf16.mxu0 0
      %829 = vmatpush1.bf16.msra.mxu0 %v802
      %830 = vmatprep.subr.bf16.mxu0 0
      %831 = vmatpush2.bf16.msra.mxu0 0
      %832 = vmatprep.subr.bf16.mxu0 0
      %833 = vmatpush2.bf16.msra.mxu0 0
      %834 = vmatprep.subr.bf16.mxu0 0
      %835 = vmatpush2.bf16.msra.mxu0 0
      %836 = vmatprep.subr.bf16.mxu0 0
      %837 = vmatpush2.bf16.msra.mxu0 0
      %838 = vmatprep.subr.bf16.mxu0 0
      %839 = vmatpush2.bf16.msra.mxu0 0
      %840 = vmatprep.subr.bf16.mxu0 0
      %841 = vmatpush2.bf16.msra.mxu0 0
      %842 = vmatprep.subr.bf16.mxu0 0
      %843 = vmatpush2.bf16.msra.mxu0 0
      %844 = vmatprep.subr.bf16.mxu0 0
      %845 = vmatpush2.bf16.msra.mxu0 0
      %846 = vmatprep.mubr.bf16.mxu0 0
      %847 = vmatmul.mubr.bf16.gmra.mxu0 %v812
      %v848 = vpop.f32.mrf.mxu0
      %v849 = vadd.f32 %v809, %v848
      %v850 = vpop.f32.mrf.mxu0
      %v851 = vpop.f32.mrf.mxu0
      %v852 = vpop.f32.mrf.mxu0
      %853 = vdwg.mxu0
      %v854 = vadd.f32 %v275, %v849
      %v855 = vld [vmem:[%s5] sm:$0x1]
      %v856 = vld [vmem:[%s6] sm:$0x1]
      %v857 = vsel %vm290, %v854, 0.0
      %858 = vadd.xlane.f32.xlu0 %v857
      %v859 = vpop.xlane.xlu0 %858
      %v860 = vrcp.pop 32.0
      %v861 = vmul.f32 %v859, %v860
      %v862 = vsub.f32 %v854, %v861
      %v863 = vmul.f32 %v862, %v862
      %v864 = vsel %vm290, %v863, 0.0
      %865 = vadd.xlane.f32.xlu0 %v864
      %v866 = vpop.xlane.xlu0 %865
      %v867 = vmul.f32 %v866, %v860
      %v868 = vadd.f32 %v867, 1e-05
      %v869 = vrsqrt.pop %v868
      %v870 = vmul.f32 %v862, %v869
      %v872 = vlaneseq
      %v873 = vshrl.u32 %v872, 7
      %v874 = vsub.s32 0, %v873
      %v875 = vrot.slane %v855, %v874
      %v877 = vmul.f32 %v870, %v875
      %v879 = vlaneseq
      %v880 = vshrl.u32 %v879, 7
      %v881 = vsub.s32 0, %v880
      %v882 = vrot.slane %v856, %v881
      %v884 = vadd.f32 %v877, %v882
      %885 = vst.msk [vmem:[%s273] sm:$0xff] %vm290, %v884
      %p886 = scmp.lt.s32.totalorder %s18, 1
      %s887 = scalar_select %p886, %s18, 1
      %s888 = smul.addr %s887, 8
      %s889 = scalar_lea.vmem %s7, %s888
      // Predicated region
      $region49: #{transformer_forward.12} parent=47 // pred_check
        %p890 = pneg %p188
      $region50: #{transformer_forward.12} parent=47 // pred_check_branch
        %892 = sbr.rel (%p890) target = $region52
      $region51: #{transformer_forward.12} parent=47 // pred_region
        _
      $region52: #{transformer_forward.12} parent=47 // pred_fallthru
        _
    $region48: #{transformer_forward.12} parent=5 // pred_fallthru
      _
    %p893 = scmp.le.s32.totalorder 2, %s13
    // Predicated region
    $region53: #{transformer_forward.12} parent=5 // pred_check
      %p894 = pneg %p893
    $region54: #{transformer_forward.12} parent=5 // pred_check_branch
      %896 = sbr.rel (%p894) target = $region56
    $region55: #{transformer_forward.12} parent=5 // pred_region
      %s897 = ssub.s32 %s13, 2
      // Predicated region
      $region57: #{transformer_forward.12} parent=55 // pred_check
        %p898 = pneg %p194
      $region58: #{transformer_forward.12} parent=55 // pred_check_branch
        %900 = sbr.rel (%p898) target = $region60
      $region59: #{transformer_forward.12} parent=55 // pred_region
        %p901 = scmp.lt.s32.totalorder %s19, 1
        %s902 = scalar_select %p901, %s19, 1
        %s903 = smul.addr %s902, 8
        %s904 = scalar_lea.vmem %s7, %s903
      $region60: #{transformer_forward.12} parent=55 // pred_fallthru
        _
    $region56: #{transformer_forward.12} parent=5 // pred_fallthru
      _
  $region6: #{transformer_forward.12} parent=0 // loop_footer
    %s17 = sadd.s32 1, %s13
  $region7: #{transformer_forward.12} parent=0 // loop_footer_branch
    %12 = sbr.rel target = $region3
  $region8: #{transformer_forward.12} parent=0 // loop_exit
    _

// kernel: transformer_forward.17
$region0: #{transformer_forward.17}
  #allocation0 [shape = 'u32[]', space=smem, size = 0x4, offset = 0x4, fixed_abs, tag = 'smem constant byte address 0x4 - core index']
  #allocation1 [shape = 'u32[144,128]{1,0:T(1,128)}', space=vmem, size = 0x12000, scoped, tag = 'internal scratch']
  %s0 = inlined_call_operand.vmem [shape: f32[2,8,32], index: 0, kind: input, shape index: {}]
  %s1 = inlined_call_operand.vmem [shape: f32[32,96], index: 1, kind: input, shape index: {}]
  %s2 = inlined_call_operand.vmem [shape: f32[1,96], index: 2, kind: input, shape index: {}]
  %s3 = inlined_call_operand.vmem [shape: f32[32,32], index: 3, kind: input, shape index: {}]
  %s4 = inlined_call_operand.vmem [shape: f32[1,32], index: 4, kind: input, shape index: {}]
  %s5 = inlined_call_operand.vmem [shape: f32[1,32], index: 5, kind: input, shape index: {}]
  %s6 = inlined_call_operand.vmem [shape: f32[1,32], index: 6, kind: input, shape index: {}]
  %s7 = inlined_call_operand.vmem [shape: f32[8,8], index: 7, kind: input, shape index: {}]
  %s8 = inlined_call_operand.vmem [shape: f32[2,8,32], index: 8, kind: output, shape index: {}]
  %s9 = sld [smem:[#allocation0]]
  $region65: #{transformer_forward.17} parent=0
    _
  %s11 = ssub.s32 1, %s9
  %s12 = scalar_select 0, %s11, %s9
  loop: start=0, step=1, limit=4
  $region2: #{transformer_forward.17} parent=0 // loop_pre_header
    _
  $region3: #{transformer_forward.17} parent=0 // loop_header
    %s14 = sphi 0, %s18
    %p15 = scmp.ge.s32.totalorder %s14, 4
    %s24 = sphi 0, %s26
    %s27 = sphi 0, %s24
    %s28 = sphi 0, %s27
    %s44 = sphi 0, %s28
    %s48 = sphi 0, %s48
    %s50 = sphi 0, %s48
    %s51 = sphi 0, %s50
    %s65 = sphi 0, %s51
    %s69 = sphi 0, %s69
    %s71 = sphi 0, %s69
    %s72 = sphi 0, %s71
    %s86 = sphi 0, %s72
    %s90 = sphi 0, %s90
    %s92 = sphi 0, %s90
    %s93 = sphi 0, %s92
    %s107 = sphi 0, %s93
    %s111 = sphi 0, %s111
    %s113 = sphi 0, %s111
    %s114 = sphi 0, %s113
    %s128 = sphi 0, %s114
    %s132 = sphi 0, %s132
    %s134 = sphi 0, %s132
    %s135 = sphi 0, %s134
    %s149 = sphi 0, %s135
    %s153 = sphi 0, %s153
    %s155 = sphi 0, %s153
    %s156 = sphi 0, %s155
    %s170 = sphi 0, %s156
    %s174 = sphi 0, %s174
    %s176 = sphi 0, %s174
    %s177 = sphi 0, %s176
    %s191 = sphi 0, %s177
    %s197 = sphi 0, %s199
    %s200 = sphi 0, %s197
    %s201 = sphi 0, %s200
    %s217 = sphi 0, %s201
  $region4: #{transformer_forward.17} parent=0 // loop_header_branch
    %17 = sbr.rel (%p15) target = $region8
  $region5: #{transformer_forward.17} parent=0 // loop_body
    %s19 = ssub.s32 %s14, 1
    %s20 = ssub.s32 %s14, 2
    %s21 = sadd.s32 %s14, 1
    %s22 = ssub.s32 %s14, %s21
    %p23 = scmp.eq.s32.totalorder %s22, 0
    %s25 = sadd.s32 %s24, 1
    %s26 = scalar_select %p23, %s24, %s25
    %p29 = pneg %p23
    %p30 = scmp.eq.s32.totalorder %s14, 1
    %p31 = por %p29, %p30
    %p32 = scmp.ne.s32.totalorder %s24, %s27
    %p33 = scmp.eq.s32.totalorder %s14, 0
    %p34 = por %p32, %p33
    %p35 = scmp.ne.s32.totalorder %s24, %s27
    %p36 = scmp.eq.s32.totalorder %s19, 1
    %p37 = por %p35, %p36
    %p38 = scmp.ne.s32.totalorder %s27, %s28
    %p39 = scmp.eq.s32.totalorder %s19, 0
    %p40 = por %p38, %p39
    %p41 = scmp.ne.s32.totalorder %s27, %s28
    %p42 = scmp.eq.s32.totalorder %s20, 1
    %p43 = por %p41, %p42
    %p45 = scmp.ne.s32.totalorder %s28, %s44
    %p46 = scmp.eq.s32.totalorder %s20, 0
    %p47 = por %p45, %p46
    %s49 = sadd.s32 %s48, 1
    %p52 = scmp.eq.s32.totalorder %s14, 1
    %p53 = scmp.ne.s32.totalorder %s48, %s50
    %p54 = scmp.eq.s32.totalorder %s14, 0
    %p55 = por %p53, %p54
    %p56 = scmp.ne.s32.totalorder %s48, %s50
    %p57 = scmp.eq.s32.totalorder %s19, 1
    %p58 = por %p56, %p57
    %p59 = scmp.ne.s32.totalorder %s50, %s51
    %p60 = scmp.eq.s32.totalorder %s19, 0
    %p61 = por %p59, %p60
    %p62 = scmp.ne.s32.totalorder %s50, %s51
    %p63 = scmp.eq.s32.totalorder %s20, 1
    %p64 = por %p62, %p63
    %p66 = scmp.ne.s32.totalorder %s51, %s65
    %p67 = scmp.eq.s32.totalorder %s20, 0
    %p68 = por %p66, %p67
    %s70 = sadd.s32 %s69, 1
    %p73 = scmp.eq.s32.totalorder %s14, 1
    %p74 = scmp.ne.s32.totalorder %s69, %s71
    %p75 = scmp.eq.s32.totalorder %s14, 0
    %p76 = por %p74, %p75
    %p77 = scmp.ne.s32.totalorder %s69, %s71
    %p78 = scmp.eq.s32.totalorder %s19, 1
    %p79 = por %p77, %p78
    %p80 = scmp.ne.s32.totalorder %s71, %s72
    %p81 = scmp.eq.s32.totalorder %s19, 0
    %p82 = por %p80, %p81
    %p83 = scmp.ne.s32.totalorder %s71, %s72
    %p84 = scmp.eq.s32.totalorder %s20, 1
    %p85 = por %p83, %p84
    %p87 = scmp.ne.s32.totalorder %s72, %s86
    %p88 = scmp.eq.s32.totalorder %s20, 0
    %p89 = por %p87, %p88
    %s91 = sadd.s32 %s90, 1
    %p94 = scmp.eq.s32.totalorder %s14, 1
    %p95 = scmp.ne.s32.totalorder %s90, %s92
    %p96 = scmp.eq.s32.totalorder %s14, 0
    %p97 = por %p95, %p96
    %p98 = scmp.ne.s32.totalorder %s90, %s92
    %p99 = scmp.eq.s32.totalorder %s19, 1
    %p100 = por %p98, %p99
    %p101 = scmp.ne.s32.totalorder %s92, %s93
    %p102 = scmp.eq.s32.totalorder %s19, 0
    %p103 = por %p101, %p102
    %p104 = scmp.ne.s32.totalorder %s92, %s93
    %p105 = scmp.eq.s32.totalorder %s20, 1
    %p106 = por %p104, %p105
    %p108 = scmp.ne.s32.totalorder %s93, %s107
    %p109 = scmp.eq.s32.totalorder %s20, 0
    %p110 = por %p108, %p109
    %s112 = sadd.s32 %s111, 1
    %p115 = scmp.eq.s32.totalorder %s14, 1
    %p116 = scmp.ne.s32.totalorder %s111, %s113
    %p117 = scmp.eq.s32.totalorder %s14, 0
    %p118 = por %p116, %p117
    %p119 = scmp.ne.s32.totalorder %s111, %s113
    %p120 = scmp.eq.s32.totalorder %s19, 1
    %p121 = por %p119, %p120
    %p122 = scmp.ne.s32.totalorder %s113, %s114
    %p123 = scmp.eq.s32.totalorder %s19, 0
    %p124 = por %p122, %p123
    %p125 = scmp.ne.s32.totalorder %s113, %s114
    %p126 = scmp.eq.s32.totalorder %s20, 1
    %p127 = por %p125, %p126
    %p129 = scmp.ne.s32.totalorder %s114, %s128
    %p130 = scmp.eq.s32.totalorder %s20, 0
    %p131 = por %p129, %p130
    %s133 = sadd.s32 %s132, 1
    %p136 = scmp.eq.s32.totalorder %s14, 1
    %p137 = scmp.ne.s32.totalorder %s132, %s134
    %p138 = scmp.eq.s32.totalorder %s14, 0
    %p139 = por %p137, %p138
    %p140 = scmp.ne.s32.totalorder %s132, %s134
    %p141 = scmp.eq.s32.totalorder %s19, 1
    %p142 = por %p140, %p141
    %p143 = scmp.ne.s32.totalorder %s134, %s135
    %p144 = scmp.eq.s32.totalorder %s19, 0
    %p145 = por %p143, %p144
    %p146 = scmp.ne.s32.totalorder %s134, %s135
    %p147 = scmp.eq.s32.totalorder %s20, 1
    %p148 = por %p146, %p147
    %p150 = scmp.ne.s32.totalorder %s135, %s149
    %p151 = scmp.eq.s32.totalorder %s20, 0
    %p152 = por %p150, %p151
    %s154 = sadd.s32 %s153, 1
    %p157 = scmp.eq.s32.totalorder %s14, 1
    %p158 = scmp.ne.s32.totalorder %s153, %s155
    %p159 = scmp.eq.s32.totalorder %s14, 0
    %p160 = por %p158, %p159
    %p161 = scmp.ne.s32.totalorder %s153, %s155
    %p162 = scmp.eq.s32.totalorder %s19, 1
    %p163 = por %p161, %p162
    %p164 = scmp.ne.s32.totalorder %s155, %s156
    %p165 = scmp.eq.s32.totalorder %s19, 0
    %p166 = por %p164, %p165
    %p167 = scmp.ne.s32.totalorder %s155, %s156
    %p168 = scmp.eq.s32.totalorder %s20, 1
    %p169 = por %p167, %p168
    %p171 = scmp.ne.s32.totalorder %s156, %s170
    %p172 = scmp.eq.s32.totalorder %s20, 0
    %p173 = por %p171, %p172
    %s175 = sadd.s32 %s174, 1
    %p178 = scmp.eq.s32.totalorder %s14, 1
    %p179 = scmp.ne.s32.totalorder %s174, %s176
    %p180 = scmp.eq.s32.totalorder %s14, 0
    %p181 = por %p179, %p180
    %p182 = scmp.ne.s32.totalorder %s174, %s176
    %p183 = scmp.eq.s32.totalorder %s19, 1
    %p184 = por %p182, %p183
    %p185 = scmp.ne.s32.totalorder %s176, %s177
    %p186 = scmp.eq.s32.totalorder %s19, 0
    %p187 = por %p185, %p186
    %p188 = scmp.ne.s32.totalorder %s176, %s177
    %p189 = scmp.eq.s32.totalorder %s20, 1
    %p190 = por %p188, %p189
    %p192 = scmp.ne.s32.totalorder %s177, %s191
    %p193 = scmp.eq.s32.totalorder %s20, 0
    %p194 = por %p192, %p193
    %s195 = ssub.s32 %s14, %s21
    %p196 = scmp.eq.s32.totalorder %s195, 0
    %s198 = sadd.s32 %s197, 1
    %s199 = scalar_select %p196, %s197, %s198
    %p202 = pneg %p196
    %p203 = scmp.eq.s32.totalorder %s14, 1
    %p204 = por %p202, %p203
    %p205 = scmp.ne.s32.totalorder %s197, %s200
    %p206 = scmp.eq.s32.totalorder %s14, 0
    %p207 = por %p205, %p206
    %p208 = scmp.ne.s32.totalorder %s197, %s200
    %p209 = scmp.eq.s32.totalorder %s19, 1
    %p210 = por %p208, %p209
    %p211 = scmp.ne.s32.totalorder %s200, %s201
    %p212 = scmp.eq.s32.totalorder %s19, 0
    %p213 = por %p211, %p212
    %p214 = scmp.ne.s32.totalorder %s200, %s201
    %p215 = scmp.eq.s32.totalorder %s20, 1
    %p216 = por %p214, %p215
    %p218 = scmp.ne.s32.totalorder %s201, %s217
    %p219 = scmp.eq.s32.totalorder %s20, 0
    %p220 = por %p218, %p219
    %p221 = scmp.le.s32.totalorder 1, %s14
    %p222 = scmp.lt.s32.totalorder %s14, 3
    %p223 = pnand %p221, %p222
    %p224 = pneg %p223
    // Predicated region
    $region9: #{transformer_forward.17} parent=5 // pred_check
      _
    $region10: #{transformer_forward.17} parent=5 // pred_check_branch
      %226 = sbr.rel (%p223) target = $region12
    $region11: #{transformer_forward.17} parent=5 // pred_region
      %s227 = ssub.s32 %s14, 1
      // Predicated region
      $region13: #{transformer_forward.17} parent=11 // pred_check
        %p228 = pneg %p61
      $region14: #{transformer_forward.17} parent=11 // pred_check_branch
        %230 = sbr.rel (%p228) target = $region16
      $region15: #{transformer_forward.17} parent=11 // pred_region
        _
      $region16: #{transformer_forward.17} parent=11 // pred_fallthru
        _
      // Predicated region
      $region17: #{transformer_forward.17} parent=11 // pred_check
        %p231 = pneg %p82
      $region18: #{transformer_forward.17} parent=11 // pred_check_branch
        %233 = sbr.rel (%p231) target = $region20
      $region19: #{transformer_forward.17} parent=11 // pred_region
        _
      $region20: #{transformer_forward.17} parent=11 // pred_fallthru
        _
      // Predicated region
      $region21: #{transformer_forward.17} parent=11 // pred_check
        %p234 = pneg %p103
      $region22: #{transformer_forward.17} parent=11 // pred_check_branch
        %236 = sbr.rel (%p234) target = $region24
      $region23: #{transformer_forward.17} parent=11 // pred_region
        _
      $region24: #{transformer_forward.17} parent=11 // pred_fallthru
        _
      // Predicated region
      $region25: #{transformer_forward.17} parent=11 // pred_check
        %p237 = pneg %p124
      $region26: #{transformer_forward.17} parent=11 // pred_check_branch
        %239 = sbr.rel (%p237) target = $region28
      $region27: #{transformer_forward.17} parent=11 // pred_region
        _
      $region28: #{transformer_forward.17} parent=11 // pred_fallthru
        _
      // Predicated region
      $region29: #{transformer_forward.17} parent=11 // pred_check
        %p240 = pneg %p145
      $region30: #{transformer_forward.17} parent=11 // pred_check_branch
        %242 = sbr.rel (%p240) target = $region32
      $region31: #{transformer_forward.17} parent=11 // pred_region
        _
      $region32: #{transformer_forward.17} parent=11 // pred_fallthru
        _
      // Predicated region
      $region33: #{transformer_forward.17} parent=11 // pred_check
        %p243 = pneg %p166
      $region34: #{transformer_forward.17} parent=11 // pred_check_branch
        %245 = sbr.rel (%p243) target = $region36
      $region35: #{transformer_forward.17} parent=11 // pred_region
        _
      $region36: #{transformer_forward.17} parent=11 // pred_fallthru
        _
      // Predicated region
      $region37: #{transformer_forward.17} parent=11 // pred_check
        %p246 = pneg %p187
      $region38: #{transformer_forward.17} parent=11 // pred_check_branch
        %248 = sbr.rel (%p246) target = $region40
      $region39: #{transformer_forward.17} parent=11 // pred_region
        _
      $region40: #{transformer_forward.17} parent=11 // pred_fallthru
        _
    $region12: #{transformer_forward.17} parent=5 // pred_fallthru
      _
    %p249 = scmp.lt.s32.totalorder %s14, 2
    // Predicated region
    $region41: #{transformer_forward.17} parent=5 // pred_check
      %p250 = pneg %p249
    $region42: #{transformer_forward.17} parent=5 // pred_check_branch
      %252 = sbr.rel (%p250) target = $region44
    $region43: #{transformer_forward.17} parent=5 // pred_region
      // Predicated region
      $region45: #{transformer_forward.17} parent=43 // pred_check
        %p253 = pneg %p34
      $region46: #{transformer_forward.17} parent=43 // pred_check_branch
        %255 = sbr.rel (%p253) target = $region48
      $region47: #{transformer_forward.17} parent=43 // pred_region
        %p256 = scmp.lt.s32.totalorder %s14, 1
        %s257 = scalar_select %p256, %s14, 1
        %s258 = smul.addr %s257, 8
        %s259 = scalar_lea.vmem %s0, %s258
      $region48: #{transformer_forward.17} parent=43 // pred_fallthru
        _
    $region44: #{transformer_forward.17} parent=5 // pred_fallthru
      _
    %p260 = scmp.le.s32.totalorder 1, %s14
    %p261 = scmp.lt.s32.totalorder %s14, 3
    %p262 = pnand %p260, %p261
    %p263 = pneg %p262
    // Predicated region
    $region49: #{transformer_forward.17} parent=5 // pred_check
      _
    $region50: #{transformer_forward.17} parent=5 // pred_check_branch
      %265 = sbr.rel (%p262) target = $region52
    $region51: #{transformer_forward.17} parent=5 // pred_region
      %s266 = ssub.s32 %s14, 1
      %p267 = scmp.lt.s32.totalorder %s19, 1
      %s268 = scalar_select %p267, %s19, 1
      %s269 = smul.addr %s268, 8
      %s270 = scalar_lea.vmem %s0, %s269
      %p271 = pneg %p40
      %p272 = pneg %p37
      %p273 = pneg %p61
      %p274 = pneg %p58
      %p275 = pneg %p82
      %p276 = pneg %p79
      %p277 = pneg %p103
      %p278 = pneg %p100
      %p279 = pneg %p124
      %p280 = pneg %p121
      %p281 = pneg %p145
      %p282 = pneg %p142
      %p283 = pneg %p166
      %p284 = pneg %p163
      %p285 = pneg %p187
      %p286 = pneg %p184
      %p287 = pneg %p213
      %p288 = pneg %p210
      %p289 = scmp.lt.s32.totalorder %s19, 1
      %s290 = scalar_select %p289, %s19, 1
      %s291 = smul.addr %s290, 8
      %s292 = scalar_lea.vmem %s8, %s291
      %p293 = scmp.lt.s32.totalorder %s19, 1
      %s294 = scalar_select %p293, %s19, 1
      %s295 = smul.addr %s294, 8
      %s296 = scalar_lea.vmem %s0, %s295
      %p297 = scmp.lt.s32.totalorder %s19, 1
      %s298 = scalar_select %p297, %s19, 1
      %s299 = smul.addr %s298, 8
      %s300 = scalar_lea.vmem %s8, %s299
      %v302 = vld [vmem:[%s296] sm:$0xff]
      %v303 = vld [vmem:[%s1] sm:$0xff]
      %v304 = vld [vmem:[%s1 + $0x8] sm:$0xff]
      %v305 = vld [vmem:[%s1 + $0x10] sm:$0xff]
      %v306 = vld [vmem:[%s1 + $0x18] sm:$0xff]
      %v307 = vpack.c.bf16 %v302, %v302
      %v308 = vpack.c.bf16 %v304, %v303
      %v309 = vpack.c.bf16 %v306, %v305
      %v310 = vld [vmem:[%s2] sm:$0x1]
      %v312 = vlaneseq
      %v313 = vshrl.u32 %v312, 7
      %v314 = vsub.s32 0, %v313
      %v315 = vrot.slane %v310, %v314
      %vm317 = vcmask 261120
      %v319 = vsel %vm317, %v307, 0
      %321 = vmatprep.subr.bf16.mxu0 0
      %322 = vmatpush1.bf16.msra.mxu0 0
      %323 = vmatprep.subr.bf16.mxu0 0
      %324 = vmatpush1.bf16.msra.mxu0 0
      %325 = vmatprep.subr.bf16.mxu0 0
      %326 = vmatpush1.bf16.msra.mxu0 0
      %327 = vmatprep.subr.bf16.mxu0 0
      %328 = vmatpush1.bf16.msra.mxu0 0
      %329 = vmatprep.subr.bf16.mxu0 0
      %330 = vmatpush1.bf16.msra.mxu0 0
      %331 = vmatprep.subr.bf16.mxu0 0
      %332 = vmatpush1.bf16.msra.mxu0 0
      %333 = vmatprep.subr.bf16.mxu0 0
      %334 = vmatpush1.bf16.msra.mxu0 %v309
      %335 = vmatprep.subr.bf16.mxu0 0
      %336 = vmatpush1.bf16.msra.mxu0 %v308
      %337 = vmatprep.subr.bf16.mxu0 0
      %338 = vmatpush2.bf16.msra.mxu0 0
      %339 = vmatprep.subr.bf16.mxu0 0
      %340 = vmatpush2.bf16.msra.mxu0 0
      %341 = vmatprep.subr.bf16.mxu0 0
      %342 = vmatpush2.bf16.msra.mxu0 0
      %343 = vmatprep.subr.bf16.mxu0 0
      %344 = vmatpush2.bf16.msra.mxu0 0
      %345 = vmatprep.subr.bf16.mxu0 0
      %346 = vmatpush2.bf16.msra.mxu0 0
      %347 = vmatprep.subr.bf16.mxu0 0
      %348 = vmatpush2.bf16.msra.mxu0 0
      %349 = vmatprep.subr.bf16.mxu0 0
      %350 = vmatpush2.bf16.msra.mxu0 0
      %351 = vmatprep.subr.bf16.mxu0 0
      %352 = vmatpush2.bf16.msra.mxu0 0
      %353 = vmatprep.mubr.bf16.mxu0 0
      %354 = vmatmul.mubr.bf16.gmra.mxu0 %v319
      %v355 = vpop.f32.mrf.mxu0
      %v356 = vadd.f32 %v315, %v355
      %v357 = vpop.f32.mrf.mxu0
      %v358 = vpop.f32.mrf.mxu0
      %v359 = vpop.f32.mrf.mxu0
      %360 = vdwg.mxu0
      %v361 = vpack.c.bf16 %v356, %v356
      %363 = vrot.lane.b32.xlu0 %v361, 96
      %v364 = vpop.permute.xlu0 %363
      %vm365 = vcmask 64512
      %v367 = vsel %vm365, %v361, 0
      %v370 = vsel %vm365, %v364, 0
      %372 = vmatprep.subr.bf16.mxu0 0
      %373 = vmatpush1.bf16.xpose.msra.mxu0 0
      %374 = vmatprep.subr.bf16.mxu0 0
      %375 = vmatpush1.bf16.xpose.msra.mxu0 0
      %376 = vmatprep.subr.bf16.mxu0 0
      %377 = vmatpush1.bf16.xpose.msra.mxu0 0
      %378 = vmatprep.subr.bf16.mxu0 0
      %379 = vmatpush1.bf16.xpose.msra.mxu0 0
      %380 = vmatprep.subr.bf16.mxu0 0
      %381 = vmatpush1.bf16.xpose.msra.mxu0 0
      %382 = vmatprep.subr.bf16.mxu0 0
      %383 = vmatpush1.bf16.xpose.msra.mxu0 0
      %384 = vmatprep.subr.bf16.mxu0 0
      %385 = vmatpush1.bf16.xpose.msra.mxu0 0
      %386 = vmatprep.subr.bf16.mxu0 0
      %387 = vmatpush1.bf16.xpose.msra.mxu0 %v370
      %388 = vmatprep.subr.bf16.mxu0 0
      %389 = vmatpush2.bf16.xpose.msra.mxu0 0
      %390 = vmatprep.subr.bf16.mxu0 0
      %391 = vmatpush2.bf16.xpose.msra.mxu0 0
      %392 = vmatprep.subr.bf16.mxu0 0
      %393 = vmatpush2.bf16.xpose.msra.mxu0 0
      %394 = vmatprep.subr.bf16.mxu0 0
      %395 = vmatpush2.bf16.xpose.msra.mxu0 0
      %396 = vmatprep.subr.bf16.mxu0 0
      %397 = vmatpush2.bf16.xpose.msra.mxu0 0
      %398 = vmatprep.subr.bf16.mxu0 0
      %399 = vmatpush2.bf16.xpose.msra.mxu0 0
      %400 = vmatprep.subr.bf16.mxu0 0
      %401 = vmatpush2.bf16.xpose.msra.mxu0 0
      %402 = vmatprep.subr.bf16.mxu0 0
      %403 = vmatpush2.bf16.xpose.msra.mxu0 0
      %404 = vmatprep.mubr.bf16.mxu0 0
      %405 = vmatmul.mubr.bf16.gmra.mxu0 %v367
      %v406 = vpop.f32.mrf.mxu0
      %v407 = vadd.f32 0.0, %v406
      %v408 = vpop.f32.mrf.mxu0
      %v409 = vpop.f32.mrf.mxu0
      %v410 = vpop.f32.mrf.mxu0
      %411 = vdwg.mxu0
      %v412 = vmul.f32 %v407, 0.35355338
      %v413 = vld [vmem:[%s7] sm:$0xff]
      %v414 = vadd.f32 %v412, %v413
      %v415 = vsel %vm365, %v414, -inf
      %416 = vmax.xlane.f32.xlu0 %v415
      %v417 = vpop.xlane.xlu0 %416
      %v418 = vsub.f32 %v414, %v417
      %v419 = vmul.f32 %v418, 1.442695
      %v420 = vpow.pop %v419
      %v421 = vsel %vm365, %v420, 0.0
      %422 = vadd.xlane.f32.xlu0 %v421
      %v423 = vpop.xlane.xlu0 %422
      %v424 = vrcp.pop %v423
      %v425 = vmul.f32 %v420, %v424
      %v426 = vpack.c.bf16 %v425, %v425
      %427 = vrot.lane.b32.xlu0 %v361, 64
      %v428 = vpop.permute.xlu0 %427
      %v430 = vsel %vm365, %v426, 0
      %vm432 = vcmask 1043456
      %v434 = vsel %vm432, %v428, 0
      %436 = vmatprep.subr.bf16.mxu0 0
      %437 = vmatpush1.bf16.msra.mxu0 0
      %438 = vmatprep.subr.bf16.mxu0 0
      %439 = vmatpush1.bf16.msra.mxu0 0
      %440 = vmatprep.subr.bf16.mxu0 0
      %441 = vmatpush1.bf16.msra.mxu0 0
      %442 = vmatprep.subr.bf16.mxu0 0
      %443 = vmatpush1.bf16.msra.mxu0 0
      %444 = vmatprep.subr.bf16.mxu0 0
      %445 = vmatpush1.bf16.msra.mxu0 0
      %446 = vmatprep.subr.bf16.mxu0 0
      %447 = vmatpush1.bf16.msra.mxu0 0
      %448 = vmatprep.subr.bf16.mxu0 0
      %449 = vmatpush1.bf16.msra.mxu0 0
      %450 = vmatprep.subr.bf16.mxu0 0
      %451 = vmatpush1.bf16.msra.mxu0 %v434
      %452 = vmatprep.subr.bf16.mxu0 0
      %453 = vmatpush2.bf16.msra.mxu0 0
      %454 = vmatprep.subr.bf16.mxu0 0
      %455 = vmatpush2.bf16.msra.mxu0 0
      %456 = vmatprep.subr.bf16.mxu0 0
      %457 = vmatpush2.bf16.msra.mxu0 0
      %458 = vmatprep.subr.bf16.mxu0 0
      %459 = vmatpush2.bf16.msra.mxu0 0
      %460 = vmatprep.subr.bf16.mxu0 0
      %461 = vmatpush2.bf16.msra.mxu0 0
      %462 = vmatprep.subr.bf16.mxu0 0
      %463 = vmatpush2.bf16.msra.mxu0 0
      %464 = vmatprep.subr.bf16.mxu0 0
      %465 = vmatpush2.bf16.msra.mxu0 0
      %466 = vmatprep.subr.bf16.mxu0 0
      %467 = vmatpush2.bf16.msra.mxu0 0
      %468 = vmatprep.mubr.bf16.mxu0 0
      %469 = vmatmul.mubr.bf16.gmra.mxu0 %v430
      %v470 = vpop.f32.mrf.mxu0
      %v471 = vadd.f32 0.0, %v470
      %v472 = vpop.f32.mrf.mxu0
      %v473 = vpop.f32.mrf.mxu0
      %v474 = vpop.f32.mrf.mxu0
      %475 = vdwg.mxu0
      %476 = vrot.lane.b32.xlu0 %v361, 120
      %v477 = vpop.permute.xlu0 %476
      %478 = vrot.lane.b32.xlu0 %v361, 88
      %v479 = vpop.permute.xlu0 %478
      %v481 = vsel %vm365, %v477, 0
      %v484 = vsel %vm365, %v479, 0
      %486 = vmatprep.subr.bf16.mxu0 0
      %487 = vmatpush1.bf16.xpose.msra.mxu0 0
      %488 = vmatprep.subr.bf16.mxu0 0
      %489 = vmatpush1.bf16.xpose.msra.mxu0 0
      %490 = vmatprep.subr.bf16.mxu0 0
      %491 = vmatpush1.bf16.xpose.msra.mxu0 0
      %492 = vmatprep.subr.bf16.mxu0 0
      %493 = vmatpush1.bf16.xpose.msra.mxu0 0
      %494 = vmatprep.subr.bf16.mxu0 0
      %495 = vmatpush1.bf16.xpose.msra.mxu0 0
      %496 = vmatprep.subr.bf16.mxu0 0
      %497 = vmatpush1.bf16.xpose.msra.mxu0 0
      %498 = vmatprep.subr.bf16.mxu0 0
      %499 = vmatpush1.bf16.xpose.msra.mxu0 0
      %500 = vmatprep.subr.bf16.mxu0 0
      %501 = vmatpush1.bf16.xpose.msra.mxu0 %v484
      %502 = vmatprep.subr.bf16.mxu0 0
      %503 = vmatpush2.bf16.xpose.msra.mxu0 0
      %504 = vmatprep.subr.bf16.mxu0 0
      %505 = vmatpush2.bf16.xpose.msra.mxu0 0
      %506 = vmatprep.subr.bf16.mxu0 0
      %507 = vmatpush2.bf16.xpose.msra.mxu0 0
      %508 = vmatprep.subr.bf16.mxu0 0
      %509 = vmatpush2.bf16.xpose.msra.mxu0 0
      %510 = vmatprep.subr.bf16.mxu0 0
      %511 = vmatpush2.bf16.xpose.msra.mxu0 0
      %512 = vmatprep.subr.bf16.mxu0 0
      %513 = vmatpush2.bf16.xpose.msra.mxu0 0
      %514 = vmatprep.subr.bf16.mxu0 0
      %515 = vmatpush2.bf16.xpose.msra.mxu0 0
      %516 = vmatprep.subr.bf16.mxu0 0
      %517 = vmatpush2.bf16.xpose.msra.mxu0 0
      %518 = vmatprep.mubr.bf16.mxu0 0
      %519 = vmatmul.mubr.bf16.gmra.mxu0 %v481
      %v520 = vpop.f32.mrf.mxu0
      %v521 = vadd.f32 0.0, %v520
      %v522 = vpop.f32.mrf.mxu0
      %v523 = vpop.f32.mrf.mxu0
      %v524 = vpop.f32.mrf.mxu0
      %525 = vdwg.mxu0
      %v526 = vmul.f32 %v521, 0.35355338
      %v527 = vadd.f32 %v526, %v413
      %v528 = vsel %vm365, %v527, -inf
      %529 = vmax.xlane.f32.xlu0 %v528
      %v530 = vpop.xlane.xlu0 %529
      %v531 = vsub.f32 %v527, %v530
      %v532 = vmul.f32 %v531, 1.442695
      %v533 = vpow.pop %v532
      %v534 = vsel %vm365, %v533, 0.0
      %535 = vadd.xlane.f32.xlu0 %v534
      %v536 = vpop.xlane.xlu0 %535
      %v537 = vrcp.pop %v536
      %v538 = vmul.f32 %v533, %v537
      %v539 = vpack.c.bf16 %v538, %v538
      %540 = vrot.lane.b32.xlu0 %v361, 56
      %v541 = vpop.permute.xlu0 %540
      %v543 = vsel %vm365, %v539, 0
      %v546 = vsel %vm432, %v541, 0
      %548 = vmatprep.subr.bf16.mxu0 0
      %549 = vmatpush1.bf16.msra.mxu0 0
      %550 = vmatprep.subr.bf16.mxu0 0
      %551 = vmatpush1.bf16.msra.mxu0 0
      %552 = vmatprep.subr.bf16.mxu0 0
      %553 = vmatpush1.bf16.msra.mxu0 0
      %554 = vmatprep.subr.bf16.mxu0 0
      %555 = vmatpush1.bf16.msra.mxu0 0
      %556 = vmatprep.subr.bf16.mxu0 0
      %557 = vmatpush1.bf16.msra.mxu0 0
      %558 = vmatprep.subr.bf16.mxu0 0
      %559 = vmatpush1.bf16.msra.mxu0 0
      %560 = vmatprep.subr.bf16.mxu0 0
      %561 = vmatpush1.bf16.msra.mxu0 0
      %562 = vmatprep.subr.bf16.mxu0 0
      %563 = vmatpush1.bf16.msra.mxu0 %v546
      %564 = vmatprep.subr.bf16.mxu0 0
      %565 = vmatpush2.bf16.msra.mxu0 0
      %566 = vmatprep.subr.bf16.mxu0 0
      %567 = vmatpush2.bf16.msra.mxu0 0
      %568 = vmatprep.subr.bf16.mxu0 0
      %569 = vmatpush2.bf16.msra.mxu0 0
      %570 = vmatprep.subr.bf16.mxu0 0
      %571 = vmatpush2.bf16.msra.mxu0 0
      %572 = vmatprep.subr.bf16.mxu0 0
      %573 = vmatpush2.bf16.msra.mxu0 0
      %574 = vmatprep.subr.bf16.mxu0 0
      %575 = vmatpush2.bf16.msra.mxu0 0
      %576 = vmatprep.subr.bf16.mxu0 0
      %577 = vmatpush2.bf16.msra.mxu0 0
      %578 = vmatprep.subr.bf16.mxu0 0
      %579 = vmatpush2.bf16.msra.mxu0 0
      %580 = vmatprep.mubr.bf16.mxu0 0
      %581 = vmatmul.mubr.bf16.gmra.mxu0 %v543
      %v582 = vpop.f32.mrf.mxu0
      %v583 = vadd.f32 0.0, %v582
      %v584 = vpop.f32.mrf.mxu0
      %v585 = vpop.f32.mrf.mxu0
      %v586 = vpop.f32.mrf.mxu0
      %587 = vdwg.mxu0
      %588 = vrot.lane.b32.xlu0 %v361, 112
      %v589 = vpop.permute.xlu0 %588
      %590 = vrot.lane.b32.xlu0 %v361, 80
      %v591 = vpop.permute.xlu0 %590
      %v593 = vsel %vm365, %v589, 0
      %v596 = vsel %vm365, %v591, 0
      %598 = vmatprep.subr.bf16.mxu0 0
      %599 = vmatpush1.bf16.xpose.msra.mxu0 0
      %600 = vmatprep.subr.bf16.mxu0 0
      %601 = vmatpush1.bf16.xpose.msra.mxu0 0
      %602 = vmatprep.subr.bf16.mxu0 0
      %603 = vmatpush1.bf16.xpose.msra.mxu0 0
      %604 = vmatprep.subr.bf16.mxu0 0
      %605 = vmatpush1.bf16.xpose.msra.mxu0 0
      %606 = vmatprep.subr.bf16.mxu0 0
      %607 = vmatpush1.bf16.xpose.msra.mxu0 0
      %608 = vmatprep.subr.bf16.mxu0 0
      %609 = vmatpush1.bf16.xpose.msra.mxu0 0
      %610 = vmatprep.subr.bf16.mxu0 0
      %611 = vmatpush1.bf16.xpose.msra.mxu0 0
      %612 = vmatprep.subr.bf16.mxu0 0
      %613 = vmatpush1.bf16.xpose.msra.mxu0 %v596
      %614 = vmatprep.subr.bf16.mxu0 0
      %615 = vmatpush2.bf16.xpose.msra.mxu0 0
      %616 = vmatprep.subr.bf16.mxu0 0
      %617 = vmatpush2.bf16.xpose.msra.mxu0 0
      %618 = vmatprep.subr.bf16.mxu0 0
      %619 = vmatpush2.bf16.xpose.msra.mxu0 0
      %620 = vmatprep.subr.bf16.mxu0 0
      %621 = vmatpush2.bf16.xpose.msra.mxu0 0
      %622 = vmatprep.subr.bf16.mxu0 0
      %623 = vmatpush2.bf16.xpose.msra.mxu0 0
      %624 = vmatprep.subr.bf16.mxu0 0
      %625 = vmatpush2.bf16.xpose.msra.mxu0 0
      %626 = vmatprep.subr.bf16.mxu0 0
      %627 = vmatpush2.bf16.xpose.msra.mxu0 0
      %628 = vmatprep.subr.bf16.mxu0 0
      %629 = vmatpush2.bf16.xpose.msra.mxu0 0
      %630 = vmatprep.mubr.bf16.mxu0 0
      %631 = vmatmul.mubr.bf16.gmra.mxu0 %v593
      %v632 = vpop.f32.mrf.mxu0
      %v633 = vadd.f32 0.0, %v632
      %v634 = vpop.f32.mrf.mxu0
      %v635 = vpop.f32.mrf.mxu0
      %v636 = vpop.f32.mrf.mxu0
      %637 = vdwg.mxu0
      %v638 = vmul.f32 %v633, 0.35355338
      %v639 = vadd.f32 %v638, %v413
      %v640 = vsel %vm365, %v639, -inf
      %641 = vmax.xlane.f32.xlu0 %v640
      %v642 = vpop.xlane.xlu0 %641
      %v643 = vsub.f32 %v639, %v642
      %v644 = vmul.f32 %v643, 1.442695
      %v645 = vpow.pop %v644
      %v646 = vsel %vm365, %v645, 0.0
      %647 = vadd.xlane.f32.xlu0 %v646
      %v648 = vpop.xlane.xlu0 %647
      %v649 = vrcp.pop %v648
      %v650 = vmul.f32 %v645, %v649
      %v651 = vpack.c.bf16 %v650, %v650
      %652 = vrot.lane.b32.xlu0 %v361, 48
      %v653 = vpop.permute.xlu0 %652
      %v655 = vsel %vm365, %v651, 0
      %v658 = vsel %vm432, %v653, 0
      %660 = vmatprep.subr.bf16.mxu0 0
      %661 = vmatpush1.bf16.msra.mxu0 0
      %662 = vmatprep.subr.bf16.mxu0 0
      %663 = vmatpush1.bf16.msra.mxu0 0
      %664 = vmatprep.subr.bf16.mxu0 0
      %665 = vmatpush1.bf16.msra.mxu0 0
      %666 = vmatprep.subr.bf16.mxu0 0
      %667 = vmatpush1.bf16.msra.mxu0 0
      %668 = vmatprep.subr.bf16.mxu0 0
      %669 = vmatpush1.bf16.msra.mxu0 0
      %670 = vmatprep.subr.bf16.mxu0 0
      %671 = vmatpush1.bf16.msra.mxu0 0
      %672 = vmatprep.subr.bf16.mxu0 0
      %673 = vmatpush1.bf16.msra.mxu0 0
      %674 = vmatprep.subr.bf16.mxu0 0
      %675 = vmatpush1.bf16.msra.mxu0 %v658
      %676 = vmatprep.subr.bf16.mxu0 0
      %677 = vmatpush2.bf16.msra.mxu0 0
      %678 = vmatprep.subr.bf16.mxu0 0
      %679 = vmatpush2.bf16.msra.mxu0 0
      %680 = vmatprep.subr.bf16.mxu0 0
      %681 = vmatpush2.bf16.msra.mxu0 0
      %682 = vmatprep.subr.bf16.mxu0 0
      %683 = vmatpush2.bf16.msra.mxu0 0
      %684 = vmatprep.subr.bf16.mxu0 0
      %685 = vmatpush2.bf16.msra.mxu0 0
      %686 = vmatprep.subr.bf16.mxu0 0
      %687 = vmatpush2.bf16.msra.mxu0 0
      %688 = vmatprep.subr.bf16.mxu0 0
      %689 = vmatpush2.bf16.msra.mxu0 0
      %690 = vmatprep.subr.bf16.mxu0 0
      %691 = vmatpush2.bf16.msra.mxu0 0
      %692 = vmatprep.mubr.bf16.mxu0 0
      %693 = vmatmul.mubr.bf16.gmra.mxu0 %v655
      %v694 = vpop.f32.mrf.mxu0
      %v695 = vadd.f32 0.0, %v694
      %v696 = vpop.f32.mrf.mxu0
      %v697 = vpop.f32.mrf.mxu0
      %v698 = vpop.f32.mrf.mxu0
      %699 = vdwg.mxu0
      %700 = vrot.lane.b32.xlu0 %v361, 104
      %v701 = vpop.permute.xlu0 %700
      %702 = vrot.lane.b32.xlu0 %v361, 72
      %v703 = vpop.permute.xlu0 %702
      %v705 = vsel %vm365, %v701, 0
      %v708 = vsel %vm365, %v703, 0
      %710 = vmatprep.subr.bf16.mxu0 0
      %711 = vmatpush1.bf16.xpose.msra.mxu0 0
      %712 = vmatprep.subr.bf16.mxu0 0
      %713 = vmatpush1.bf16.xpose.msra.mxu0 0
      %714 = vmatprep.subr.bf16.mxu0 0
      %715 = vmatpush1.bf16.xpose.msra.mxu0 0
      %716 = vmatprep.subr.bf16.mxu0 0
      %717 = vmatpush1.bf16.xpose.msra.mxu0 0
      %718 = vmatprep.subr.bf16.mxu0 0
      %719 = vmatpush1.bf16.xpose.msra.mxu0 0
      %720 = vmatprep.subr.bf16.mxu0 0
      %721 = vmatpush1.bf16.xpose.msra.mxu0 0
      %722 = vmatprep.subr.bf16.mxu0 0
      %723 = vmatpush1.bf16.xpose.msra.mxu0 0
      %724 = vmatprep.subr.bf16.mxu0 0
      %725 = vmatpush1.bf16.xpose.msra.mxu0 %v708
      %726 = vmatprep.subr.bf16.mxu0 0
      %727 = vmatpush2.bf16.xpose.msra.mxu0 0
      %728 = vmatprep.subr.bf16.mxu0 0
      %729 = vmatpush2.bf16.xpose.msra.mxu0 0
      %730 = vmatprep.subr.bf16.mxu0 0
      %731 = vmatpush2.bf16.xpose.msra.mxu0 0
      %732 = vmatprep.subr.bf16.mxu0 0
      %733 = vmatpush2.bf16.xpose.msra.mxu0 0
      %734 = vmatprep.subr.bf16.mxu0 0
      %735 = vmatpush2.bf16.xpose.msra.mxu0 0
      %736 = vmatprep.subr.bf16.mxu0 0
      %737 = vmatpush2.bf16.xpose.msra.mxu0 0
      %738 = vmatprep.subr.bf16.mxu0 0
      %739 = vmatpush2.bf16.xpose.msra.mxu0 0
      %740 = vmatprep.subr.bf16.mxu0 0
      %741 = vmatpush2.bf16.xpose.msra.mxu0 0
      %742 = vmatprep.mubr.bf16.mxu0 0
      %743 = vmatmul.mubr.bf16.gmra.mxu0 %v705
      %v744 = vpop.f32.mrf.mxu0
      %v745 = vadd.f32 0.0, %v744
      %v746 = vpop.f32.mrf.mxu0
      %v747 = vpop.f32.mrf.mxu0
      %v748 = vpop.f32.mrf.mxu0
      %749 = vdwg.mxu0
      %v750 = vmul.f32 %v745, 0.35355338
      %v751 = vadd.f32 %v750, %v413
      %v752 = vsel %vm365, %v751, -inf
      %753 = vmax.xlane.f32.xlu0 %v752
      %v754 = vpop.xlane.xlu0 %753
      %v755 = vsub.f32 %v751, %v754
      %v756 = vmul.f32 %v755, 1.442695
      %v757 = vpow.pop %v756
      %v758 = vsel %vm365, %v757, 0.0
      %759 = vadd.xlane.f32.xlu0 %v758
      %v760 = vpop.xlane.xlu0 %759
      %v761 = vrcp.pop %v760
      %v762 = vmul.f32 %v757, %v761
      %v763 = vpack.c.bf16 %v762, %v762
      %764 = vrot.lane.b32.xlu0 %v361, 40
      %v765 = vpop.permute.xlu0 %764
      %v767 = vsel %vm365, %v763, 0
      %v770 = vsel %vm432, %v765, 0
      %772 = vmatprep.subr.bf16.mxu0 0
      %773 = vmatpush1.bf16.msra.mxu0 0
      %774 = vmatprep.subr.bf16.mxu0 0
      %775 = vmatpush1.bf16.msra.mxu0 0
      %776 = vmatprep.subr.bf16.mxu0 0
      %777 = vmatpush1.bf16.msra.mxu0 0
      %778 = vmatprep.subr.bf16.mxu0 0
      %779 = vmatpush1.bf16.msra.mxu0 0
      %780 = vmatprep.subr.bf16.mxu0 0
      %781 = vmatpush1.bf16.msra.mxu0 0
      %782 = vmatprep.subr.bf16.mxu0 0
      %783 = vmatpush1.bf16.msra.mxu0 0
      %784 = vmatprep.subr.bf16.mxu0 0
      %785 = vmatpush1.bf16.msra.mxu0 0
      %786 = vmatprep.subr.bf16.mxu0 0
      %787 = vmatpush1.bf16.msra.mxu0 %v770
      %788 = vmatprep.subr.bf16.mxu0 0
      %789 = vmatpush2.bf16.msra.mxu0 0
      %790 = vmatprep.subr.bf16.mxu0 0
      %791 = vmatpush2.bf16.msra.mxu0 0
      %792 = vmatprep.subr.bf16.mxu0 0
      %793 = vmatpush2.bf16.msra.mxu0 0
      %794 = vmatprep.subr.bf16.mxu0 0
      %795 = vmatpush2.bf16.msra.mxu0 0
      %796 = vmatprep.subr.bf16.mxu0 0
      %797 = vmatpush2.bf16.msra.mxu0 0
      %798 = vmatprep.subr.bf16.mxu0 0
      %799 = vmatpush2.bf16.msra.mxu0 0
      %800 = vmatprep.subr.bf16.mxu0 0
      %801 = vmatpush2.bf16.msra.mxu0 0
      %802 = vmatprep.subr.bf16.mxu0 0
      %803 = vmatpush2.bf16.msra.mxu0 0
      %804 = vmatprep.mubr.bf16.mxu0 0
      %805 = vmatmul.mubr.bf16.gmra.mxu0 %v767
      %v806 = vpop.f32.mrf.mxu0
      %v807 = vadd.f32 0.0, %v806
      %v808 = vpop.f32.mrf.mxu0
      %v809 = vpop.f32.mrf.mxu0
      %v810 = vpop.f32.mrf.mxu0
      %811 = vdwg.mxu0
      %813 = vrot.lane.b32.xlu0 %v583, 8
      %v814 = vpop.permute.xlu0 %813
      %817 = vrot.lane.b32.xlu0 %v695, 16
      %v818 = vpop.permute.xlu0 %817
      %821 = vrot.lane.b32.xlu0 %v807, 24
      %v822 = vpop.permute.xlu0 %821
      %v824 = vsel %vm365, %v471, %v814
      %vm825 = vcmask 130048
      %v826 = vsel %vm825, %v824, %v818
      %vm827 = vcmask 195584
      %v828 = vsel %vm827, %v826, %v822
      %v829 = vld [vmem:[%s3] sm:$0xff]
      %v830 = vld [vmem:[%s3 + $0x8] sm:$0xff]
      %v831 = vld [vmem:[%s3 + $0x10] sm:$0xff]
      %v832 = vld [vmem:[%s3 + $0x18] sm:$0xff]
      %v833 = vpack.c.bf16 %v828, %v828
      %v834 = vpack.c.bf16 %v830, %v829
      %v835 = vpack.c.bf16 %v832, %v831
      %v836 = vld [vmem:[%s4] sm:$0x1]
      %v838 = vlaneseq
      %v839 = vshrl.u32 %v838, 7
      %v840 = vsub.s32 0, %v839
      %v841 = vrot.slane %v836, %v840
      %v844 = vsel %vm317, %v833, 0
      %846 = vmatprep.subr.bf16.mxu0 0
      %847 = vmatpush1.bf16.msra.mxu0 0
      %848 = vmatprep.subr.bf16.mxu0 0
      %849 = vmatpush1.bf16.msra.mxu0 0
      %850 = vmatprep.subr.bf16.mxu0 0
      %851 = vmatpush1.bf16.msra.mxu0 0
      %852 = vmatprep.subr.bf16.mxu0 0
      %853 = vmatpush1.bf16.msra.mxu0 0
      %854 = vmatprep.subr.bf16.mxu0 0
      %855 = vmatpush1.bf16.msra.mxu0 0
      %856 = vmatprep.subr.bf16.mxu0 0
      %857 = vmatpush1.bf16.msra.mxu0 0
      %858 = vmatprep.subr.bf16.mxu0 0
      %859 = vmatpush1.bf16.msra.mxu0 %v835
      %860 = vmatprep.subr.bf16.mxu0 0
      %861 = vmatpush1.bf16.msra.mxu0 %v834
      %862 = vmatprep.subr.bf16.mxu0 0
      %863 = vmatpush2.bf16.msra.mxu0 0
      %864 = vmatprep.subr.bf16.mxu0 0
      %865 = vmatpush2.bf16.msra.mxu0 0
      %866 = vmatprep.subr.bf16.mxu0 0
      %867 = vmatpush2.bf16.msra.mxu0 0
      %868 = vmatprep.subr.bf16.mxu0 0
      %869 = vmatpush2.bf16.msra.mxu0 0
      %870 = vmatprep.subr.bf16.mxu0 0
      %871 = vmatpush2.bf16.msra.mxu0 0
      %872 = vmatprep.subr.bf16.mxu0 0
      %873 = vmatpush2.bf16.msra.mxu0 0
      %874 = vmatprep.subr.bf16.mxu0 0
      %875 = vmatpush2.bf16.msra.mxu0 0
      %876 = vmatprep.subr.bf16.mxu0 0
      %877 = vmatpush2.bf16.msra.mxu0 0
      %878 = vmatprep.mubr.bf16.mxu0 0
      %879 = vmatmul.mubr.bf16.gmra.mxu0 %v844
      %v880 = vpop.f32.mrf.mxu0
      %v881 = vadd.f32 %v841, %v880
      %v882 = vpop.f32.mrf.mxu0
      %v883 = vpop.f32.mrf.mxu0
      %v884 = vpop.f32.mrf.mxu0
      %885 = vdwg.mxu0
      %v886 = vadd.f32 %v302, %v881
      %v887 = vld [vmem:[%s5] sm:$0x1]
      %v888 = vld [vmem:[%s6] sm:$0x1]
      %v889 = vsel %vm317, %v886, 0.0
      %890 = vadd.xlane.f32.xlu0 %v889
      %v891 = vpop.xlane.xlu0 %890
      %v892 = vrcp.pop 32.0
      %v893 = vmul.f32 %v891, %v892
      %v894 = vsub.f32 %v886, %v893
      %v895 = vmul.f32 %v894, %v894
      %v896 = vsel %vm317, %v895, 0.0
      %897 = vadd.xlane.f32.xlu0 %v896
      %v898 = vpop.xlane.xlu0 %897
      %v899 = vmul.f32 %v898, %v892
      %v900 = vadd.f32 %v899, 1e-05
      %v901 = vrsqrt.pop %v900
      %v902 = vmul.f32 %v894, %v901
      %v904 = vlaneseq
      %v905 = vshrl.u32 %v904, 7
      %v906 = vsub.s32 0, %v905
      %v907 = vrot.slane %v887, %v906
      %v909 = vmul.f32 %v902, %v907
      %v911 = vlaneseq
      %v912 = vshrl.u32 %v911, 7
      %v913 = vsub.s32 0, %v912
      %v914 = vrot.slane %v888, %v913
      %v916 = vadd.f32 %v909, %v914
      %917 = vst.msk [vmem:[%s300] sm:$0xff] %vm317, %v916
      %p918 = scmp.lt.s32.totalorder %s19, 1
      %s919 = scalar_select %p918, %s19, 1
      %s920 = smul.addr %s919, 8
      %s921 = scalar_lea.vmem %s8, %s920
      // Predicated region
      $region53: #{transformer_forward.17} parent=51 // pred_check
        %p922 = pneg %p210
      $region54: #{transformer_forward.17} parent=51 // pred_check_branch
        %924 = sbr.rel (%p922) target = $region56
      $region55: #{transformer_forward.17} parent=51 // pred_region
        _
      $region56: #{transformer_forward.17} parent=51 // pred_fallthru
        _
    $region52: #{transformer_forward.17} parent=5 // pred_fallthru
      _
    %p925 = scmp.le.s32.totalorder 2, %s14
    // Predicated region
    $region57: #{transformer_forward.17} parent=5 // pred_check
      %p926 = pneg %p925
    $region58: #{transformer_forward.17} parent=5 // pred_check_branch
      %928 = sbr.rel (%p926) target = $region60
    $region59: #{transformer_forward.17} parent=5 // pred_region
      %s929 = ssub.s32 %s14, 2
      // Predicated region
      $region61: #{transformer_forward.17} parent=59 // pred_check
        %p930 = pneg %p216
      $region62: #{transformer_forward.17} parent=59 // pred_check_branch
        %932 = sbr.rel (%p930) target = $region64
      $region63: #{transformer_forward.17} parent=59 // pred_region
        %p933 = scmp.lt.s32.totalorder %s20, 1
        %s934 = scalar_select %p933, %s20, 1
        %s935 = smul.addr %s934, 8
        %s936 = scalar_lea.vmem %s8, %s935
      $region64: #{transformer_forward.17} parent=59 // pred_fallthru
        _
    $region60: #{transformer_forward.17} parent=5 // pred_fallthru
      _
  $region6: #{transformer_forward.17} parent=0 // loop_footer
    %s18 = sadd.s32 1, %s14
  $region7: #{transformer_forward.17} parent=0 // loop_footer_branch
    %13 = sbr.rel target = $region3
  $region8: #{transformer_forward.17} parent=0 // loop_exit
    _

// kernel: transformer_forward.23
$region0: #{transformer_forward.23}
  #allocation0 [shape = 'u32[]', space=smem, size = 0x4, offset = 0x4, fixed_abs, tag = 'smem constant byte address 0x4 - core index']
  #allocation1 [shape = 'u32[144,128]{1,0:T(1,128)}', space=vmem, size = 0x12000, scoped, tag = 'internal scratch']
  %s0 = inlined_call_operand.vmem [shape: f32[2,8,32], index: 0, kind: input, shape index: {}]
  %s1 = inlined_call_operand.vmem [shape: f32[1,32], index: 1, kind: input, shape index: {}]
  %s2 = inlined_call_operand.vmem [shape: f32[1,32], index: 2, kind: input, shape index: {}]
  %s3 = inlined_call_operand.vmem [shape: f32[32,128], index: 3, kind: input, shape index: {}]
  %s4 = inlined_call_operand.vmem [shape: f32[1,128], index: 4, kind: input, shape index: {}]
  %s5 = inlined_call_operand.vmem [shape: f32[2,8,128], index: 5, kind: output, shape index: {}]
  %s6 = sld [smem:[#allocation0]]
  $region53: #{transformer_forward.23} parent=0
    _
  %s8 = ssub.s32 1, %s6
  %s9 = scalar_select 0, %s8, %s6
  loop: start=0, step=1, limit=4
  $region2: #{transformer_forward.23} parent=0 // loop_pre_header
    _
  $region3: #{transformer_forward.23} parent=0 // loop_header
    %s11 = sphi 0, %s15
    %p12 = scmp.ge.s32.totalorder %s11, 4
    %s21 = sphi 0, %s23
    %s24 = sphi 0, %s21
    %s25 = sphi 0, %s24
    %s41 = sphi 0, %s25
    %s45 = sphi 0, %s45
    %s47 = sphi 0, %s45
    %s48 = sphi 0, %s47
    %s62 = sphi 0, %s48
    %s66 = sphi 0, %s66
    %s68 = sphi 0, %s66
    %s69 = sphi 0, %s68
    %s83 = sphi 0, %s69
    %s87 = sphi 0, %s87
    %s89 = sphi 0, %s87
    %s90 = sphi 0, %s89
    %s104 = sphi 0, %s90
    %s108 = sphi 0, %s108
    %s110 = sphi 0, %s108
    %s111 = sphi 0, %s110
    %s125 = sphi 0, %s111
    %s131 = sphi 0, %s133
    %s134 = sphi 0, %s131
    %s135 = sphi 0, %s134
    %s151 = sphi 0, %s135
  $region4: #{transformer_forward.23} parent=0 // loop_header_branch
    %14 = sbr.rel (%p12) target = $region8
  $region5: #{transformer_forward.23} parent=0 // loop_body
    %s16 = ssub.s32 %s11, 1
    %s17 = ssub.s32 %s11, 2
    %s18 = sadd.s32 %s11, 1
    %s19 = ssub.s32 %s11, %s18
    %p20 = scmp.eq.s32.totalorder %s19, 0
    %s22 = sadd.s32 %s21, 1
    %s23 = scalar_select %p20, %s21, %s22
    %p26 = pneg %p20
    %p27 = scmp.eq.s32.totalorder %s11, 1
    %p28 = por %p26, %p27
    %p29 = scmp.ne.s32.totalorder %s21, %s24
    %p30 = scmp.eq.s32.totalorder %s11, 0
    %p31 = por %p29, %p30
    %p32 = scmp.ne.s32.totalorder %s21, %s24
    %p33 = scmp.eq.s32.totalorder %s16, 1
    %p34 = por %p32, %p33
    %p35 = scmp.ne.s32.totalorder %s24, %s25
    %p36 = scmp.eq.s32.totalorder %s16, 0
    %p37 = por %p35, %p36
    %p38 = scmp.ne.s32.totalorder %s24, %s25
    %p39 = scmp.eq.s32.totalorder %s17, 1
    %p40 = por %p38, %p39
    %p42 = scmp.ne.s32.totalorder %s25, %s41
    %p43 = scmp.eq.s32.totalorder %s17, 0
    %p44 = por %p42, %p43
    %s46 = sadd.s32 %s45, 1
    %p49 = scmp.eq.s32.totalorder %s11, 1
    %p50 = scmp.ne.s32.totalorder %s45, %s47
    %p51 = scmp.eq.s32.totalorder %s11, 0
    %p52 = por %p50, %p51
    %p53 = scmp.ne.s32.totalorder %s45, %s47
    %p54 = scmp.eq.s32.totalorder %s16, 1
    %p55 = por %p53, %p54
    %p56 = scmp.ne.s32.totalorder %s47, %s48
    %p57 = scmp.eq.s32.totalorder %s16, 0
    %p58 = por %p56, %p57
    %p59 = scmp.ne.s32.totalorder %s47, %s48
    %p60 = scmp.eq.s32.totalorder %s17, 1
    %p61 = por %p59, %p60
    %p63 = scmp.ne.s32.totalorder %s48, %s62
    %p64 = scmp.eq.s32.totalorder %s17, 0
    %p65 = por %p63, %p64
    %s67 = sadd.s32 %s66, 1
    %p70 = scmp.eq.s32.totalorder %s11, 1
    %p71 = scmp.ne.s32.totalorder %s66, %s68
    %p72 = scmp.eq.s32.totalorder %s11, 0
    %p73 = por %p71, %p72
    %p74 = scmp.ne.s32.totalorder %s66, %s68
    %p75 = scmp.eq.s32.totalorder %s16, 1
    %p76 = por %p74, %p75
    %p77 = scmp.ne.s32.totalorder %s68, %s69
    %p78 = scmp.eq.s32.totalorder %s16, 0
    %p79 = por %p77, %p78
    %p80 = scmp.ne.s32.totalorder %s68, %s69
    %p81 = scmp.eq.s32.totalorder %s17, 1
    %p82 = por %p80, %p81
    %p84 = scmp.ne.s32.totalorder %s69, %s83
    %p85 = scmp.eq.s32.totalorder %s17, 0
    %p86 = por %p84, %p85
    %s88 = sadd.s32 %s87, 1
    %p91 = scmp.eq.s32.totalorder %s11, 1
    %p92 = scmp.ne.s32.totalorder %s87, %s89
    %p93 = scmp.eq.s32.totalorder %s11, 0
    %p94 = por %p92, %p93
    %p95 = scmp.ne.s32.totalorder %s87, %s89
    %p96 = scmp.eq.s32.totalorder %s16, 1
    %p97 = por %p95, %p96
    %p98 = scmp.ne.s32.totalorder %s89, %s90
    %p99 = scmp.eq.s32.totalorder %s16, 0
    %p100 = por %p98, %p99
    %p101 = scmp.ne.s32.totalorder %s89, %s90
    %p102 = scmp.eq.s32.totalorder %s17, 1
    %p103 = por %p101, %p102
    %p105 = scmp.ne.s32.totalorder %s90, %s104
    %p106 = scmp.eq.s32.totalorder %s17, 0
    %p107 = por %p105, %p106
    %s109 = sadd.s32 %s108, 1
    %p112 = scmp.eq.s32.totalorder %s11, 1
    %p113 = scmp.ne.s32.totalorder %s108, %s110
    %p114 = scmp.eq.s32.totalorder %s11, 0
    %p115 = por %p113, %p114
    %p116 = scmp.ne.s32.totalorder %s108, %s110
    %p117 = scmp.eq.s32.totalorder %s16, 1
    %p118 = por %p116, %p117
    %p119 = scmp.ne.s32.totalorder %s110, %s111
    %p120 = scmp.eq.s32.totalorder %s16, 0
    %p121 = por %p119, %p120
    %p122 = scmp.ne.s32.totalorder %s110, %s111
    %p123 = scmp.eq.s32.totalorder %s17, 1
    %p124 = por %p122, %p123
    %p126 = scmp.ne.s32.totalorder %s111, %s125
    %p127 = scmp.eq.s32.totalorder %s17, 0
    %p128 = por %p126, %p127
    %s129 = ssub.s32 %s11, %s18
    %p130 = scmp.eq.s32.totalorder %s129, 0
    %s132 = sadd.s32 %s131, 1
    %s133 = scalar_select %p130, %s131, %s132
    %p136 = pneg %p130
    %p137 = scmp.eq.s32.totalorder %s11, 1
    %p138 = por %p136, %p137
    %p139 = scmp.ne.s32.totalorder %s131, %s134
    %p140 = scmp.eq.s32.totalorder %s11, 0
    %p141 = por %p139, %p140
    %p142 = scmp.ne.s32.totalorder %s131, %s134
    %p143 = scmp.eq.s32.totalorder %s16, 1
    %p144 = por %p142, %p143
    %p145 = scmp.ne.s32.totalorder %s134, %s135
    %p146 = scmp.eq.s32.totalorder %s16, 0
    %p147 = por %p145, %p146
    %p148 = scmp.ne.s32.totalorder %s134, %s135
    %p149 = scmp.eq.s32.totalorder %s17, 1
    %p150 = por %p148, %p149
    %p152 = scmp.ne.s32.totalorder %s135, %s151
    %p153 = scmp.eq.s32.totalorder %s17, 0
    %p154 = por %p152, %p153
    %p155 = scmp.le.s32.totalorder 1, %s11
    %p156 = scmp.lt.s32.totalorder %s11, 3
    %p157 = pnand %p155, %p156
    %p158 = pneg %p157
    // Predicated region
    $region9: #{transformer_forward.23} parent=5 // pred_check
      _
    $region10: #{transformer_forward.23} parent=5 // pred_check_branch
      %160 = sbr.rel (%p157) target = $region12
    $region11: #{transformer_forward.23} parent=5 // pred_region
      %s161 = ssub.s32 %s11, 1
      // Predicated region
      $region13: #{transformer_forward.23} parent=11 // pred_check
        %p162 = pneg %p58
      $region14: #{transformer_forward.23} parent=11 // pred_check_branch
        %164 = sbr.rel (%p162) target = $region16
      $region15: #{transformer_forward.23} parent=11 // pred_region
        _
      $region16: #{transformer_forward.23} parent=11 // pred_fallthru
        _
      // Predicated region
      $region17: #{transformer_forward.23} parent=11 // pred_check
        %p165 = pneg %p79
      $region18: #{transformer_forward.23} parent=11 // pred_check_branch
        %167 = sbr.rel (%p165) target = $region20
      $region19: #{transformer_forward.23} parent=11 // pred_region
        _
      $region20: #{transformer_forward.23} parent=11 // pred_fallthru
        _
      // Predicated region
      $region21: #{transformer_forward.23} parent=11 // pred_check
        %p168 = pneg %p100
      $region22: #{transformer_forward.23} parent=11 // pred_check_branch
        %170 = sbr.rel (%p168) target = $region24
      $region23: #{transformer_forward.23} parent=11 // pred_region
        _
      $region24: #{transformer_forward.23} parent=11 // pred_fallthru
        _
      // Predicated region
      $region25: #{transformer_forward.23} parent=11 // pred_check
        %p171 = pneg %p121
      $region26: #{transformer_forward.23} parent=11 // pred_check_branch
        %173 = sbr.rel (%p171) target = $region28
      $region27: #{transformer_forward.23} parent=11 // pred_region
        _
      $region28: #{transformer_forward.23} parent=11 // pred_fallthru
        _
    $region12: #{transformer_forward.23} parent=5 // pred_fallthru
      _
    %p174 = scmp.lt.s32.totalorder %s11, 2
    // Predicated region
    $region29: #{transformer_forward.23} parent=5 // pred_check
      %p175 = pneg %p174
    $region30: #{transformer_forward.23} parent=5 // pred_check_branch
      %177 = sbr.rel (%p175) target = $region32
    $region31: #{transformer_forward.23} parent=5 // pred_region
      // Predicated region
      $region33: #{transformer_forward.23} parent=31 // pred_check
        %p178 = pneg %p31
      $region34: #{transformer_forward.23} parent=31 // pred_check_branch
        %180 = sbr.rel (%p178) target = $region36
      $region35: #{transformer_forward.23} parent=31 // pred_region
        %p181 = scmp.lt.s32.totalorder %s11, 1
        %s182 = scalar_select %p181, %s11, 1
        %s183 = smul.addr %s182, 8
        %s184 = scalar_lea.vmem %s0, %s183
      $region36: #{transformer_forward.23} parent=31 // pred_fallthru
        _
    $region32: #{transformer_forward.23} parent=5 // pred_fallthru
      _
    %p185 = scmp.le.s32.totalorder 1, %s11
    %p186 = scmp.lt.s32.totalorder %s11, 3
    %p187 = pnand %p185, %p186
    %p188 = pneg %p187
    // Predicated region
    $region37: #{transformer_forward.23} parent=5 // pred_check
      _
    $region38: #{transformer_forward.23} parent=5 // pred_check_branch
      %190 = sbr.rel (%p187) target = $region40
    $region39: #{transformer_forward.23} parent=5 // pred_region
      %s191 = ssub.s32 %s11, 1
      %p192 = scmp.lt.s32.totalorder %s16, 1
      %s193 = scalar_select %p192, %s16, 1
      %s194 = smul.addr %s193, 8
      %s195 = scalar_lea.vmem %s0, %s194
      %p196 = pneg %p37
      %p197 = pneg %p34
      %p198 = pneg %p58
      %p199 = pneg %p55
      %p200 = pneg %p79
      %p201 = pneg %p76
      %p202 = pneg %p100
      %p203 = pneg %p97
      %p204 = pneg %p121
      %p205 = pneg %p118
      %p206 = pneg %p147
      %p207 = pneg %p144
      %p208 = scmp.lt.s32.totalorder %s16, 1
      %s209 = scalar_select %p208, %s16, 1
      %s210 = smul.addr %s209, 8
      %s211 = scalar_lea.vmem %s5, %s210
      %p212 = scmp.lt.s32.totalorder %s16, 1
      %s213 = scalar_select %p212, %s16, 1
      %s214 = smul.addr %s213, 8
      %s215 = scalar_lea.vmem %s0, %s214
      %p216 = scmp.lt.s32.totalorder %s16, 1
      %s217 = scalar_select %p216, %s16, 1
      %s218 = smul.addr %s217, 8
      %s219 = scalar_lea.vmem %s5, %s218
      %v221 = vld [vmem:[%s215] sm:$0xff]
      %v222 = vld [vmem:[%s1] sm:$0x1]
      %v223 = vld [vmem:[%s2] sm:$0x1]
      %vm224 = vcmask 261120
      %v225 = vsel %vm224, %v221, 0.0
      %226 = vadd.xlane.f32.xlu0 %v225
      %v227 = vpop.xlane.xlu0 %226
      %v228 = vrcp.pop 32.0
      %v229 = vmul.f32 %v227, %v228
      %v230 = vsub.f32 %v221, %v229
      %v231 = vmul.f32 %v230, %v230
      %v232 = vsel %vm224, %v231, 0.0
      %233 = vadd.xlane.f32.xlu0 %v232
      %v234 = vpop.xlane.xlu0 %233
      %v235 = vmul.f32 %v234, %v228
      %v236 = vadd.f32 %v235, 1e-05
      %v237 = vrsqrt.pop %v236
      %v238 = vmul.f32 %v230, %v237
      %v240 = vlaneseq
      %v241 = vshrl.u32 %v240, 7
      %v242 = vsub.s32 0, %v241
      %v243 = vrot.slane %v222, %v242
      %v245 = vmul.f32 %v238, %v243
      %v247 = vlaneseq
      %v248 = vshrl.u32 %v247, 7
      %v249 = vsub.s32 0, %v248
      %v250 = vrot.slane %v223, %v249
      %v252 = vadd.f32 %v245, %v250
      %v253 = vld [vmem:[%s3] sm:$0xff]
      %v254 = vld [vmem:[%s3 + $0x8] sm:$0xff]
      %v255 = vld [vmem:[%s3 + $0x10] sm:$0xff]
      %v256 = vld [vmem:[%s3 + $0x18] sm:$0xff]
      %v257 = vpack.c.bf16 %v252, %v252
      %v258 = vpack.c.bf16 %v254, %v253
      %v259 = vpack.c.bf16 %v256, %v255
      %v260 = vld [vmem:[%s4] sm:$0x1]
      %v262 = vlaneseq
      %v263 = vshrl.u32 %v262, 7
      %v264 = vsub.s32 0, %v263
      %v265 = vrot.slane %v260, %v264
      %v268 = vsel %vm224, %v257, 0
      %270 = vmatprep.subr.bf16.mxu0 0
      %271 = vmatpush1.bf16.msra.mxu0 0
      %272 = vmatprep.subr.bf16.mxu0 0
      %273 = vmatpush1.bf16.msra.mxu0 0
      %274 = vmatprep.subr.bf16.mxu0 0
      %275 = vmatpush1.bf16.msra.mxu0 0
      %276 = vmatprep.subr.bf16.mxu0 0
      %277 = vmatpush1.bf16.msra.mxu0 0
      %278 = vmatprep.subr.bf16.mxu0 0
      %279 = vmatpush1.bf16.msra.mxu0 0
      %280 = vmatprep.subr.bf16.mxu0 0
      %281 = vmatpush1.bf16.msra.mxu0 0
      %282 = vmatprep.subr.bf16.mxu0 0
      %283 = vmatpush1.bf16.msra.mxu0 %v259
      %284 = vmatprep.subr.bf16.mxu0 0
      %285 = vmatpush1.bf16.msra.mxu0 %v258
      %286 = vmatprep.subr.bf16.mxu0 0
      %287 = vmatpush2.bf16.msra.mxu0 0
      %288 = vmatprep.subr.bf16.mxu0 0
      %289 = vmatpush2.bf16.msra.mxu0 0
      %290 = vmatprep.subr.bf16.mxu0 0
      %291 = vmatpush2.bf16.msra.mxu0 0
      %292 = vmatprep.subr.bf16.mxu0 0
      %293 = vmatpush2.bf16.msra.mxu0 0
      %294 = vmatprep.subr.bf16.mxu0 0
      %295 = vmatpush2.bf16.msra.mxu0 0
      %296 = vmatprep.subr.bf16.mxu0 0
      %297 = vmatpush2.bf16.msra.mxu0 0
      %298 = vmatprep.subr.bf16.mxu0 0
      %299 = vmatpush2.bf16.msra.mxu0 0
      %300 = vmatprep.subr.bf16.mxu0 0
      %301 = vmatpush2.bf16.msra.mxu0 0
      %302 = vmatprep.mubr.bf16.mxu0 0
      %303 = vmatmul.mubr.bf16.gmra.mxu0 %v268
      %v304 = vpop.f32.mrf.mxu0
      %v305 = vadd.f32 %v265, %v304
      %v306 = vpop.f32.mrf.mxu0
      %v307 = vpop.f32.mrf.mxu0
      %v308 = vpop.f32.mrf.mxu0
      %309 = vdwg.mxu0
      %310 = vst [vmem:[%s219] sm:$0xff] %v305
      %p311 = scmp.lt.s32.totalorder %s16, 1
      %s312 = scalar_select %p311, %s16, 1
      %s313 = smul.addr %s312, 8
      %s314 = scalar_lea.vmem %s5, %s313
      // Predicated region
      $region41: #{transformer_forward.23} parent=39 // pred_check
        %p315 = pneg %p144
      $region42: #{transformer_forward.23} parent=39 // pred_check_branch
        %317 = sbr.rel (%p315) target = $region44
      $region43: #{transformer_forward.23} parent=39 // pred_region
        _
      $region44: #{transformer_forward.23} parent=39 // pred_fallthru
        _
    $region40: #{transformer_forward.23} parent=5 // pred_fallthru
      _
    %p318 = scmp.le.s32.totalorder 2, %s11
    // Predicated region
    $region45: #{transformer_forward.23} parent=5 // pred_check
      %p319 = pneg %p318
    $region46: #{transformer_forward.23} parent=5 // pred_check_branch
      %321 = sbr.rel (%p319) target = $region48
    $region47: #{transformer_forward.23} parent=5 // pred_region
      %s322 = ssub.s32 %s11, 2
      // Predicated region
      $region49: #{transformer_forward.23} parent=47 // pred_check
        %p323 = pneg %p150
      $region50: #{transformer_forward.23} parent=47 // pred_check_branch
        %325 = sbr.rel (%p323) target = $region52
      $region51: #{transformer_forward.23} parent=47 // pred_region
        %p326 = scmp.lt.s32.totalorder %s17, 1
        %s327 = scalar_select %p326, %s17, 1
        %s328 = smul.addr %s327, 8
        %s329 = scalar_lea.vmem %s5, %s328
      $region52: #{transformer_forward.23} parent=47 // pred_fallthru
        _
    $region48: #{transformer_forward.23} parent=5 // pred_fallthru
      _
  $region6: #{transformer_forward.23} parent=0 // loop_footer
    %s15 = sadd.s32 1, %s11
  $region7: #{transformer_forward.23} parent=0 // loop_footer_branch
    %10 = sbr.rel target = $region3
  $region8: #{transformer_forward.23} parent=0 // loop_exit
    _

// kernel: transformer_forward.18
$region0: #{transformer_forward.18}
  #allocation0 [shape = 'u32[]', space=smem, size = 0x4, offset = 0x4, fixed_abs, tag = 'smem constant byte address 0x4 - core index']
  #allocation1 [shape = 'u32[144,128]{1,0:T(1,128)}', space=vmem, size = 0x12000, scoped, tag = 'internal scratch']
  %s0 = inlined_call_operand.vmem [shape: f32[2,8,32], index: 0, kind: input, shape index: {}]
  %s1 = inlined_call_operand.vmem [shape: f32[2,8,32], index: 1, kind: input, shape index: {}]
  %s2 = inlined_call_operand.vmem [shape: f32[32,32], index: 2, kind: input, shape index: {}]
  %s3 = inlined_call_operand.vmem [shape: f32[1,32], index: 3, kind: input, shape index: {}]
  %s4 = inlined_call_operand.vmem [shape: f32[32,64], index: 4, kind: input, shape index: {}]
  %s5 = inlined_call_operand.vmem [shape: f32[1,64], index: 5, kind: input, shape index: {}]
  %s6 = inlined_call_operand.vmem [shape: f32[32,32], index: 6, kind: input, shape index: {}]
  %s7 = inlined_call_operand.vmem [shape: f32[1,32], index: 7, kind: input, shape index: {}]
  %s8 = inlined_call_operand.vmem [shape: f32[1,32], index: 8, kind: input, shape index: {}]
  %s9 = inlined_call_operand.vmem [shape: f32[1,32], index: 9, kind: input, shape index: {}]
  %s10 = inlined_call_operand.vmem [shape: f32[2,8,32], index: 10, kind: output, shape index: {}]
  %s11 = sld [smem:[#allocation0]]
  $region73: #{transformer_forward.18} parent=0
    _
  %s13 = ssub.s32 1, %s11
  %s14 = scalar_select 0, %s13, %s11
  loop: start=0, step=1, limit=4
  $region2: #{transformer_forward.18} parent=0 // loop_pre_header
    _
  $region3: #{transformer_forward.18} parent=0 // loop_header
    %s16 = sphi 0, %s20
    %p17 = scmp.ge.s32.totalorder %s16, 4
    %s26 = sphi 0, %s28
    %s29 = sphi 0, %s26
    %s30 = sphi 0, %s29
    %s46 = sphi 0, %s30
    %s52 = sphi 0, %s54
    %s55 = sphi 0, %s52
    %s56 = sphi 0, %s55
    %s72 = sphi 0, %s56
    %s76 = sphi 0, %s76
    %s78 = sphi 0, %s76
    %s79 = sphi 0, %s78
    %s93 = sphi 0, %s79
    %s97 = sphi 0, %s97
    %s99 = sphi 0, %s97
    %s100 = sphi 0, %s99
    %s114 = sphi 0, %s100
    %s118 = sphi 0, %s118
    %s120 = sphi 0, %s118
    %s121 = sphi 0, %s120
    %s135 = sphi 0, %s121
    %s139 = sphi 0, %s139
    %s141 = sphi 0, %s139
    %s142 = sphi 0, %s141
    %s156 = sphi 0, %s142
    %s160 = sphi 0, %s160
    %s162 = sphi 0, %s160
    %s163 = sphi 0, %s162
    %s177 = sphi 0, %s163
    %s181 = sphi 0, %s181
    %s183 = sphi 0, %s181
    %s184 = sphi 0, %s183
    %s198 = sphi 0, %s184
    %s202 = sphi 0, %s202
    %s204 = sphi 0, %s202
    %s205 = sphi 0, %s204
    %s219 = sphi 0, %s205
    %s223 = sphi 0, %s223
    %s225 = sphi 0, %s223
    %s226 = sphi 0, %s225
    %s240 = sphi 0, %s226
    %s246 = sphi 0, %s248
    %s249 = sphi 0, %s246
    %s250 = sphi 0, %s249
    %s266 = sphi 0, %s250
  $region4: #{transformer_forward.18} parent=0 // loop_header_branch
    %19 = sbr.rel (%p17) target = $region8
  $region5: #{transformer_forward.18} parent=0 // loop_body
    %s21 = ssub.s32 %s16, 1
    %s22 = ssub.s32 %s16, 2
    %s23 = sadd.s32 %s16, 1
    %s24 = ssub.s32 %s16, %s23
    %p25 = scmp.eq.s32.totalorder %s24, 0
    %s27 = sadd.s32 %s26, 1
    %s28 = scalar_select %p25, %s26, %s27
    %p31 = pneg %p25
    %p32 = scmp.eq.s32.totalorder %s16, 1
    %p33 = por %p31, %p32
    %p34 = scmp.ne.s32.totalorder %s26, %s29
    %p35 = scmp.eq.s32.totalorder %s16, 0
    %p36 = por %p34, %p35
    %p37 = scmp.ne.s32.totalorder %s26, %s29
    %p38 = scmp.eq.s32.totalorder %s21, 1
    %p39 = por %p37, %p38
    %p40 = scmp.ne.s32.totalorder %s29, %s30
    %p41 = scmp.eq.s32.totalorder %s21, 0
    %p42 = por %p40, %p41
    %p43 = scmp.ne.s32.totalorder %s29, %s30
    %p44 = scmp.eq.s32.totalorder %s22, 1
    %p45 = por %p43, %p44
    %p47 = scmp.ne.s32.totalorder %s30, %s46
    %p48 = scmp.eq.s32.totalorder %s22, 0
    %p49 = por %p47, %p48
    %s50 = ssub.s32 %s16, %s23
    %p51 = scmp.eq.s32.totalorder %s50, 0
    %s53 = sadd.s32 %s52, 1
    %s54 = scalar_select %p51, %s52, %s53
    %p57 = pneg %p51
    %p58 = scmp.eq.s32.totalorder %s16, 1
    %p59 = por %p57, %p58
    %p60 = scmp.ne.s32.totalorder %s52, %s55
    %p61 = scmp.eq.s32.totalorder %s16, 0
    %p62 = por %p60, %p61
    %p63 = scmp.ne.s32.totalorder %s52, %s55
    %p64 = scmp.eq.s32.totalorder %s21, 1
    %p65 = por %p63, %p64
    %p66 = scmp.ne.s32.totalorder %s55, %s56
    %p67 = scmp.eq.s32.totalorder %s21, 0
    %p68 = por %p66, %p67
    %p69 = scmp.ne.s32.totalorder %s55, %s56
    %p70 = scmp.eq.s32.totalorder %s22, 1
    %p71 = por %p69, %p70
    %p73 = scmp.ne.s32.totalorder %s56, %s72
    %p74 = scmp.eq.s32.totalorder %s22, 0
    %p75 = por %p73, %p74
    %s77 = sadd.s32 %s76, 1
    %p80 = scmp.eq.s32.totalorder %s16, 1
    %p81 = scmp.ne.s32.totalorder %s76, %s78
    %p82 = scmp.eq.s32.totalorder %s16, 0
    %p83 = por %p81, %p82
    %p84 = scmp.ne.s32.totalorder %s76, %s78
    %p85 = scmp.eq.s32.totalorder %s21, 1
    %p86 = por %p84, %p85
    %p87 = scmp.ne.s32.totalorder %s78, %s79
    %p88 = scmp.eq.s32.totalorder %s21, 0
    %p89 = por %p87, %p88
    %p90 = scmp.ne.s32.totalorder %s78, %s79
    %p91 = scmp.eq.s32.totalorder %s22, 1
    %p92 = por %p90, %p91
    %p94 = scmp.ne.s32.totalorder %s79, %s93
    %p95 = scmp.eq.s32.totalorder %s22, 0
    %p96 = por %p94, %p95
    %s98 = sadd.s32 %s97, 1
    %p101 = scmp.eq.s32.totalorder %s16, 1
    %p102 = scmp.ne.s32.totalorder %s97, %s99
    %p103 = scmp.eq.s32.totalorder %s16, 0
    %p104 = por %p102, %p103
    %p105 = scmp.ne.s32.totalorder %s97, %s99
    %p106 = scmp.eq.s32.totalorder %s21, 1
    %p107 = por %p105, %p106
    %p108 = scmp.ne.s32.totalorder %s99, %s100
    %p109 = scmp.eq.s32.totalorder %s21, 0
    %p110 = por %p108, %p109
    %p111 = scmp.ne.s32.totalorder %s99, %s100
    %p112 = scmp.eq.s32.totalorder %s22, 1
    %p113 = por %p111, %p112
    %p115 = scmp.ne.s32.totalorder %s100, %s114
    %p116 = scmp.eq.s32.totalorder %s22, 0
    %p117 = por %p115, %p116
    %s119 = sadd.s32 %s118, 1
    %p122 = scmp.eq.s32.totalorder %s16, 1
    %p123 = scmp.ne.s32.totalorder %s118, %s120
    %p124 = scmp.eq.s32.totalorder %s16, 0
    %p125 = por %p123, %p124
    %p126 = scmp.ne.s32.totalorder %s118, %s120
    %p127 = scmp.eq.s32.totalorder %s21, 1
    %p128 = por %p126, %p127
    %p129 = scmp.ne.s32.totalorder %s120, %s121
    %p130 = scmp.eq.s32.totalorder %s21, 0
    %p131 = por %p129, %p130
    %p132 = scmp.ne.s32.totalorder %s120, %s121
    %p133 = scmp.eq.s32.totalorder %s22, 1
    %p134 = por %p132, %p133
    %p136 = scmp.ne.s32.totalorder %s121, %s135
    %p137 = scmp.eq.s32.totalorder %s22, 0
    %p138 = por %p136, %p137
    %s140 = sadd.s32 %s139, 1
    %p143 = scmp.eq.s32.totalorder %s16, 1
    %p144 = scmp.ne.s32.totalorder %s139, %s141
    %p145 = scmp.eq.s32.totalorder %s16, 0
    %p146 = por %p144, %p145
    %p147 = scmp.ne.s32.totalorder %s139, %s141
    %p148 = scmp.eq.s32.totalorder %s21, 1
    %p149 = por %p147, %p148
    %p150 = scmp.ne.s32.totalorder %s141, %s142
    %p151 = scmp.eq.s32.totalorder %s21, 0
    %p152 = por %p150, %p151
    %p153 = scmp.ne.s32.totalorder %s141, %s142
    %p154 = scmp.eq.s32.totalorder %s22, 1
    %p155 = por %p153, %p154
    %p157 = scmp.ne.s32.totalorder %s142, %s156
    %p158 = scmp.eq.s32.totalorder %s22, 0
    %p159 = por %p157, %p158
    %s161 = sadd.s32 %s160, 1
    %p164 = scmp.eq.s32.totalorder %s16, 1
    %p165 = scmp.ne.s32.totalorder %s160, %s162
    %p166 = scmp.eq.s32.totalorder %s16, 0
    %p167 = por %p165, %p166
    %p168 = scmp.ne.s32.totalorder %s160, %s162
    %p169 = scmp.eq.s32.totalorder %s21, 1
    %p170 = por %p168, %p169
    %p171 = scmp.ne.s32.totalorder %s162, %s163
    %p172 = scmp.eq.s32.totalorder %s21, 0
    %p173 = por %p171, %p172
    %p174 = scmp.ne.s32.totalorder %s162, %s163
    %p175 = scmp.eq.s32.totalorder %s22, 1
    %p176 = por %p174, %p175
    %p178 = scmp.ne.s32.totalorder %s163, %s177
    %p179 = scmp.eq.s32.totalorder %s22, 0
    %p180 = por %p178, %p179
    %s182 = sadd.s32 %s181, 1
    %p185 = scmp.eq.s32.totalorder %s16, 1
    %p186 = scmp.ne.s32.totalorder %s181, %s183
    %p187 = scmp.eq.s32.totalorder %s16, 0
    %p188 = por %p186, %p187
    %p189 = scmp.ne.s32.totalorder %s181, %s183
    %p190 = scmp.eq.s32.totalorder %s21, 1
    %p191 = por %p189, %p190
    %p192 = scmp.ne.s32.totalorder %s183, %s184
    %p193 = scmp.eq.s32.totalorder %s21, 0
    %p194 = por %p192, %p193
    %p195 = scmp.ne.s32.totalorder %s183, %s184
    %p196 = scmp.eq.s32.totalorder %s22, 1
    %p197 = por %p195, %p196
    %p199 = scmp.ne.s32.totalorder %s184, %s198
    %p200 = scmp.eq.s32.totalorder %s22, 0
    %p201 = por %p199, %p200
    %s203 = sadd.s32 %s202, 1
    %p206 = scmp.eq.s32.totalorder %s16, 1
    %p207 = scmp.ne.s32.totalorder %s202, %s204
    %p208 = scmp.eq.s32.totalorder %s16, 0
    %p209 = por %p207, %p208
    %p210 = scmp.ne.s32.totalorder %s202, %s204
    %p211 = scmp.eq.s32.totalorder %s21, 1
    %p212 = por %p210, %p211
    %p213 = scmp.ne.s32.totalorder %s204, %s205
    %p214 = scmp.eq.s32.totalorder %s21, 0
    %p215 = por %p213, %p214
    %p216 = scmp.ne.s32.totalorder %s204, %s205
    %p217 = scmp.eq.s32.totalorder %s22, 1
    %p218 = por %p216, %p217
    %p220 = scmp.ne.s32.totalorder %s205, %s219
    %p221 = scmp.eq.s32.totalorder %s22, 0
    %p222 = por %p220, %p221
    %s224 = sadd.s32 %s223, 1
    %p227 = scmp.eq.s32.totalorder %s16, 1
    %p228 = scmp.ne.s32.totalorder %s223, %s225
    %p229 = scmp.eq.s32.totalorder %s16, 0
    %p230 = por %p228, %p229
    %p231 = scmp.ne.s32.totalorder %s223, %s225
    %p232 = scmp.eq.s32.totalorder %s21, 1
    %p233 = por %p231, %p232
    %p234 = scmp.ne.s32.totalorder %s225, %s226
    %p235 = scmp.eq.s32.totalorder %s21, 0
    %p236 = por %p234, %p235
    %p237 = scmp.ne.s32.totalorder %s225, %s226
    %p238 = scmp.eq.s32.totalorder %s22, 1
    %p239 = por %p237, %p238
    %p241 = scmp.ne.s32.totalorder %s226, %s240
    %p242 = scmp.eq.s32.totalorder %s22, 0
    %p243 = por %p241, %p242
    %s244 = ssub.s32 %s16, %s23
    %p245 = scmp.eq.s32.totalorder %s244, 0
    %s247 = sadd.s32 %s246, 1
    %s248 = scalar_select %p245, %s246, %s247
    %p251 = pneg %p245
    %p252 = scmp.eq.s32.totalorder %s16, 1
    %p253 = por %p251, %p252
    %p254 = scmp.ne.s32.totalorder %s246, %s249
    %p255 = scmp.eq.s32.totalorder %s16, 0
    %p256 = por %p254, %p255
    %p257 = scmp.ne.s32.totalorder %s246, %s249
    %p258 = scmp.eq.s32.totalorder %s21, 1
    %p259 = por %p257, %p258
    %p260 = scmp.ne.s32.totalorder %s249, %s250
    %p261 = scmp.eq.s32.totalorder %s21, 0
    %p262 = por %p260, %p261
    %p263 = scmp.ne.s32.totalorder %s249, %s250
    %p264 = scmp.eq.s32.totalorder %s22, 1
    %p265 = por %p263, %p264
    %p267 = scmp.ne.s32.totalorder %s250, %s266
    %p268 = scmp.eq.s32.totalorder %s22, 0
    %p269 = por %p267, %p268
    %p270 = scmp.le.s32.totalorder 1, %s16
    %p271 = scmp.lt.s32.totalorder %s16, 3
    %p272 = pnand %p270, %p271
    %p273 = pneg %p272
    // Predicated region
    $region9: #{transformer_forward.18} parent=5 // pred_check
      _
    $region10: #{transformer_forward.18} parent=5 // pred_check_branch
      %275 = sbr.rel (%p272) target = $region12
    $region11: #{transformer_forward.18} parent=5 // pred_region
      %s276 = ssub.s32 %s16, 1
      // Predicated region
      $region13: #{transformer_forward.18} parent=11 // pred_check
        %p277 = pneg %p89
      $region14: #{transformer_forward.18} parent=11 // pred_check_branch
        %279 = sbr.rel (%p277) target = $region16
      $region15: #{transformer_forward.18} parent=11 // pred_region
        _
      $region16: #{transformer_forward.18} parent=11 // pred_fallthru
        _
      // Predicated region
      $region17: #{transformer_forward.18} parent=11 // pred_check
        %p280 = pneg %p110
      $region18: #{transformer_forward.18} parent=11 // pred_check_branch
        %282 = sbr.rel (%p280) target = $region20
      $region19: #{transformer_forward.18} parent=11 // pred_region
        _
      $region20: #{transformer_forward.18} parent=11 // pred_fallthru
        _
      // Predicated region
      $region21: #{transformer_forward.18} parent=11 // pred_check
        %p283 = pneg %p131
      $region22: #{transformer_forward.18} parent=11 // pred_check_branch
        %285 = sbr.rel (%p283) target = $region24
      $region23: #{transformer_forward.18} parent=11 // pred_region
        _
      $region24: #{transformer_forward.18} parent=11 // pred_fallthru
        _
      // Predicated region
      $region25: #{transformer_forward.18} parent=11 // pred_check
        %p286 = pneg %p152
      $region26: #{transformer_forward.18} parent=11 // pred_check_branch
        %288 = sbr.rel (%p286) target = $region28
      $region27: #{transformer_forward.18} parent=11 // pred_region
        _
      $region28: #{transformer_forward.18} parent=11 // pred_fallthru
        _
      // Predicated region
      $region29: #{transformer_forward.18} parent=11 // pred_check
        %p289 = pneg %p173
      $region30: #{transformer_forward.18} parent=11 // pred_check_branch
        %291 = sbr.rel (%p289) target = $region32
      $region31: #{transformer_forward.18} parent=11 // pred_region
        _
      $region32: #{transformer_forward.18} parent=11 // pred_fallthru
        _
      // Predicated region
      $region33: #{transformer_forward.18} parent=11 // pred_check
        %p292 = pneg %p194
      $region34: #{transformer_forward.18} parent=11 // pred_check_branch
        %294 = sbr.rel (%p292) target = $region36
      $region35: #{transformer_forward.18} parent=11 // pred_region
        _
      $region36: #{transformer_forward.18} parent=11 // pred_fallthru
        _
      // Predicated region
      $region37: #{transformer_forward.18} parent=11 // pred_check
        %p295 = pneg %p215
      $region38: #{transformer_forward.18} parent=11 // pred_check_branch
        %297 = sbr.rel (%p295) target = $region40
      $region39: #{transformer_forward.18} parent=11 // pred_region
        _
      $region40: #{transformer_forward.18} parent=11 // pred_fallthru
        _
      // Predicated region
      $region41: #{transformer_forward.18} parent=11 // pred_check
        %p298 = pneg %p236
      $region42: #{transformer_forward.18} parent=11 // pred_check_branch
        %300 = sbr.rel (%p298) target = $region44
      $region43: #{transformer_forward.18} parent=11 // pred_region
        _
      $region44: #{transformer_forward.18} parent=11 // pred_fallthru
        _
    $region12: #{transformer_forward.18} parent=5 // pred_fallthru
      _
    %p301 = scmp.lt.s32.totalorder %s16, 2
    // Predicated region
    $region45: #{transformer_forward.18} parent=5 // pred_check
      %p302 = pneg %p301
    $region46: #{transformer_forward.18} parent=5 // pred_check_branch
      %304 = sbr.rel (%p302) target = $region48
    $region47: #{transformer_forward.18} parent=5 // pred_region
      // Predicated region
      $region49: #{transformer_forward.18} parent=47 // pred_check
        %p305 = pneg %p36
      $region50: #{transformer_forward.18} parent=47 // pred_check_branch
        %307 = sbr.rel (%p305) target = $region52
      $region51: #{transformer_forward.18} parent=47 // pred_region
        %p308 = scmp.lt.s32.totalorder %s16, 1
        %s309 = scalar_select %p308, %s16, 1
        %s310 = smul.addr %s309, 8
        %s311 = scalar_lea.vmem %s0, %s310
      $region52: #{transformer_forward.18} parent=47 // pred_fallthru
        _
      // Predicated region
      $region53: #{transformer_forward.18} parent=47 // pred_check
        %p312 = pneg %p62
      $region54: #{transformer_forward.18} parent=47 // pred_check_branch
        %314 = sbr.rel (%p312) target = $region56
      $region55: #{transformer_forward.18} parent=47 // pred_region
        %p315 = scmp.lt.s32.totalorder %s16, 1
        %s316 = scalar_select %p315, %s16, 1
        %s317 = smul.addr %s316, 8
        %s318 = scalar_lea.vmem %s1, %s317
      $region56: #{transformer_forward.18} parent=47 // pred_fallthru
        _
    $region48: #{transformer_forward.18} parent=5 // pred_fallthru
      _
    %p319 = scmp.le.s32.totalorder 1, %s16
    %p320 = scmp.lt.s32.totalorder %s16, 3
    %p321 = pnand %p319, %p320
    %p322 = pneg %p321
    // Predicated region
    $region57: #{transformer_forward.18} parent=5 // pred_check
      _
    $region58: #{transformer_forward.18} parent=5 // pred_check_branch
      %324 = sbr.rel (%p321) target = $region60
    $region59: #{transformer_forward.18} parent=5 // pred_region
      %s325 = ssub.s32 %s16, 1
      %p326 = scmp.lt.s32.totalorder %s21, 1
      %s327 = scalar_select %p326, %s21, 1
      %s328 = smul.addr %s327, 8
      %s329 = scalar_lea.vmem %s0, %s328
      %p330 = pneg %p42
      %p331 = pneg %p39
      %p332 = scmp.lt.s32.totalorder %s21, 1
      %s333 = scalar_select %p332, %s21, 1
      %s334 = smul.addr %s333, 8
      %s335 = scalar_lea.vmem %s1, %s334
      %p336 = pneg %p68
      %p337 = pneg %p65
      %p338 = pneg %p89
      %p339 = pneg %p86
      %p340 = pneg %p110
      %p341 = pneg %p107
      %p342 = pneg %p131
      %p343 = pneg %p128
      %p344 = pneg %p152
      %p345 = pneg %p149
      %p346 = pneg %p173
      %p347 = pneg %p170
      %p348 = pneg %p194
      %p349 = pneg %p191
      %p350 = pneg %p215
      %p351 = pneg %p212
      %p352 = pneg %p236
      %p353 = pneg %p233
      %p354 = pneg %p262
      %p355 = pneg %p259
      %p356 = scmp.lt.s32.totalorder %s21, 1
      %s357 = scalar_select %p356, %s21, 1
      %s358 = smul.addr %s357, 8
      %s359 = scalar_lea.vmem %s10, %s358
      %p360 = scmp.lt.s32.totalorder %s21, 1
      %s361 = scalar_select %p360, %s21, 1
      %s362 = smul.addr %s361, 8
      %s363 = scalar_lea.vmem %s0, %s362
      %p364 = scmp.lt.s32.totalorder %s21, 1
      %s365 = scalar_select %p364, %s21, 1
      %s366 = smul.addr %s365, 8
      %s367 = scalar_lea.vmem %s1, %s366
      %p368 = scmp.lt.s32.totalorder %s21, 1
      %s369 = scalar_select %p368, %s21, 1
      %s370 = smul.addr %s369, 8
      %s371 = scalar_lea.vmem %s10, %s370
      %v373 = vld [vmem:[%s363] sm:$0xff]
      %v374 = vld [vmem:[%s367] sm:$0xff]
      %v375 = vld [vmem:[%s2] sm:$0xff]
      %v376 = vld [vmem:[%s2 + $0x8] sm:$0xff]
      %v377 = vld [vmem:[%s2 + $0x10] sm:$0xff]
      %v378 = vld [vmem:[%s2 + $0x18] sm:$0xff]
      %v379 = vpack.c.bf16 %v373, %v373
      %v380 = vpack.c.bf16 %v376, %v375
      %v381 = vpack.c.bf16 %v378, %v377
      %v382 = vld [vmem:[%s3] sm:$0x1]
      %v384 = vlaneseq
      %v385 = vshrl.u32 %v384, 7
      %v386 = vsub.s32 0, %v385
      %v387 = vrot.slane %v382, %v386
      %vm389 = vcmask 261120
      %v391 = vsel %vm389, %v379, 0
      %393 = vmatprep.subr.bf16.mxu0 0
      %394 = vmatpush1.bf16.msra.mxu0 0
      %395 = vmatprep.subr.bf16.mxu0 0
      %396 = vmatpush1.bf16.msra.mxu0 0
      %397 = vmatprep.subr.bf16.mxu0 0
      %398 = vmatpush1.bf16.msra.mxu0 0
      %399 = vmatprep.subr.bf16.mxu0 0
      %400 = vmatpush1.bf16.msra.mxu0 0
      %401 = vmatprep.subr.bf16.mxu0 0
      %402 = vmatpush1.bf16.msra.mxu0 0
      %403 = vmatprep.subr.bf16.mxu0 0
      %404 = vmatpush1.bf16.msra.mxu0 0
      %405 = vmatprep.subr.bf16.mxu0 0
      %406 = vmatpush1.bf16.msra.mxu0 %v381
      %407 = vmatprep.subr.bf16.mxu0 0
      %408 = vmatpush1.bf16.msra.mxu0 %v380
      %409 = vmatprep.subr.bf16.mxu0 0
      %410 = vmatpush2.bf16.msra.mxu0 0
      %411 = vmatprep.subr.bf16.mxu0 0
      %412 = vmatpush2.bf16.msra.mxu0 0
      %413 = vmatprep.subr.bf16.mxu0 0
      %414 = vmatpush2.bf16.msra.mxu0 0
      %415 = vmatprep.subr.bf16.mxu0 0
      %416 = vmatpush2.bf16.msra.mxu0 0
      %417 = vmatprep.subr.bf16.mxu0 0
      %418 = vmatpush2.bf16.msra.mxu0 0
      %419 = vmatprep.subr.bf16.mxu0 0
      %420 = vmatpush2.bf16.msra.mxu0 0
      %421 = vmatprep.subr.bf16.mxu0 0
      %422 = vmatpush2.bf16.msra.mxu0 0
      %423 = vmatprep.subr.bf16.mxu0 0
      %424 = vmatpush2.bf16.msra.mxu0 0
      %425 = vmatprep.mubr.bf16.mxu0 0
      %426 = vmatmul.mubr.bf16.gmra.mxu0 %v391
      %v427 = vpop.f32.mrf.mxu0
      %v428 = vadd.f32 %v387, %v427
      %v429 = vpop.f32.mrf.mxu0
      %v430 = vpop.f32.mrf.mxu0
      %v431 = vpop.f32.mrf.mxu0
      %432 = vdwg.mxu0
      %v433 = vld [vmem:[%s4] sm:$0xff]
      %v434 = vld [vmem:[%s4 + $0x8] sm:$0xff]
      %v435 = vld [vmem:[%s4 + $0x10] sm:$0xff]
      %v436 = vld [vmem:[%s4 + $0x18] sm:$0xff]
      %v437 = vpack.c.bf16 %v374, %v374
      %v438 = vpack.c.bf16 %v434, %v433
      %v439 = vpack.c.bf16 %v436, %v435
      %v440 = vld [vmem:[%s5] sm:$0x1]
      %v442 = vlaneseq
      %v443 = vshrl.u32 %v442, 7
      %v444 = vsub.s32 0, %v443
      %v445 = vrot.slane %v440, %v444
      %v448 = vsel %vm389, %v437, 0
      %450 = vmatprep.subr.bf16.mxu0 0
      %451 = vmatpush1.bf16.msra.mxu0 0
      %452 = vmatprep.subr.bf16.mxu0 0
      %453 = vmatpush1.bf16.msra.mxu0 0
      %454 = vmatprep.subr.bf16.mxu0 0
      %455 = vmatpush1.bf16.msra.mxu0 0
      %456 = vmatprep.subr.bf16.mxu0 0
      %457 = vmatpush1.bf16.msra.mxu0 0
      %458 = vmatprep.subr.bf16.mxu0 0
      %459 = vmatpush1.bf16.msra.mxu0 0
      %460 = vmatprep.subr.bf16.mxu0 0
      %461 = vmatpush1.bf16.msra.mxu0 0
      %462 = vmatprep.subr.bf16.mxu0 0
      %463 = vmatpush1.bf16.msra.mxu0 %v439
      %464 = vmatprep.subr.bf16.mxu0 0
      %465 = vmatpush1.bf16.msra.mxu0 %v438
      %466 = vmatprep.subr.bf16.mxu0 0
      %467 = vmatpush2.bf16.msra.mxu0 0
      %468 = vmatprep.subr.bf16.mxu0 0
      %469 = vmatpush2.bf16.msra.mxu0 0
      %470 = vmatprep.subr.bf16.mxu0 0
      %471 = vmatpush2.bf16.msra.mxu0 0
      %472 = vmatprep.subr.bf16.mxu0 0
      %473 = vmatpush2.bf16.msra.mxu0 0
      %474 = vmatprep.subr.bf16.mxu0 0
      %475 = vmatpush2.bf16.msra.mxu0 0
      %476 = vmatprep.subr.bf16.mxu0 0
      %477 = vmatpush2.bf16.msra.mxu0 0
      %478 = vmatprep.subr.bf16.mxu0 0
      %479 = vmatpush2.bf16.msra.mxu0 0
      %480 = vmatprep.subr.bf16.mxu0 0
      %481 = vmatpush2.bf16.msra.mxu0 0
      %482 = vmatprep.mubr.bf16.mxu0 0
      %483 = vmatmul.mubr.bf16.gmra.mxu0 %v448
      %v484 = vpop.f32.mrf.mxu0
      %v485 = vadd.f32 %v445, %v484
      %v486 = vpop.f32.mrf.mxu0
      %v487 = vpop.f32.mrf.mxu0
      %v488 = vpop.f32.mrf.mxu0
      %489 = vdwg.mxu0
      %v490 = vpack.c.bf16 %v428, %v428
      %v491 = vpack.c.bf16 %v485, %v485
      %vm492 = vcmask 64512
      %v494 = vsel %vm492, %v490, 0
      %v497 = vsel %vm492, %v491, 0
      %499 = vmatprep.subr.bf16.mxu0 0
      %500 = vmatpush1.bf16.xpose.msra.mxu0 0
      %501 = vmatprep.subr.bf16.mxu0 0
      %502 = vmatpush1.bf16.xpose.msra.mxu0 0
      %503 = vmatprep.subr.bf16.mxu0 0
      %504 = vmatpush1.bf16.xpose.msra.mxu0 0
      %505 = vmatprep.subr.bf16.mxu0 0
      %506 = vmatpush1.bf16.xpose.msra.mxu0 0
      %507 = vmatprep.subr.bf16.mxu0 0
      %508 = vmatpush1.bf16.xpose.msra.mxu0 0
      %509 = vmatprep.subr.bf16.mxu0 0
      %510 = vmatpush1.bf16.xpose.msra.mxu0 0
      %511 = vmatprep.subr.bf16.mxu0 0
      %512 = vmatpush1.bf16.xpose.msra.mxu0 0
      %513 = vmatprep.subr.bf16.mxu0 0
      %514 = vmatpush1.bf16.xpose.msra.mxu0 %v497
      %515 = vmatprep.subr.bf16.mxu0 0
      %516 = vmatpush2.bf16.xpose.msra.mxu0 0
      %517 = vmatprep.subr.bf16.mxu0 0
      %518 = vmatpush2.bf16.xpose.msra.mxu0 0
      %519 = vmatprep.subr.bf16.mxu0 0
      %520 = vmatpush2.bf16.xpose.msra.mxu0 0
      %521 = vmatprep.subr.bf16.mxu0 0
      %522 = vmatpush2.bf16.xpose.msra.mxu0 0
      %523 = vmatprep.subr.bf16.mxu0 0
      %524 = vmatpush2.bf16.xpose.msra.mxu0 0
      %525 = vmatprep.subr.bf16.mxu0 0
      %526 = vmatpush2.bf16.xpose.msra.mxu0 0
      %527 = vmatprep.subr.bf16.mxu0 0
      %528 = vmatpush2.bf16.xpose.msra.mxu0 0
      %529 = vmatprep.subr.bf16.mxu0 0
      %530 = vmatpush2.bf16.xpose.msra.mxu0 0
      %531 = vmatprep.mubr.bf16.mxu0 0
      %532 = vmatmul.mubr.bf16.gmra.mxu0 %v494
      %v533 = vpop.f32.mrf.mxu0
      %v534 = vadd.f32 0.0, %v533
      %v535 = vpop.f32.mrf.mxu0
      %v536 = vpop.f32.mrf.mxu0
      %v537 = vpop.f32.mrf.mxu0
      %538 = vdwg.mxu0
      %v539 = vmul.f32 %v534, 0.35355338
      %v540 = vsel %vm492, %v539, -inf
      %541 = vmax.xlane.f32.xlu0 %v540
      %v542 = vpop.xlane.xlu0 %541
      %v543 = vsub.f32 %v539, %v542
      %v544 = vmul.f32 %v543, 1.442695
      %v545 = vpow.pop %v544
      %v546 = vsel %vm492, %v545, 0.0
      %547 = vadd.xlane.f32.xlu0 %v546
      %v548 = vpop.xlane.xlu0 %547
      %v549 = vrcp.pop %v548
      %v550 = vmul.f32 %v545, %v549
      %v551 = vpack.c.bf16 %v550, %v550
      %553 = vrot.lane.b32.xlu0 %v491, 96
      %v554 = vpop.permute.xlu0 %553
      %v556 = vsel %vm492, %v551, 0
      %vm558 = vcmask 1043456
      %v560 = vsel %vm558, %v554, 0
      %562 = vmatprep.subr.bf16.mxu0 0
      %563 = vmatpush1.bf16.msra.mxu0 0
      %564 = vmatprep.subr.bf16.mxu0 0
      %565 = vmatpush1.bf16.msra.mxu0 0
      %566 = vmatprep.subr.bf16.mxu0 0
      %567 = vmatpush1.bf16.msra.mxu0 0
      %568 = vmatprep.subr.bf16.mxu0 0
      %569 = vmatpush1.bf16.msra.mxu0 0
      %570 = vmatprep.subr.bf16.mxu0 0
      %571 = vmatpush1.bf16.msra.mxu0 0
      %572 = vmatprep.subr.bf16.mxu0 0
      %573 = vmatpush1.bf16.msra.mxu0 0
      %574 = vmatprep.subr.bf16.mxu0 0
      %575 = vmatpush1.bf16.msra.mxu0 0
      %576 = vmatprep.subr.bf16.mxu0 0
      %577 = vmatpush1.bf16.msra.mxu0 %v560
      %578 = vmatprep.subr.bf16.mxu0 0
      %579 = vmatpush2.bf16.msra.mxu0 0
      %580 = vmatprep.subr.bf16.mxu0 0
      %581 = vmatpush2.bf16.msra.mxu0 0
      %582 = vmatprep.subr.bf16.mxu0 0
      %583 = vmatpush2.bf16.msra.mxu0 0
      %584 = vmatprep.subr.bf16.mxu0 0
      %585 = vmatpush2.bf16.msra.mxu0 0
      %586 = vmatprep.subr.bf16.mxu0 0
      %587 = vmatpush2.bf16.msra.mxu0 0
      %588 = vmatprep.subr.bf16.mxu0 0
      %589 = vmatpush2.bf16.msra.mxu0 0
      %590 = vmatprep.subr.bf16.mxu0 0
      %591 = vmatpush2.bf16.msra.mxu0 0
      %592 = vmatprep.subr.bf16.mxu0 0
      %593 = vmatpush2.bf16.msra.mxu0 0
      %594 = vmatprep.mubr.bf16.mxu0 0
      %595 = vmatmul.mubr.bf16.gmra.mxu0 %v556
      %v596 = vpop.f32.mrf.mxu0
      %v597 = vadd.f32 0.0, %v596
      %v598 = vpop.f32.mrf.mxu0
      %v599 = vpop.f32.mrf.mxu0
      %v600 = vpop.f32.mrf.mxu0
      %601 = vdwg.mxu0
      %603 = vrot.lane.b32.xlu0 %v490, 120
      %v604 = vpop.permute.xlu0 %603
      %605 = vrot.lane.b32.xlu0 %v491, 120
      %v606 = vpop.permute.xlu0 %605
      %v608 = vsel %vm492, %v604, 0
      %v611 = vsel %vm492, %v606, 0
      %613 = vmatprep.subr.bf16.mxu0 0
      %614 = vmatpush1.bf16.xpose.msra.mxu0 0
      %615 = vmatprep.subr.bf16.mxu0 0
      %616 = vmatpush1.bf16.xpose.msra.mxu0 0
      %617 = vmatprep.subr.bf16.mxu0 0
      %618 = vmatpush1.bf16.xpose.msra.mxu0 0
      %619 = vmatprep.subr.bf16.mxu0 0
      %620 = vmatpush1.bf16.xpose.msra.mxu0 0
      %621 = vmatprep.subr.bf16.mxu0 0
      %622 = vmatpush1.bf16.xpose.msra.mxu0 0
      %623 = vmatprep.subr.bf16.mxu0 0
      %624 = vmatpush1.bf16.xpose.msra.mxu0 0
      %625 = vmatprep.subr.bf16.mxu0 0
      %626 = vmatpush1.bf16.xpose.msra.mxu0 0
      %627 = vmatprep.subr.bf16.mxu0 0
      %628 = vmatpush1.bf16.xpose.msra.mxu0 %v611
      %629 = vmatprep.subr.bf16.mxu0 0
      %630 = vmatpush2.bf16.xpose.msra.mxu0 0
      %631 = vmatprep.subr.bf16.mxu0 0
      %632 = vmatpush2.bf16.xpose.msra.mxu0 0
      %633 = vmatprep.subr.bf16.mxu0 0
      %634 = vmatpush2.bf16.xpose.msra.mxu0 0
      %635 = vmatprep.subr.bf16.mxu0 0
      %636 = vmatpush2.bf16.xpose.msra.mxu0 0
      %637 = vmatprep.subr.bf16.mxu0 0
      %638 = vmatpush2.bf16.xpose.msra.mxu0 0
      %639 = vmatprep.subr.bf16.mxu0 0
      %640 = vmatpush2.bf16.xpose.msra.mxu0 0
      %641 = vmatprep.subr.bf16.mxu0 0
      %642 = vmatpush2.bf16.xpose.msra.mxu0 0
      %643 = vmatprep.subr.bf16.mxu0 0
      %644 = vmatpush2.bf16.xpose.msra.mxu0 0
      %645 = vmatprep.mubr.bf16.mxu0 0
      %646 = vmatmul.mubr.bf16.gmra.mxu0 %v608
      %v647 = vpop.f32.mrf.mxu0
      %v648 = vadd.f32 0.0, %v647
      %v649 = vpop.f32.mrf.mxu0
      %v650 = vpop.f32.mrf.mxu0
      %v651 = vpop.f32.mrf.mxu0
      %652 = vdwg.mxu0
      %v653 = vmul.f32 %v648, 0.35355338
      %v654 = vsel %vm492, %v653, -inf
      %655 = vmax.xlane.f32.xlu0 %v654
      %v656 = vpop.xlane.xlu0 %655
      %v657 = vsub.f32 %v653, %v656
      %v658 = vmul.f32 %v657, 1.442695
      %v659 = vpow.pop %v658
      %v660 = vsel %vm492, %v659, 0.0
      %661 = vadd.xlane.f32.xlu0 %v660
      %v662 = vpop.xlane.xlu0 %661
      %v663 = vrcp.pop %v662
      %v664 = vmul.f32 %v659, %v663
      %v665 = vpack.c.bf16 %v664, %v664
      %666 = vrot.lane.b32.xlu0 %v491, 88
      %v667 = vpop.permute.xlu0 %666
      %v669 = vsel %vm492, %v665, 0
      %v672 = vsel %vm558, %v667, 0
      %674 = vmatprep.subr.bf16.mxu0 0
      %675 = vmatpush1.bf16.msra.mxu0 0
      %676 = vmatprep.subr.bf16.mxu0 0
      %677 = vmatpush1.bf16.msra.mxu0 0
      %678 = vmatprep.subr.bf16.mxu0 0
      %679 = vmatpush1.bf16.msra.mxu0 0
      %680 = vmatprep.subr.bf16.mxu0 0
      %681 = vmatpush1.bf16.msra.mxu0 0
      %682 = vmatprep.subr.bf16.mxu0 0
      %683 = vmatpush1.bf16.msra.mxu0 0
      %684 = vmatprep.subr.bf16.mxu0 0
      %685 = vmatpush1.bf16.msra.mxu0 0
      %686 = vmatprep.subr.bf16.mxu0 0
      %687 = vmatpush1.bf16.msra.mxu0 0
      %688 = vmatprep.subr.bf16.mxu0 0
      %689 = vmatpush1.bf16.msra.mxu0 %v672
      %690 = vmatprep.subr.bf16.mxu0 0
      %691 = vmatpush2.bf16.msra.mxu0 0
      %692 = vmatprep.subr.bf16.mxu0 0
      %693 = vmatpush2.bf16.msra.mxu0 0
      %694 = vmatprep.subr.bf16.mxu0 0
      %695 = vmatpush2.bf16.msra.mxu0 0
      %696 = vmatprep.subr.bf16.mxu0 0
      %697 = vmatpush2.bf16.msra.mxu0 0
      %698 = vmatprep.subr.bf16.mxu0 0
      %699 = vmatpush2.bf16.msra.mxu0 0
      %700 = vmatprep.subr.bf16.mxu0 0
      %701 = vmatpush2.bf16.msra.mxu0 0
      %702 = vmatprep.subr.bf16.mxu0 0
      %703 = vmatpush2.bf16.msra.mxu0 0
      %704 = vmatprep.subr.bf16.mxu0 0
      %705 = vmatpush2.bf16.msra.mxu0 0
      %706 = vmatprep.mubr.bf16.mxu0 0
      %707 = vmatmul.mubr.bf16.gmra.mxu0 %v669
      %v708 = vpop.f32.mrf.mxu0
      %v709 = vadd.f32 0.0, %v708
      %v710 = vpop.f32.mrf.mxu0
      %v711 = vpop.f32.mrf.mxu0
      %v712 = vpop.f32.mrf.mxu0
      %713 = vdwg.mxu0
      %714 = vrot.lane.b32.xlu0 %v490, 112
      %v715 = vpop.permute.xlu0 %714
      %716 = vrot.lane.b32.xlu0 %v491, 112
      %v717 = vpop.permute.xlu0 %716
      %v719 = vsel %vm492, %v715, 0
      %v722 = vsel %vm492, %v717, 0
      %724 = vmatprep.subr.bf16.mxu0 0
      %725 = vmatpush1.bf16.xpose.msra.mxu0 0
      %726 = vmatprep.subr.bf16.mxu0 0
      %727 = vmatpush1.bf16.xpose.msra.mxu0 0
      %728 = vmatprep.subr.bf16.mxu0 0
      %729 = vmatpush1.bf16.xpose.msra.mxu0 0
      %730 = vmatprep.subr.bf16.mxu0 0
      %731 = vmatpush1.bf16.xpose.msra.mxu0 0
      %732 = vmatprep.subr.bf16.mxu0 0
      %733 = vmatpush1.bf16.xpose.msra.mxu0 0
      %734 = vmatprep.subr.bf16.mxu0 0
      %735 = vmatpush1.bf16.xpose.msra.mxu0 0
      %736 = vmatprep.subr.bf16.mxu0 0
      %737 = vmatpush1.bf16.xpose.msra.mxu0 0
      %738 = vmatprep.subr.bf16.mxu0 0
      %739 = vmatpush1.bf16.xpose.msra.mxu0 %v722
      %740 = vmatprep.subr.bf16.mxu0 0
      %741 = vmatpush2.bf16.xpose.msra.mxu0 0
      %742 = vmatprep.subr.bf16.mxu0 0
      %743 = vmatpush2.bf16.xpose.msra.mxu0 0
      %744 = vmatprep.subr.bf16.mxu0 0
      %745 = vmatpush2.bf16.xpose.msra.mxu0 0
      %746 = vmatprep.subr.bf16.mxu0 0
      %747 = vmatpush2.bf16.xpose.msra.mxu0 0
      %748 = vmatprep.subr.bf16.mxu0 0
      %749 = vmatpush2.bf16.xpose.msra.mxu0 0
      %750 = vmatprep.subr.bf16.mxu0 0
      %751 = vmatpush2.bf16.xpose.msra.mxu0 0
      %752 = vmatprep.subr.bf16.mxu0 0
      %753 = vmatpush2.bf16.xpose.msra.mxu0 0
      %754 = vmatprep.subr.bf16.mxu0 0
      %755 = vmatpush2.bf16.xpose.msra.mxu0 0
      %756 = vmatprep.mubr.bf16.mxu0 0
      %757 = vmatmul.mubr.bf16.gmra.mxu0 %v719
      %v758 = vpop.f32.mrf.mxu0
      %v759 = vadd.f32 0.0, %v758
      %v760 = vpop.f32.mrf.mxu0
      %v761 = vpop.f32.mrf.mxu0
      %v762 = vpop.f32.mrf.mxu0
      %763 = vdwg.mxu0
      %v764 = vmul.f32 %v759, 0.35355338
      %v765 = vsel %vm492, %v764, -inf
      %766 = vmax.xlane.f32.xlu0 %v765
      %v767 = vpop.xlane.xlu0 %766
      %v768 = vsub.f32 %v764, %v767
      %v769 = vmul.f32 %v768, 1.442695
      %v770 = vpow.pop %v769
      %v771 = vsel %vm492, %v770, 0.0
      %772 = vadd.xlane.f32.xlu0 %v771
      %v773 = vpop.xlane.xlu0 %772
      %v774 = vrcp.pop %v773
      %v775 = vmul.f32 %v770, %v774
      %v776 = vpack.c.bf16 %v775, %v775
      %777 = vrot.lane.b32.xlu0 %v491, 80
      %v778 = vpop.permute.xlu0 %777
      %v780 = vsel %vm492, %v776, 0
      %v783 = vsel %vm558, %v778, 0
      %785 = vmatprep.subr.bf16.mxu0 0
      %786 = vmatpush1.bf16.msra.mxu0 0
      %787 = vmatprep.subr.bf16.mxu0 0
      %788 = vmatpush1.bf16.msra.mxu0 0
      %789 = vmatprep.subr.bf16.mxu0 0
      %790 = vmatpush1.bf16.msra.mxu0 0
      %791 = vmatprep.subr.bf16.mxu0 0
      %792 = vmatpush1.bf16.msra.mxu0 0
      %793 = vmatprep.subr.bf16.mxu0 0
      %794 = vmatpush1.bf16.msra.mxu0 0
      %795 = vmatprep.subr.bf16.mxu0 0
      %796 = vmatpush1.bf16.msra.mxu0 0
      %797 = vmatprep.subr.bf16.mxu0 0
      %798 = vmatpush1.bf16.msra.mxu0 0
      %799 = vmatprep.subr.bf16.mxu0 0
      %800 = vmatpush1.bf16.msra.mxu0 %v783
      %801 = vmatprep.subr.bf16.mxu0 0
      %802 = vmatpush2.bf16.msra.mxu0 0
      %803 = vmatprep.subr.bf16.mxu0 0
      %804 = vmatpush2.bf16.msra.mxu0 0
      %805 = vmatprep.subr.bf16.mxu0 0
      %806 = vmatpush2.bf16.msra.mxu0 0
      %807 = vmatprep.subr.bf16.mxu0 0
      %808 = vmatpush2.bf16.msra.mxu0 0
      %809 = vmatprep.subr.bf16.mxu0 0
      %810 = vmatpush2.bf16.msra.mxu0 0
      %811 = vmatprep.subr.bf16.mxu0 0
      %812 = vmatpush2.bf16.msra.mxu0 0
      %813 = vmatprep.subr.bf16.mxu0 0
      %814 = vmatpush2.bf16.msra.mxu0 0
      %815 = vmatprep.subr.bf16.mxu0 0
      %816 = vmatpush2.bf16.msra.mxu0 0
      %817 = vmatprep.mubr.bf16.mxu0 0
      %818 = vmatmul.mubr.bf16.gmra.mxu0 %v780
      %v819 = vpop.f32.mrf.mxu0
      %v820 = vadd.f32 0.0, %v819
      %v821 = vpop.f32.mrf.mxu0
      %v822 = vpop.f32.mrf.mxu0
      %v823 = vpop.f32.mrf.mxu0
      %824 = vdwg.mxu0
      %825 = vrot.lane.b32.xlu0 %v490, 104
      %v826 = vpop.permute.xlu0 %825
      %827 = vrot.lane.b32.xlu0 %v491, 104
      %v828 = vpop.permute.xlu0 %827
      %v830 = vsel %vm492, %v826, 0
      %v833 = vsel %vm492, %v828, 0
      %835 = vmatprep.subr.bf16.mxu0 0
      %836 = vmatpush1.bf16.xpose.msra.mxu0 0
      %837 = vmatprep.subr.bf16.mxu0 0
      %838 = vmatpush1.bf16.xpose.msra.mxu0 0
      %839 = vmatprep.subr.bf16.mxu0 0
      %840 = vmatpush1.bf16.xpose.msra.mxu0 0
      %841 = vmatprep.subr.bf16.mxu0 0
      %842 = vmatpush1.bf16.xpose.msra.mxu0 0
      %843 = vmatprep.subr.bf16.mxu0 0
      %844 = vmatpush1.bf16.xpose.msra.mxu0 0
      %845 = vmatprep.subr.bf16.mxu0 0
      %846 = vmatpush1.bf16.xpose.msra.mxu0 0
      %847 = vmatprep.subr.bf16.mxu0 0
      %848 = vmatpush1.bf16.xpose.msra.mxu0 0
      %849 = vmatprep.subr.bf16.mxu0 0
      %850 = vmatpush1.bf16.xpose.msra.mxu0 %v833
      %851 = vmatprep.subr.bf16.mxu0 0
      %852 = vmatpush2.bf16.xpose.msra.mxu0 0
      %853 = vmatprep.subr.bf16.mxu0 0
      %854 = vmatpush2.bf16.xpose.msra.mxu0 0
      %855 = vmatprep.subr.bf16.mxu0 0
      %856 = vmatpush2.bf16.xpose.msra.mxu0 0
      %857 = vmatprep.subr.bf16.mxu0 0
      %858 = vmatpush2.bf16.xpose.msra.mxu0 0
      %859 = vmatprep.subr.bf16.mxu0 0
      %860 = vmatpush2.bf16.xpose.msra.mxu0 0
      %861 = vmatprep.subr.bf16.mxu0 0
      %862 = vmatpush2.bf16.xpose.msra.mxu0 0
      %863 = vmatprep.subr.bf16.mxu0 0
      %864 = vmatpush2.bf16.xpose.msra.mxu0 0
      %865 = vmatprep.subr.bf16.mxu0 0
      %866 = vmatpush2.bf16.xpose.msra.mxu0 0
      %867 = vmatprep.mubr.bf16.mxu0 0
      %868 = vmatmul.mubr.bf16.gmra.mxu0 %v830
      %v869 = vpop.f32.mrf.mxu0
      %v870 = vadd.f32 0.0, %v869
      %v871 = vpop.f32.mrf.mxu0
      %v872 = vpop.f32.mrf.mxu0
      %v873 = vpop.f32.mrf.mxu0
      %874 = vdwg.mxu0
      %v875 = vmul.f32 %v870, 0.35355338
      %v876 = vsel %vm492, %v875, -inf
      %877 = vmax.xlane.f32.xlu0 %v876
      %v878 = vpop.xlane.xlu0 %877
      %v879 = vsub.f32 %v875, %v878
      %v880 = vmul.f32 %v879, 1.442695
      %v881 = vpow.pop %v880
      %v882 = vsel %vm492, %v881, 0.0
      %883 = vadd.xlane.f32.xlu0 %v882
      %v884 = vpop.xlane.xlu0 %883
      %v885 = vrcp.pop %v884
      %v886 = vmul.f32 %v881, %v885
      %v887 = vpack.c.bf16 %v886, %v886
      %888 = vrot.lane.b32.xlu0 %v491, 72
      %v889 = vpop.permute.xlu0 %888
      %v891 = vsel %vm492, %v887, 0
      %v894 = vsel %vm558, %v889, 0
      %896 = vmatprep.subr.bf16.mxu0 0
      %897 = vmatpush1.bf16.msra.mxu0 0
      %898 = vmatprep.subr.bf16.mxu0 0
      %899 = vmatpush1.bf16.msra.mxu0 0
      %900 = vmatprep.subr.bf16.mxu0 0
      %901 = vmatpush1.bf16.msra.mxu0 0
      %902 = vmatprep.subr.bf16.mxu0 0
      %903 = vmatpush1.bf16.msra.mxu0 0
      %904 = vmatprep.subr.bf16.mxu0 0
      %905 = vmatpush1.bf16.msra.mxu0 0
      %906 = vmatprep.subr.bf16.mxu0 0
      %907 = vmatpush1.bf16.msra.mxu0 0
      %908 = vmatprep.subr.bf16.mxu0 0
      %909 = vmatpush1.bf16.msra.mxu0 0
      %910 = vmatprep.subr.bf16.mxu0 0
      %911 = vmatpush1.bf16.msra.mxu0 %v894
      %912 = vmatprep.subr.bf16.mxu0 0
      %913 = vmatpush2.bf16.msra.mxu0 0
      %914 = vmatprep.subr.bf16.mxu0 0
      %915 = vmatpush2.bf16.msra.mxu0 0
      %916 = vmatprep.subr.bf16.mxu0 0
      %917 = vmatpush2.bf16.msra.mxu0 0
      %918 = vmatprep.subr.bf16.mxu0 0
      %919 = vmatpush2.bf16.msra.mxu0 0
      %920 = vmatprep.subr.bf16.mxu0 0
      %921 = vmatpush2.bf16.msra.mxu0 0
      %922 = vmatprep.subr.bf16.mxu0 0
      %923 = vmatpush2.bf16.msra.mxu0 0
      %924 = vmatprep.subr.bf16.mxu0 0
      %925 = vmatpush2.bf16.msra.mxu0 0
      %926 = vmatprep.subr.bf16.mxu0 0
      %927 = vmatpush2.bf16.msra.mxu0 0
      %928 = vmatprep.mubr.bf16.mxu0 0
      %929 = vmatmul.mubr.bf16.gmra.mxu0 %v891
      %v930 = vpop.f32.mrf.mxu0
      %v931 = vadd.f32 0.0, %v930
      %v932 = vpop.f32.mrf.mxu0
      %v933 = vpop.f32.mrf.mxu0
      %v934 = vpop.f32.mrf.mxu0
      %935 = vdwg.mxu0
      %937 = vrot.lane.b32.xlu0 %v709, 8
      %v938 = vpop.permute.xlu0 %937
      %941 = vrot.lane.b32.xlu0 %v820, 16
      %v942 = vpop.permute.xlu0 %941
      %945 = vrot.lane.b32.xlu0 %v931, 24
      %v946 = vpop.permute.xlu0 %945
      %v948 = vsel %vm492, %v597, %v938
      %vm949 = vcmask 130048
      %v950 = vsel %vm949, %v948, %v942
      %vm951 = vcmask 195584
      %v952 = vsel %vm951, %v950, %v946
      %v953 = vld [vmem:[%s6] sm:$0xff]
      %v954 = vld [vmem:[%s6 + $0x8] sm:$0xff]
      %v955 = vld [vmem:[%s6 + $0x10] sm:$0xff]
      %v956 = vld [vmem:[%s6 + $0x18] sm:$0xff]
      %v957 = vpack.c.bf16 %v952, %v952
      %v958 = vpack.c.bf16 %v954, %v953
      %v959 = vpack.c.bf16 %v956, %v955
      %v960 = vld [vmem:[%s7] sm:$0x1]
      %v962 = vlaneseq
      %v963 = vshrl.u32 %v962, 7
      %v964 = vsub.s32 0, %v963
      %v965 = vrot.slane %v960, %v964
      %v968 = vsel %vm389, %v957, 0
      %970 = vmatprep.subr.bf16.mxu0 0
      %971 = vmatpush1.bf16.msra.mxu0 0
      %972 = vmatprep.subr.bf16.mxu0 0
      %973 = vmatpush1.bf16.msra.mxu0 0
      %974 = vmatprep.subr.bf16.mxu0 0
      %975 = vmatpush1.bf16.msra.mxu0 0
      %976 = vmatprep.subr.bf16.mxu0 0
      %977 = vmatpush1.bf16.msra.mxu0 0
      %978 = vmatprep.subr.bf16.mxu0 0
      %979 = vmatpush1.bf16.msra.mxu0 0
      %980 = vmatprep.subr.bf16.mxu0 0
      %981 = vmatpush1.bf16.msra.mxu0 0
      %982 = vmatprep.subr.bf16.mxu0 0
      %983 = vmatpush1.bf16.msra.mxu0 %v959
      %984 = vmatprep.subr.bf16.mxu0 0
      %985 = vmatpush1.bf16.msra.mxu0 %v958
      %986 = vmatprep.subr.bf16.mxu0 0
      %987 = vmatpush2.bf16.msra.mxu0 0
      %988 = vmatprep.subr.bf16.mxu0 0
      %989 = vmatpush2.bf16.msra.mxu0 0
      %990 = vmatprep.subr.bf16.mxu0 0
      %991 = vmatpush2.bf16.msra.mxu0 0
      %992 = vmatprep.subr.bf16.mxu0 0
      %993 = vmatpush2.bf16.msra.mxu0 0
      %994 = vmatprep.subr.bf16.mxu0 0
      %995 = vmatpush2.bf16.msra.mxu0 0
      %996 = vmatprep.subr.bf16.mxu0 0
      %997 = vmatpush2.bf16.msra.mxu0 0
      %998 = vmatprep.subr.bf16.mxu0 0
      %999 = vmatpush2.bf16.msra.mxu0 0
      %1000 = vmatprep.subr.bf16.mxu0 0
      %1001 = vmatpush2.bf16.msra.mxu0 0
      %1002 = vmatprep.mubr.bf16.mxu0 0
      %1003 = vmatmul.mubr.bf16.gmra.mxu0 %v968
      %v1004 = vpop.f32.mrf.mxu0
      %v1005 = vadd.f32 %v965, %v1004
      %v1006 = vpop.f32.mrf.mxu0
      %v1007 = vpop.f32.mrf.mxu0
      %v1008 = vpop.f32.mrf.mxu0
      %1009 = vdwg.mxu0
      %v1010 = vadd.f32 %v373, %v1005
      %v1011 = vld [vmem:[%s8] sm:$0x1]
      %v1012 = vld [vmem:[%s9] sm:$0x1]
      %v1013 = vsel %vm389, %v1010, 0.0
      %1014 = vadd.xlane.f32.xlu0 %v1013
      %v1015 = vpop.xlane.xlu0 %1014
      %v1016 = vrcp.pop 32.0
      %v1017 = vmul.f32 %v1015, %v1016
      %v1018 = vsub.f32 %v1010, %v1017
      %v1019 = vmul.f32 %v1018, %v1018
      %v1020 = vsel %vm389, %v1019, 0.0
      %1021 = vadd.xlane.f32.xlu0 %v1020
      %v1022 = vpop.xlane.xlu0 %1021
      %v1023 = vmul.f32 %v1022, %v1016
      %v1024 = vadd.f32 %v1023, 1e-05
      %v1025 = vrsqrt.pop %v1024
      %v1026 = vmul.f32 %v1018, %v1025
      %v1028 = vlaneseq
      %v1029 = vshrl.u32 %v1028, 7
      %v1030 = vsub.s32 0, %v1029
      %v1031 = vrot.slane %v1011, %v1030
      %v1033 = vmul.f32 %v1026, %v1031
      %v1035 = vlaneseq
      %v1036 = vshrl.u32 %v1035, 7
      %v1037 = vsub.s32 0, %v1036
      %v1038 = vrot.slane %v1012, %v1037
      %v1040 = vadd.f32 %v1033, %v1038
      %1041 = vst.msk [vmem:[%s371] sm:$0xff] %vm389, %v1040
      %p1042 = scmp.lt.s32.totalorder %s21, 1
      %s1043 = scalar_select %p1042, %s21, 1
      %s1044 = smul.addr %s1043, 8
      %s1045 = scalar_lea.vmem %s10, %s1044
      // Predicated region
      $region61: #{transformer_forward.18} parent=59 // pred_check
        %p1046 = pneg %p259
      $region62: #{transformer_forward.18} parent=59 // pred_check_branch
        %1048 = sbr.rel (%p1046) target = $region64
      $region63: #{transformer_forward.18} parent=59 // pred_region
        _
      $region64: #{transformer_forward.18} parent=59 // pred_fallthru
        _
    $region60: #{transformer_forward.18} parent=5 // pred_fallthru
      _
    %p1049 = scmp.le.s32.totalorder 2, %s16
    // Predicated region
    $region65: #{transformer_forward.18} parent=5 // pred_check
      %p1050 = pneg %p1049
    $region66: #{transformer_forward.18} parent=5 // pred_check_branch
      %1052 = sbr.rel (%p1050) target = $region68
    $region67: #{transformer_forward.18} parent=5 // pred_region
      %s1053 = ssub.s32 %s16, 2
      // Predicated region
      $region69: #{transformer_forward.18} parent=67 // pred_check
        %p1054 = pneg %p265
      $region70: #{transformer_forward.18} parent=67 // pred_check_branch
        %1056 = sbr.rel (%p1054) target = $region72
      $region71: #{transformer_forward.18} parent=67 // pred_region
        %p1057 = scmp.lt.s32.totalorder %s22, 1
        %s1058 = scalar_select %p1057, %s22, 1
        %s1059 = smul.addr %s1058, 8
        %s1060 = scalar_lea.vmem %s10, %s1059
      $region72: #{transformer_forward.18} parent=67 // pred_fallthru
        _
    $region68: #{transformer_forward.18} parent=5 // pred_fallthru
      _
  $region6: #{transformer_forward.18} parent=0 // loop_footer
    %s20 = sadd.s32 1, %s16
  $region7: #{transformer_forward.18} parent=0 // loop_footer_branch
    %15 = sbr.rel target = $region3
  $region8: #{transformer_forward.18} parent=0 // loop_exit
    _

</llo_original>
